<compile_context>
chip_gen: v5e
topology: v5e:2x2
jax: 0.10.0
libtpu: 0.0.40
codegen_flags: <defaults>
</compile_context>

<pallas_src>
import functools

import jax
import jax.numpy as jnp
from jax.experimental import pallas as pl
from jax.experimental.pallas import tpu as pltpu

LANE = 128          # TPU lane width; fc7 logits are padded to this many cols
B_BLOCK_MAX = 512   # max batch rows per grid step (fills 256-row MXU on v6e/v7x)
NEG_INF = -1e30     # finite "minus infinity" bias for padded logit columns


def actor1_kernel(x_ref,
                  w_am, w2, w3, w4, w5, w6, w7,
                  b_ref,
                  o_ref):
    """Whole MLP chain + softmax for one (b_block, state_size) tile.

    Weights are bf16 (MXU-native); accumulation, bias add and softmax are f32.
    b_ref is a (7, 512) f32 slab; row k holds layer k's bias (fc7's pad
    columns carry NEG_INF so the 128-wide softmax matches the real one).
    """
    f32 = jnp.float32
    bf16 = jnp.bfloat16

    def layer(h, w_ref, k, relu=True):
        out_dim = w_ref.shape[1]
        b = b_ref[k:k + 1, 0:out_dim]                       # (1, out_dim) f32
        y = jnp.dot(h.astype(bf16), w_ref[...],
                    preferred_element_type=f32) + b
        return jnp.maximum(y, 0.0) if relu else y

    h = x_ref[...]                                          # (b_block, S) f32
    h = layer(h, w_am, 0)          # am: state_size -> 32, relu
    h = layer(h, w2, 1)            # fc2: 32 -> 64, relu
    h = layer(h, w3, 2)            # fc3: 64 -> 128, relu
    h = layer(h, w4, 3)            # fc4: 128 -> 512, relu
    h = layer(h, w5, 4)            # fc5: 512 -> 128, relu
    h = layer(h, w6, 5)            # fc6: 128 -> 64, relu
    logits = layer(h, w7, 6, relu=False)   # fc7: 64 -> LANE (padded), no relu

    # numerically-stable softmax over the (lane-dense) feature axis;
    # padded columns have bias -1e30 -> exp() underflows to exactly 0.
    m = jnp.max(logits, axis=-1, keepdims=True)
    e = jnp.exp(logits - m)
    s = jnp.sum(e, axis=-1, keepdims=True)
    # EUP reciprocal instead of a VALU divide chain; approx=False keeps the
    # 1e-4 sum-to-1 guarantee.
    o_ref[...] = e * pl.reciprocal(s, approx=False)


def init_linear(key, fan_in, fan_out):
    """Deterministic PyTorch-Linear-style init: U(-1/sqrt(fan_in), +)."""
    kw, kb = jax.random.split(key)
    bound = 1.0 / float(fan_in) ** 0.5
    w = jax.random.uniform(kw, (fan_in, fan_out), jnp.float32, -bound, bound)
    b = jax.random.uniform(kb, (fan_out,), jnp.float32, -bound, bound)
    return w, b


def make_actor1_params(state_size, action_size, key):
    dims = [(state_size, 32),   # am   (created per-forward in PyTorch)
            (32, 64),           # fc2
            (64, 128),          # fc3
            (128, 512),         # fc4
            (512, 128),         # fc5
            (128, 64),          # fc6
            (64, action_size)]  # fc7
    # fc1 (state_size -> 32) exists in __init__ but is unused in forward.
    keys = jax.random.split(key, len(dims))
    return [init_linear(k, fi, fo) for k, (fi, fo) in zip(keys, dims)]


def pack_actor1_params(params):
    """One-time preprocessing (do NOT redo per forward call).

    * weights -> bf16; fc7 zero-padded to LANE output columns.
    * biases  -> one (7, 512) f32 slab; fc7's pad columns get NEG_INF.
    Returns (weights_tuple_bf16, bias_slab_f32, action_size).
    """
    n = len(params)
    action_size = params[-1][0].shape[1]
    assert action_size <= LANE, "fc7 lane-padding assumes action_size <= 128"
    slab_w = max(max(w.shape[1] for w, _ in params), LANE)
    assert all(w.shape[1] <= slab_w for w, _ in params)

    ws, b_rows = [], []
    for li, (w, b) in enumerate(params):
        w = w.astype(jnp.float32)
        b = b.astype(jnp.float32)
        if li == n - 1:  # fc7: make the output lane-dense
            w = jnp.pad(w, ((0, 0), (0, LANE - action_size)))
            b = jnp.concatenate(
                [b, jnp.full((LANE - action_size,), NEG_INF, jnp.float32)])
        ws.append(w.astype(jnp.bfloat16))
        b_rows.append(jnp.pad(b, (0, slab_w - b.shape[0])))
    b_pack = jnp.stack(b_rows)                   # (7, slab_w) f32
    return tuple(ws), b_pack, action_size


def _round_up(n, m):
    return ((n + m - 1) // m) * m


def _choose_b_block(batch):
    """Rows per grid step.

    The network is only ~316 KFLOP/row, so small batches are step-overhead
    bound: one block.  Larger batches use blocks of >=256 rows (fills the
    256-row MXU on v6e/v7x) while keeping >=2 grid steps so both v7x
    TensorCores get work ('parallel' axis); capped at B_BLOCK_MAX.
    """
    if batch < 8:
        return batch                       # block row-dim == full array dim
    if batch <= B_BLOCK_MAX:
        return _round_up(batch, 8)         # a single grid step
    return max(256, min(B_BLOCK_MAX, _round_up(pl.cdiv(batch, 2), 8)))


@functools.partial(jax.jit, static_argnames=("action_size",))
def _actor1_forward_2d(x, weights, b_pack, *, action_size):
    """x: (B, state_size) -> (B, action_size) softmax probabilities."""
    B, S = x.shape
    if x.dtype != jnp.float32:
        x = x.astype(jnp.float32)

    b_block = _choose_b_block(B)
    grid = (pl.cdiv(B, b_block),)

    # Constant operands: block index never changes across the grid, so one
    # VMEM buffer suffices (default double-buffering would just waste VMEM).
    const_spec = lambda a: pl.BlockSpec(a.shape, lambda i: (0, 0),
                                        pipeline_mode=pl.Buffered(1))
    in_specs = ([pl.BlockSpec((b_block, S), lambda i: (i, 0))]
                + [const_spec(w) for w in weights]
                + [const_spec(b_pack)])

    out = pl.pallas_call(
        actor1_kernel,
        grid=grid,
        out_shape=jax.ShapeDtypeStruct((B, LANE), jnp.float32),
        in_specs=in_specs,
        out_specs=pl.BlockSpec((b_block, LANE), lambda i: (i, 0)),
        compiler_params=pltpu.CompilerParams(
            dimension_semantics=("parallel",)),   # v7x: split batch over 2 TCs
    )(x, *weights, b_pack)
    return out[:, :action_size]


def actor1_forward(x, packed):
    """x: (state_size,) or (B, state_size). Returns matching-rank softmax."""
    weights, b_pack, action_size = packed
    if x.ndim == 1:
        return _actor1_forward_2d(x[None, :], weights, b_pack,
                                  action_size=action_size)[0]
    return _actor1_forward_2d(x, weights, b_pack, action_size=action_size)


if __name__ == "__main__":
    state_size = 8
    action_size = 4
    batch = 300   # > 256 -> 2 grid steps of 256 rows, partial last block

    key = jax.random.PRNGKey(0)
    k_x, k_p = jax.random.split(key)

    params = make_actor1_params(state_size, action_size, k_p)
    packed = pack_actor1_params(params)

    xb = jax.random.normal(k_x, (batch, state_size), dtype=jnp.float32)
    probs = jax.block_until_ready(actor1_forward(xb, packed))

    assert probs.shape == (batch, action_size)
    assert bool(jnp.isfinite(probs).all())
    assert bool(jnp.allclose(jnp.sum(probs, axis=-1), 1.0, atol=1e-4))

    # precision-matched reference (bf16 weights, f32 accumulate), plain JAX
    def ref_forward(x2d):
        h = x2d.astype(jnp.float32)
        n = len(params)
        for li, (w, b) in enumerate(params):
            h = jnp.dot(h.astype(jnp.bfloat16), w.astype(jnp.bfloat16),
                        preferred_element_type=jnp.float32) + b
            if li < n - 1:
                h = jnp.maximum(h, 0.0)
        return jax.nn.softmax(h, axis=-1)

    ref = ref_forward(xb)
    assert float(jnp.max(jnp.abs(ref - probs))) < 2e-3

    # single-state (1-D) path, like the original PyTorch forward signature
    x1 = xb[0]
    p1 = jax.block_until_ready(actor1_forward(x1, packed))
    assert p1.shape == (action_size,)
    assert abs(float(jnp.sum(p1)) - 1.0) < 1e-4

    print("KERNEL_OK")
</pallas_src>

<mosaic_0001>
module attributes {stable_mosaic.version = 11 : i64} {
  func.func @actor1_kernel(%arg0: i32, %arg1: memref<304x8xf32, #tpu.memory_space<vmem>>, %arg2: memref<8x32xbf16, #tpu.memory_space<vmem>>, %arg3: memref<32x64xbf16, #tpu.memory_space<vmem>>, %arg4: memref<64x128xbf16, #tpu.memory_space<vmem>>, %arg5: memref<128x512xbf16, #tpu.memory_space<vmem>>, %arg6: memref<512x128xbf16, #tpu.memory_space<vmem>>, %arg7: memref<128x64xbf16, #tpu.memory_space<vmem>>, %arg8: memref<64x128xbf16, #tpu.memory_space<vmem>>, %arg9: memref<7x512xf32, #tpu.memory_space<vmem>>, %arg10: memref<304x128xf32, #tpu.memory_space<vmem>>) attributes {dimension_semantics = [#tpu.dimension_semantics<parallel>], iteration_bounds = array<i64: 1>, scalar_prefetch = 0 : i64, scratch_operands = 0 : i64, tpu.core_type = #tpu.core_type<tc>, window_params = [{transform_indices = @transform_0, window_bounds = array<i64: 304, 8>}, {pipeline_mode = #tpu.pipeline_mode<synchronous>, transform_indices = @transform_1, window_bounds = array<i64: 8, 32>}, {pipeline_mode = #tpu.pipeline_mode<synchronous>, transform_indices = @transform_2, window_bounds = array<i64: 32, 64>}, {pipeline_mode = #tpu.pipeline_mode<synchronous>, transform_indices = @transform_3, window_bounds = array<i64: 64, 128>}, {pipeline_mode = #tpu.pipeline_mode<synchronous>, transform_indices = @transform_4, window_bounds = array<i64: 128, 512>}, {pipeline_mode = #tpu.pipeline_mode<synchronous>, transform_indices = @transform_5, window_bounds = array<i64: 512, 128>}, {pipeline_mode = #tpu.pipeline_mode<synchronous>, transform_indices = @transform_6, window_bounds = array<i64: 128, 64>}, {pipeline_mode = #tpu.pipeline_mode<synchronous>, transform_indices = @transform_7, window_bounds = array<i64: 64, 128>}, {pipeline_mode = #tpu.pipeline_mode<synchronous>, transform_indices = @transform_8, window_bounds = array<i64: 7, 512>}, {transform_indices = @transform_9, window_bounds = array<i64: 304, 128>}]} {
    %c0 = arith.constant 0 : index
    %c0_0 = arith.constant 0 : index
    %0 = vector.load %arg1[%c0, %c0_0] : memref<304x8xf32, #tpu.memory_space<vmem>>, vector<304x8xf32>
    %c0_1 = arith.constant 0 : index
    %c0_2 = arith.constant 0 : index
    %1 = vector.load %arg9[%c0_1, %c0_2] : memref<7x512xf32, #tpu.memory_space<vmem>>, vector<1x32xf32>
    %2 = arith.truncf %0 : vector<304x8xf32> to vector<304x8xbf16>
    %c0_3 = arith.constant 0 : index
    %c0_4 = arith.constant 0 : index
    %3 = vector.load %arg2[%c0_3, %c0_4] : memref<8x32xbf16, #tpu.memory_space<vmem>>, vector<8x32xbf16>
    %cst = arith.constant dense<0.000000e+00> : vector<304x32xf32>
    %4 = tpu.matmul %2, %3, %cst {dimension_numbers = #tpu.dot_dimension_numbers<[1], [0], [0], [1], [0, 0, 1, 1], [], []>} : vector<304x8xbf16>, vector<8x32xbf16>, vector<304x32xf32> -> vector<304x32xf32>
    %5 = vector.broadcast %1 : vector<1x32xf32> to vector<304x32xf32>
    %6 = arith.addf %4, %5 : vector<304x32xf32>
    %cst_5 = arith.constant 0.000000e+00 : f32
    %7 = vector.broadcast %cst_5 : f32 to vector<304x32xf32>
    %8 = arith.maximumf %6, %7 : vector<304x32xf32>
    %c1 = arith.constant 1 : index
    %c0_6 = arith.constant 0 : index
    %9 = vector.load %arg9[%c1, %c0_6] : memref<7x512xf32, #tpu.memory_space<vmem>>, vector<1x64xf32>
    %10 = arith.truncf %8 : vector<304x32xf32> to vector<304x32xbf16>
    %c0_7 = arith.constant 0 : index
    %c0_8 = arith.constant 0 : index
    %11 = vector.load %arg3[%c0_7, %c0_8] : memref<32x64xbf16, #tpu.memory_space<vmem>>, vector<32x64xbf16>
    %cst_9 = arith.constant dense<0.000000e+00> : vector<304x64xf32>
    %12 = tpu.matmul %10, %11, %cst_9 {dimension_numbers = #tpu.dot_dimension_numbers<[1], [0], [0], [1], [0, 0, 1, 1], [], []>} : vector<304x32xbf16>, vector<32x64xbf16>, vector<304x64xf32> -> vector<304x64xf32>
    %13 = vector.broadcast %9 : vector<1x64xf32> to vector<304x64xf32>
    %14 = arith.addf %12, %13 : vector<304x64xf32>
    %cst_10 = arith.constant 0.000000e+00 : f32
    %15 = vector.broadcast %cst_10 : f32 to vector<304x64xf32>
    %16 = arith.maximumf %14, %15 : vector<304x64xf32>
    %c2 = arith.constant 2 : index
    %c0_11 = arith.constant 0 : index
    %17 = vector.load %arg9[%c2, %c0_11] : memref<7x512xf32, #tpu.memory_space<vmem>>, vector<1x128xf32>
    %18 = arith.truncf %16 : vector<304x64xf32> to vector<304x64xbf16>
    %c0_12 = arith.constant 0 : index
    %c0_13 = arith.constant 0 : index
    %19 = vector.load %arg4[%c0_12, %c0_13] : memref<64x128xbf16, #tpu.memory_space<vmem>>, vector<64x128xbf16>
    %cst_14 = arith.constant dense<0.000000e+00> : vector<304x128xf32>
    %20 = tpu.matmul %18, %19, %cst_14 {dimension_numbers = #tpu.dot_dimension_numbers<[1], [0], [0], [1], [0, 0, 1, 1], [], []>} : vector<304x64xbf16>, vector<64x128xbf16>, vector<304x128xf32> -> vector<304x128xf32>
    %21 = vector.broadcast %17 : vector<1x128xf32> to vector<304x128xf32>
    %22 = arith.addf %20, %21 : vector<304x128xf32>
    %cst_15 = arith.constant 0.000000e+00 : f32
    %23 = vector.broadcast %cst_15 : f32 to vector<304x128xf32>
    %24 = arith.maximumf %22, %23 : vector<304x128xf32>
    %c3 = arith.constant 3 : index
    %c0_16 = arith.constant 0 : index
    %25 = vector.load %arg9[%c3, %c0_16] : memref<7x512xf32, #tpu.memory_space<vmem>>, vector<1x512xf32>
    %26 = arith.truncf %24 : vector<304x128xf32> to vector<304x128xbf16>
    %c0_17 = arith.constant 0 : index
    %c0_18 = arith.constant 0 : index
    %27 = vector.load %arg5[%c0_17, %c0_18] : memref<128x512xbf16, #tpu.memory_space<vmem>>, vector<128x512xbf16>
    %cst_19 = arith.constant dense<0.000000e+00> : vector<304x512xf32>
    %28 = tpu.matmul %26, %27, %cst_19 {dimension_numbers = #tpu.dot_dimension_numbers<[1], [0], [0], [1], [0, 0, 1, 1], [], []>} : vector<304x128xbf16>, vector<128x512xbf16>, vector<304x512xf32> -> vector<304x512xf32>
    %29 = vector.broadcast %25 : vector<1x512xf32> to vector<304x512xf32>
    %30 = arith.addf %28, %29 : vector<304x512xf32>
    %cst_20 = arith.constant 0.000000e+00 : f32
    %31 = vector.broadcast %cst_20 : f32 to vector<304x512xf32>
    %32 = arith.maximumf %30, %31 : vector<304x512xf32>
    %c4 = arith.constant 4 : index
    %c0_21 = arith.constant 0 : index
    %33 = vector.load %arg9[%c4, %c0_21] : memref<7x512xf32, #tpu.memory_space<vmem>>, vector<1x128xf32>
    %34 = arith.truncf %32 : vector<304x512xf32> to vector<304x512xbf16>
    %c0_22 = arith.constant 0 : index
    %c0_23 = arith.constant 0 : index
    %35 = vector.load %arg6[%c0_22, %c0_23] : memref<512x128xbf16, #tpu.memory_space<vmem>>, vector<512x128xbf16>
    %cst_24 = arith.constant dense<0.000000e+00> : vector<304x128xf32>
    %36 = tpu.matmul %34, %35, %cst_24 {dimension_numbers = #tpu.dot_dimension_numbers<[1], [0], [0], [1], [0, 0, 1, 1], [], []>} : vector<304x512xbf16>, vector<512x128xbf16>, vector<304x128xf32> -> vector<304x128xf32>
    %37 = vector.broadcast %33 : vector<1x128xf32> to vector<304x128xf32>
    %38 = arith.addf %36, %37 : vector<304x128xf32>
    %cst_25 = arith.constant 0.000000e+00 : f32
    %39 = vector.broadcast %cst_25 : f32 to vector<304x128xf32>
    %40 = arith.maximumf %38, %39 : vector<304x128xf32>
    %c5 = arith.constant 5 : index
    %c0_26 = arith.constant 0 : index
    %41 = vector.load %arg9[%c5, %c0_26] : memref<7x512xf32, #tpu.memory_space<vmem>>, vector<1x64xf32>
    %42 = arith.truncf %40 : vector<304x128xf32> to vector<304x128xbf16>
    %c0_27 = arith.constant 0 : index
    %c0_28 = arith.constant 0 : index
    %43 = vector.load %arg7[%c0_27, %c0_28] : memref<128x64xbf16, #tpu.memory_space<vmem>>, vector<128x64xbf16>
    %cst_29 = arith.constant dense<0.000000e+00> : vector<304x64xf32>
    %44 = tpu.matmul %42, %43, %cst_29 {dimension_numbers = #tpu.dot_dimension_numbers<[1], [0], [0], [1], [0, 0, 1, 1], [], []>} : vector<304x128xbf16>, vector<128x64xbf16>, vector<304x64xf32> -> vector<304x64xf32>
    %45 = vector.broadcast %41 : vector<1x64xf32> to vector<304x64xf32>
    %46 = arith.addf %44, %45 : vector<304x64xf32>
    %cst_30 = arith.constant 0.000000e+00 : f32
    %47 = vector.broadcast %cst_30 : f32 to vector<304x64xf32>
    %48 = arith.maximumf %46, %47 : vector<304x64xf32>
    %c6 = arith.constant 6 : index
    %c0_31 = arith.constant 0 : index
    %49 = vector.load %arg9[%c6, %c0_31] : memref<7x512xf32, #tpu.memory_space<vmem>>, vector<1x128xf32>
    %50 = arith.truncf %48 : vector<304x64xf32> to vector<304x64xbf16>
    %c0_32 = arith.constant 0 : index
    %c0_33 = arith.constant 0 : index
    %51 = vector.load %arg8[%c0_32, %c0_33] : memref<64x128xbf16, #tpu.memory_space<vmem>>, vector<64x128xbf16>
    %cst_34 = arith.constant dense<0.000000e+00> : vector<304x128xf32>
    %52 = tpu.matmul %50, %51, %cst_34 {dimension_numbers = #tpu.dot_dimension_numbers<[1], [0], [0], [1], [0, 0, 1, 1], [], []>} : vector<304x64xbf16>, vector<64x128xbf16>, vector<304x128xf32> -> vector<304x128xf32>
    %53 = vector.broadcast %49 : vector<1x128xf32> to vector<304x128xf32>
    %54 = arith.addf %52, %53 : vector<304x128xf32>
    %cst_35 = arith.constant dense<0xFF800000> : vector<304xf32>
    %55 = vector.multi_reduction <maximumf>, %54, %cst_35 [1] : vector<304x128xf32> to vector<304xf32>
    %56 = vector.shape_cast %55 : vector<304xf32> to vector<304x1xf32>
    %57 = vector.broadcast %56 : vector<304x1xf32> to vector<304x128xf32>
    %58 = arith.subf %54, %57 : vector<304x128xf32>
    %59 = math.exp %58 : vector<304x128xf32>
    %cst_36 = arith.constant dense<0.000000e+00> : vector<304xf32>
    %60 = vector.multi_reduction <add>, %59, %cst_36 [1] : vector<304x128xf32> to vector<304xf32>
    %61 = vector.shape_cast %60 : vector<304xf32> to vector<304x1xf32>
    %62 = tpu.reciprocal %61 : vector<304x1xf32> -> vector<304x1xf32>
    %63 = vector.broadcast %62 : vector<304x1xf32> to vector<304x128xf32>
    %64 = arith.mulf %59, %63 : vector<304x128xf32>
    %c0_37 = arith.constant 0 : index
    %c0_38 = arith.constant 0 : index
    %65 = vector.load %arg10[%c0_37, %c0_38] : memref<304x128xf32, #tpu.memory_space<vmem>>, vector<304x128xf32>
    tpu.vector_store %arg10[%c0_37, %c0_38], %64 {strides = array<i32>} : memref<304x128xf32, #tpu.memory_space<vmem>>, vector<304x128xf32>,
    return
  }
  func.func @transform_0(%arg0: i32) -> (i32, i32) {
    %c0_i32 = arith.constant 0 : i32
    %c0_i32_0 = arith.constant 0 : i32
    return %arg0, %c0_i32 : i32, i32
  }
  func.func @transform_1(%arg0: i32) -> (i32, i32) {
    %c0_i32 = arith.constant 0 : i32
    %c0_i32_0 = arith.constant 0 : i32
    %c0_i32_1 = arith.constant 0 : i32
    return %c0_i32, %c0_i32_0 : i32, i32
  }
  func.func @transform_2(%arg0: i32) -> (i32, i32) {
    %c0_i32 = arith.constant 0 : i32
    %c0_i32_0 = arith.constant 0 : i32
    %c0_i32_1 = arith.constant 0 : i32
    return %c0_i32, %c0_i32_0 : i32, i32
  }
  func.func @transform_3(%arg0: i32) -> (i32, i32) {
    %c0_i32 = arith.constant 0 : i32
    %c0_i32_0 = arith.constant 0 : i32
    %c0_i32_1 = arith.constant 0 : i32
    return %c0_i32, %c0_i32_0 : i32, i32
  }
  func.func @transform_4(%arg0: i32) -> (i32, i32) {
    %c0_i32 = arith.constant 0 : i32
    %c0_i32_0 = arith.constant 0 : i32
    %c0_i32_1 = arith.constant 0 : i32
    return %c0_i32, %c0_i32_0 : i32, i32
  }
  func.func @transform_5(%arg0: i32) -> (i32, i32) {
    %c0_i32 = arith.constant 0 : i32
    %c0_i32_0 = arith.constant 0 : i32
    %c0_i32_1 = arith.constant 0 : i32
    return %c0_i32, %c0_i32_0 : i32, i32
  }
  func.func @transform_6(%arg0: i32) -> (i32, i32) {
    %c0_i32 = arith.constant 0 : i32
    %c0_i32_0 = arith.constant 0 : i32
    %c0_i32_1 = arith.constant 0 : i32
    return %c0_i32, %c0_i32_0 : i32, i32
  }
  func.func @transform_7(%arg0: i32) -> (i32, i32) {
    %c0_i32 = arith.constant 0 : i32
    %c0_i32_0 = arith.constant 0 : i32
    %c0_i32_1 = arith.constant 0 : i32
    return %c0_i32, %c0_i32_0 : i32, i32
  }
  func.func @transform_8(%arg0: i32) -> (i32, i32) {
    %c0_i32 = arith.constant 0 : i32
    %c0_i32_0 = arith.constant 0 : i32
    %c0_i32_1 = arith.constant 0 : i32
    return %c0_i32, %c0_i32_0 : i32, i32
  }
  func.func @transform_9(%arg0: i32) -> (i32, i32) {
    %c0_i32 = arith.constant 0 : i32
    %c0_i32_0 = arith.constant 0 : i32
    return %arg0, %c0_i32 : i32, i32
  }
}

</mosaic_0001>

<llo_original>
// kernel: _actor1_forward_2d.1
$region0: #{_actor1_forward_2d.1}
  #allocation0 [shape = 'u32[]', space=smem, size = 0x4, offset = 0x4, fixed_abs, tag = 'smem constant byte address 0x4 - core index']
  #allocation1 [shape = 'u32[72,128]{1,0:T(1,128)}', space=vmem, size = 0x9000, scoped, tag = 'internal scratch']
  %s0 = inlined_call_operand.vmem [shape: f32[300,8], index: 0, kind: input, shape index: {}]
  %s1 = inlined_call_operand.vmem [shape: bf16[8,32], index: 1, kind: input, shape index: {}]
  %s2 = inlined_call_operand.vmem [shape: bf16[32,64], index: 2, kind: input, shape index: {}]
  %s3 = inlined_call_operand.vmem [shape: bf16[64,128], index: 3, kind: input, shape index: {}]
  %s4 = inlined_call_operand.vmem [shape: bf16[128,512], index: 4, kind: input, shape index: {}]
  %s5 = inlined_call_operand.hbm [shape: bf16[512,128], index: 5, kind: input, shape index: {}]
  %s6 = inlined_call_operand.vmem [shape: bf16[128,64], index: 6, kind: input, shape index: {}]
  %s7 = inlined_call_operand.vmem [shape: bf16[64,128], index: 7, kind: input, shape index: {}]
  %s8 = inlined_call_operand.vmem [shape: f32[7,512], index: 8, kind: input, shape index: {}]
  %s9 = inlined_call_operand.vmem [shape: f32[300,128], index: 9, kind: output, shape index: {}]
  %s10 = sld [smem:[#allocation0]]
  $region50: #{_actor1_forward_2d.1} parent=0
    _
  %s12 = ssub.s32 1, %s10
  %s13 = scalar_select 0, %s12, %s10
  $region1: #{_actor1_forward_2d.1} parent=0
    #allocation2 [shape = 'u8[131072]{0}', space=vmem, size = 0x20000, scoped, tag = 'input window, operand 5, single buffered']
    #allocation3 [shape = 's32[1]{0}', space=sflag, size = 0x4, scoped, tag = 'scoped memory for _actor1_forward_2d.1']
    %14 = vsyncpa [#allocation3], 0
    // Predicated region
    $region2: #{_actor1_forward_2d.1} parent=1 // pred_check
      _
    $region3: #{_actor1_forward_2d.1} parent=1 // pred_check_branch
      %16 = sbr.rel (0) target = $region5
    $region4: #{_actor1_forward_2d.1} parent=1 // pred_region
      _
    $region5: #{_actor1_forward_2d.1} parent=1 // pred_fallthru
      _
    // Predicated region
    $region6: #{_actor1_forward_2d.1} parent=1 // pred_check
      _
    $region7: #{_actor1_forward_2d.1} parent=1 // pred_check_branch
      %18 = sbr.rel (0) target = $region9
    $region8: #{_actor1_forward_2d.1} parent=1 // pred_region
      _
    $region9: #{_actor1_forward_2d.1} parent=1 // pred_fallthru
      _
    // Predicated region
    $region10: #{_actor1_forward_2d.1} parent=1 // pred_check
      _
    $region11: #{_actor1_forward_2d.1} parent=1 // pred_check_branch
      %20 = sbr.rel (0) target = $region13
    $region12: #{_actor1_forward_2d.1} parent=1 // pred_region
      _
    $region13: #{_actor1_forward_2d.1} parent=1 // pred_fallthru
      _
    // Predicated region
    $region14: #{_actor1_forward_2d.1} parent=1 // pred_check
      _
    $region15: #{_actor1_forward_2d.1} parent=1 // pred_check_branch
      %22 = sbr.rel (0) target = $region17
    $region16: #{_actor1_forward_2d.1} parent=1 // pred_region
      _
    $region17: #{_actor1_forward_2d.1} parent=1 // pred_fallthru
      _
    // Predicated region
    $region18: #{_actor1_forward_2d.1} parent=1 // pred_check
      _
    $region19: #{_actor1_forward_2d.1} parent=1 // pred_check_branch
      %24 = sbr.rel (0) target = $region21
    $region20: #{_actor1_forward_2d.1} parent=1 // pred_region
      _
    $region21: #{_actor1_forward_2d.1} parent=1 // pred_fallthru
      _
    // Predicated region
    $region22: #{_actor1_forward_2d.1} parent=1 // pred_check
      _
    $region23: #{_actor1_forward_2d.1} parent=1 // pred_check_branch
      %26 = sbr.rel (0) target = $region25
    $region24: #{_actor1_forward_2d.1} parent=1 // pred_region
      %28 = vsyncadd [#allocation3], 0
      %s29 = sshll.u32 %s5, 4
      %s30 = int_to_ptr.hbm [resolvable:$true] %s29
      %s31 = sshll.u32 [#allocation2], 4
      %s32 = int_to_ptr.vmem [resolvable:$true] %s31
      %37 = dma.hbm_to_vmem [thread:$0]  %s30, 4096, %s32, [#allocation3], 64, 64, 4
    $region25: #{_actor1_forward_2d.1} parent=1 // pred_fallthru
      _
    // Predicated region
    $region26: #{_actor1_forward_2d.1} parent=1 // pred_check
      _
    $region27: #{_actor1_forward_2d.1} parent=1 // pred_check_branch
      %39 = sbr.rel (0) target = $region29
    $region28: #{_actor1_forward_2d.1} parent=1 // pred_region
      _
    $region29: #{_actor1_forward_2d.1} parent=1 // pred_fallthru
      _
    // Predicated region
    $region30: #{_actor1_forward_2d.1} parent=1 // pred_check
      _
    $region31: #{_actor1_forward_2d.1} parent=1 // pred_check_branch
      %41 = sbr.rel (0) target = $region33
    $region32: #{_actor1_forward_2d.1} parent=1 // pred_region
      _
    $region33: #{_actor1_forward_2d.1} parent=1 // pred_fallthru
      _
    // Predicated region
    $region34: #{_actor1_forward_2d.1} parent=1 // pred_check
      _
    $region35: #{_actor1_forward_2d.1} parent=1 // pred_check_branch
      %43 = sbr.rel (0) target = $region37
    $region36: #{_actor1_forward_2d.1} parent=1 // pred_region
      _
    $region37: #{_actor1_forward_2d.1} parent=1 // pred_fallthru
      _
    // Predicated region
    $region38: #{_actor1_forward_2d.1} parent=1 // pred_check
      _
    $region39: #{_actor1_forward_2d.1} parent=1 // pred_check_branch
      %45 = sbr.rel (0) target = $region41
    $region40: #{_actor1_forward_2d.1} parent=1 // pred_region
      %47 = dma.done [#allocation3], 4096
    $region41: #{_actor1_forward_2d.1} parent=1 // pred_fallthru
      _
    %v49 = vld [vmem:[%s0] sm:$0xff]
    %v50 = vld [vmem:[%s0 + $0x8] sm:$0xff]
    %v51 = vld [vmem:[%s0 + $0x10] sm:$0xff]
    %v52 = vld [vmem:[%s0 + $0x18] sm:$0xff]
    %v53 = vld [vmem:[%s0 + $0x20] sm:$0xff]
    %v54 = vld [vmem:[%s0 + $0x28] sm:$0xff]
    %v55 = vld [vmem:[%s0 + $0x30] sm:$0xff]
    %v56 = vld [vmem:[%s0 + $0x38] sm:$0xff]
    %v57 = vld [vmem:[%s0 + $0x40] sm:$0xff]
    %v58 = vld [vmem:[%s0 + $0x48] sm:$0xff]
    %v59 = vld [vmem:[%s0 + $0x50] sm:$0xff]
    %v60 = vld [vmem:[%s0 + $0x58] sm:$0xff]
    %v61 = vld [vmem:[%s0 + $0x60] sm:$0xff]
    %v62 = vld [vmem:[%s0 + $0x68] sm:$0xff]
    %v63 = vld [vmem:[%s0 + $0x70] sm:$0xff]
    %v64 = vld [vmem:[%s0 + $0x78] sm:$0xff]
    %v65 = vld [vmem:[%s0 + $0x80] sm:$0xff]
    %v66 = vld [vmem:[%s0 + $0x88] sm:$0xff]
    %v67 = vld [vmem:[%s0 + $0x90] sm:$0xff]
    %v68 = vld [vmem:[%s0 + $0x98] sm:$0xff]
    %v69 = vld [vmem:[%s0 + $0xa0] sm:$0xff]
    %v70 = vld [vmem:[%s0 + $0xa8] sm:$0xff]
    %v71 = vld [vmem:[%s0 + $0xb0] sm:$0xff]
    %v72 = vld [vmem:[%s0 + $0xb8] sm:$0xff]
    %v73 = vld [vmem:[%s0 + $0xc0] sm:$0xff]
    %v74 = vld [vmem:[%s0 + $0xc8] sm:$0xff]
    %v75 = vld [vmem:[%s0 + $0xd0] sm:$0xff]
    %v76 = vld [vmem:[%s0 + $0xd8] sm:$0xff]
    %v77 = vld [vmem:[%s0 + $0xe0] sm:$0xff]
    %v78 = vld [vmem:[%s0 + $0xe8] sm:$0xff]
    %v79 = vld [vmem:[%s0 + $0xf0] sm:$0xff]
    %v80 = vld [vmem:[%s0 + $0xf8] sm:$0xff]
    %v81 = vld [vmem:[%s0 + $0x100] sm:$0xff]
    %v82 = vld [vmem:[%s0 + $0x108] sm:$0xff]
    %v83 = vld [vmem:[%s0 + $0x110] sm:$0xff]
    %v84 = vld [vmem:[%s0 + $0x118] sm:$0xff]
    %v85 = vld [vmem:[%s0 + $0x120] sm:$0xff]
    %v86 = vld [vmem:[%s0 + $0x128] sm:$0xff]
    %v87 = vld [vmem:[%s8] ss:$0 sm:$0xff]
    %v88 = vpack.c.bf16 %v50, %v49
    %v89 = vpack.c.bf16 %v52, %v51
    %v90 = vpack.c.bf16 %v54, %v53
    %v91 = vpack.c.bf16 %v56, %v55
    %v92 = vpack.c.bf16 %v58, %v57
    %v93 = vpack.c.bf16 %v60, %v59
    %v94 = vpack.c.bf16 %v62, %v61
    %v95 = vpack.c.bf16 %v64, %v63
    %v96 = vpack.c.bf16 %v66, %v65
    %v97 = vpack.c.bf16 %v68, %v67
    %v98 = vpack.c.bf16 %v70, %v69
    %v99 = vpack.c.bf16 %v72, %v71
    %v100 = vpack.c.bf16 %v74, %v73
    %v101 = vpack.c.bf16 %v76, %v75
    %v102 = vpack.c.bf16 %v78, %v77
    %v103 = vpack.c.bf16 %v80, %v79
    %v104 = vpack.c.bf16 %v82, %v81
    %v105 = vpack.c.bf16 %v84, %v83
    %v106 = vpack.c.bf16 %v86, %v85
    %v107 = vld [vmem:[%s1] sm:$0xf]
    %vm108 = vcmask 64512
    %v110 = vsel %vm108, %v88, 0
    %v113 = vsel %vm108, %v89, 0
    %v116 = vsel %vm108, %v90, 0
    %v119 = vsel %vm108, %v91, 0
    %v122 = vsel %vm108, %v92, 0
    %v125 = vsel %vm108, %v93, 0
    %v128 = vsel %vm108, %v94, 0
    %v131 = vsel %vm108, %v95, 0
    %v134 = vsel %vm108, %v96, 0
    %v137 = vsel %vm108, %v97, 0
    %v140 = vsel %vm108, %v98, 0
    %v143 = vsel %vm108, %v99, 0
    %v146 = vsel %vm108, %v100, 0
    %v149 = vsel %vm108, %v101, 0
    %v152 = vsel %vm108, %v102, 0
    %v155 = vsel %vm108, %v103, 0
    %v158 = vsel %vm108, %v104, 0
    %v161 = vsel %vm108, %v105, 0
    %v164 = vsel %vm108, %v106, 0
    %vm166 = vcmask 1043456
    %v168 = vsel %vm166, %v107, 0
    %170 = vmatpush.bf16.msra.mxu0 0
    %171 = vmatpush.bf16.msra.mxu0 0
    %172 = vmatpush.bf16.msra.mxu0 0
    %173 = vmatpush.bf16.msra.mxu0 0
    %174 = vmatpush.bf16.msra.mxu0 0
    %175 = vmatpush.bf16.msra.mxu0 0
    %176 = vmatpush.bf16.msra.mxu0 0
    %177 = vmatpush.bf16.msra.mxu0 %v168
    %178 = vmatmul.bf16.gmra.mxu0 %v110
    %v179 = vpop.f32.mrf.mxu0
    %v180 = vadd.f32 %v87, %v179
    %v181 = vpop.f32.mrf.mxu0
    %v182 = vadd.f32 %v87, %v181
    %183 = vmatmul.bf16.gmra.mxu0 %v113
    %v184 = vpop.f32.mrf.mxu0
    %v185 = vadd.f32 %v87, %v184
    %v186 = vpop.f32.mrf.mxu0
    %v187 = vadd.f32 %v87, %v186
    %188 = vmatmul.bf16.gmra.mxu0 %v116
    %v189 = vpop.f32.mrf.mxu0
    %v190 = vadd.f32 %v87, %v189
    %v191 = vpop.f32.mrf.mxu0
    %v192 = vadd.f32 %v87, %v191
    %193 = vmatmul.bf16.gmra.mxu0 %v119
    %v194 = vpop.f32.mrf.mxu0
    %v195 = vadd.f32 %v87, %v194
    %v196 = vpop.f32.mrf.mxu0
    %v197 = vadd.f32 %v87, %v196
    %198 = vmatmul.bf16.gmra.mxu0 %v122
    %v199 = vpop.f32.mrf.mxu0
    %v200 = vadd.f32 %v87, %v199
    %v201 = vpop.f32.mrf.mxu0
    %v202 = vadd.f32 %v87, %v201
    %203 = vmatmul.bf16.gmra.mxu0 %v125
    %v204 = vpop.f32.mrf.mxu0
    %v205 = vadd.f32 %v87, %v204
    %v206 = vpop.f32.mrf.mxu0
    %v207 = vadd.f32 %v87, %v206
    %208 = vmatmul.bf16.gmra.mxu0 %v128
    %v209 = vpop.f32.mrf.mxu0
    %v210 = vadd.f32 %v87, %v209
    %v211 = vpop.f32.mrf.mxu0
    %v212 = vadd.f32 %v87, %v211
    %213 = vmatmul.bf16.gmra.mxu0 %v131
    %v214 = vpop.f32.mrf.mxu0
    %v215 = vadd.f32 %v87, %v214
    %v216 = vpop.f32.mrf.mxu0
    %v217 = vadd.f32 %v87, %v216
    %218 = vmatmul.bf16.gmra.mxu0 %v134
    %v219 = vpop.f32.mrf.mxu0
    %v220 = vadd.f32 %v87, %v219
    %v221 = vpop.f32.mrf.mxu0
    %v222 = vadd.f32 %v87, %v221
    %223 = vmatmul.bf16.gmra.mxu0 %v137
    %v224 = vpop.f32.mrf.mxu0
    %v225 = vadd.f32 %v87, %v224
    %v226 = vpop.f32.mrf.mxu0
    %v227 = vadd.f32 %v87, %v226
    %228 = vmatmul.bf16.gmra.mxu0 %v140
    %v229 = vpop.f32.mrf.mxu0
    %v230 = vadd.f32 %v87, %v229
    %v231 = vpop.f32.mrf.mxu0
    %v232 = vadd.f32 %v87, %v231
    %233 = vmatmul.bf16.gmra.mxu0 %v143
    %v234 = vpop.f32.mrf.mxu0
    %v235 = vadd.f32 %v87, %v234
    %v236 = vpop.f32.mrf.mxu0
    %v237 = vadd.f32 %v87, %v236
    %238 = vmatmul.bf16.gmra.mxu0 %v146
    %v239 = vpop.f32.mrf.mxu0
    %v240 = vadd.f32 %v87, %v239
    %v241 = vpop.f32.mrf.mxu0
    %v242 = vadd.f32 %v87, %v241
    %243 = vmatmul.bf16.gmra.mxu0 %v149
    %v244 = vpop.f32.mrf.mxu0
    %v245 = vadd.f32 %v87, %v244
    %v246 = vpop.f32.mrf.mxu0
    %v247 = vadd.f32 %v87, %v246
    %248 = vmatmul.bf16.gmra.mxu0 %v152
    %v249 = vpop.f32.mrf.mxu0
    %v250 = vadd.f32 %v87, %v249
    %v251 = vpop.f32.mrf.mxu0
    %v252 = vadd.f32 %v87, %v251
    %253 = vmatmul.bf16.gmra.mxu0 %v155
    %v254 = vpop.f32.mrf.mxu0
    %v255 = vadd.f32 %v87, %v254
    %v256 = vpop.f32.mrf.mxu0
    %v257 = vadd.f32 %v87, %v256
    %258 = vmatmul.bf16.gmra.mxu0 %v158
    %v259 = vpop.f32.mrf.mxu0
    %v260 = vadd.f32 %v87, %v259
    %v261 = vpop.f32.mrf.mxu0
    %v262 = vadd.f32 %v87, %v261
    %263 = vmatmul.bf16.gmra.mxu0 %v161
    %v264 = vpop.f32.mrf.mxu0
    %v265 = vadd.f32 %v87, %v264
    %v266 = vpop.f32.mrf.mxu0
    %v267 = vadd.f32 %v87, %v266
    %268 = vmatmul.bf16.gmra.mxu0 %v164
    %v269 = vpop.f32.mrf.mxu0
    %v270 = vadd.f32 %v87, %v269
    %v271 = vpop.f32.mrf.mxu0
    %v272 = vadd.f32 %v87, %v271
    %273 = vdwg.mxu0
    %v274 = vmax.f32 %v180, 0.0
    %v275 = vmax.f32 %v182, 0.0
    %v276 = vmax.f32 %v185, 0.0
    %v277 = vmax.f32 %v187, 0.0
    %v278 = vmax.f32 %v190, 0.0
    %v279 = vmax.f32 %v192, 0.0
    %v280 = vmax.f32 %v195, 0.0
    %v281 = vmax.f32 %v197, 0.0
    %v282 = vmax.f32 %v200, 0.0
    %v283 = vmax.f32 %v202, 0.0
    %v284 = vmax.f32 %v205, 0.0
    %v285 = vmax.f32 %v207, 0.0
    %v286 = vmax.f32 %v210, 0.0
    %v287 = vmax.f32 %v212, 0.0
    %v288 = vmax.f32 %v215, 0.0
    %v289 = vmax.f32 %v217, 0.0
    %v290 = vmax.f32 %v220, 0.0
    %v291 = vmax.f32 %v222, 0.0
    %v292 = vmax.f32 %v225, 0.0
    %v293 = vmax.f32 %v227, 0.0
    %v294 = vmax.f32 %v230, 0.0
    %v295 = vmax.f32 %v232, 0.0
    %v296 = vmax.f32 %v235, 0.0
    %v297 = vmax.f32 %v237, 0.0
    %v298 = vmax.f32 %v240, 0.0
    %v299 = vmax.f32 %v242, 0.0
    %v300 = vmax.f32 %v245, 0.0
    %v301 = vmax.f32 %v247, 0.0
    %v302 = vmax.f32 %v250, 0.0
    %v303 = vmax.f32 %v252, 0.0
    %v304 = vmax.f32 %v255, 0.0
    %v305 = vmax.f32 %v257, 0.0
    %v306 = vmax.f32 %v260, 0.0
    %v307 = vmax.f32 %v262, 0.0
    %v308 = vmax.f32 %v265, 0.0
    %v309 = vmax.f32 %v267, 0.0
    %v310 = vmax.f32 %v270, 0.0
    %v311 = vmax.f32 %v272, 0.0
    %v312 = vld [vmem:[%s8 + $0x1] ss:$0 sm:$0xff]
    %v313 = vpack.c.bf16 %v275, %v274
    %v314 = vpack.c.bf16 %v277, %v276
    %v315 = vpack.c.bf16 %v279, %v278
    %v316 = vpack.c.bf16 %v281, %v280
    %v317 = vpack.c.bf16 %v283, %v282
    %v318 = vpack.c.bf16 %v285, %v284
    %v319 = vpack.c.bf16 %v287, %v286
    %v320 = vpack.c.bf16 %v289, %v288
    %v321 = vpack.c.bf16 %v291, %v290
    %v322 = vpack.c.bf16 %v293, %v292
    %v323 = vpack.c.bf16 %v295, %v294
    %v324 = vpack.c.bf16 %v297, %v296
    %v325 = vpack.c.bf16 %v299, %v298
    %v326 = vpack.c.bf16 %v301, %v300
    %v327 = vpack.c.bf16 %v303, %v302
    %v328 = vpack.c.bf16 %v305, %v304
    %v329 = vpack.c.bf16 %v307, %v306
    %v330 = vpack.c.bf16 %v309, %v308
    %v331 = vpack.c.bf16 %v311, %v310
    %v332 = vld [vmem:[%s2] sm:$0xf]
    %v333 = vld [vmem:[%s2 + $0x4] sm:$0xf]
    %v334 = vld [vmem:[%s2 + $0x8] sm:$0xf]
    %v335 = vld [vmem:[%s2 + $0xc] sm:$0xf]
    %v340 = vunpack.c.l.b16 %v332
    %v341 = vunpack.c.l.b16 %v333
    %v342 = vunpack.c.l.b16 %v334
    %v343 = vunpack.c.l.b16 %v335
    %v344 = vpack.c.b16 %v341, %v340
    %v345 = vpack.c.b16 %v343, %v342
    %vm348 = vcmask 261120
    %v350 = vsel %vm348, %v313, 0
    %v353 = vsel %vm348, %v314, 0
    %v356 = vsel %vm348, %v315, 0
    %v359 = vsel %vm348, %v316, 0
    %v362 = vsel %vm348, %v317, 0
    %v365 = vsel %vm348, %v318, 0
    %v368 = vsel %vm348, %v319, 0
    %v371 = vsel %vm348, %v320, 0
    %v374 = vsel %vm348, %v321, 0
    %v377 = vsel %vm348, %v322, 0
    %v380 = vsel %vm348, %v323, 0
    %v383 = vsel %vm348, %v324, 0
    %v386 = vsel %vm348, %v325, 0
    %v389 = vsel %vm348, %v326, 0
    %v392 = vsel %vm348, %v327, 0
    %v395 = vsel %vm348, %v328, 0
    %v398 = vsel %vm348, %v329, 0
    %v401 = vsel %vm348, %v330, 0
    %v404 = vsel %vm348, %v331, 0
    %406 = vmatpush.bf16.msra.mxu0 0
    %407 = vmatpush.bf16.msra.mxu0 0
    %408 = vmatpush.bf16.msra.mxu0 0
    %409 = vmatpush.bf16.msra.mxu0 0
    %410 = vmatpush.bf16.msra.mxu0 0
    %411 = vmatpush.bf16.msra.mxu0 0
    %412 = vmatpush.bf16.msra.mxu0 %v345
    %413 = vmatpush.bf16.msra.mxu0 %v344
    %414 = vmatmul.bf16.gmra.mxu0 %v350
    %v415 = vpop.f32.mrf.mxu0
    %v416 = vadd.f32 %v312, %v415
    %v417 = vpop.f32.mrf.mxu0
    %v418 = vadd.f32 %v312, %v417
    %419 = vmatmul.bf16.gmra.mxu0 %v353
    %v420 = vpop.f32.mrf.mxu0
    %v421 = vadd.f32 %v312, %v420
    %v422 = vpop.f32.mrf.mxu0
    %v423 = vadd.f32 %v312, %v422
    %424 = vmatmul.bf16.gmra.mxu0 %v356
    %v425 = vpop.f32.mrf.mxu0
    %v426 = vadd.f32 %v312, %v425
    %v427 = vpop.f32.mrf.mxu0
    %v428 = vadd.f32 %v312, %v427
    %429 = vmatmul.bf16.gmra.mxu0 %v359
    %v430 = vpop.f32.mrf.mxu0
    %v431 = vadd.f32 %v312, %v430
    %v432 = vpop.f32.mrf.mxu0
    %v433 = vadd.f32 %v312, %v432
    %434 = vmatmul.bf16.gmra.mxu0 %v362
    %v435 = vpop.f32.mrf.mxu0
    %v436 = vadd.f32 %v312, %v435
    %v437 = vpop.f32.mrf.mxu0
    %v438 = vadd.f32 %v312, %v437
    %439 = vmatmul.bf16.gmra.mxu0 %v365
    %v440 = vpop.f32.mrf.mxu0
    %v441 = vadd.f32 %v312, %v440
    %v442 = vpop.f32.mrf.mxu0
    %v443 = vadd.f32 %v312, %v442
    %444 = vmatmul.bf16.gmra.mxu0 %v368
    %v445 = vpop.f32.mrf.mxu0
    %v446 = vadd.f32 %v312, %v445
    %v447 = vpop.f32.mrf.mxu0
    %v448 = vadd.f32 %v312, %v447
    %449 = vmatmul.bf16.gmra.mxu0 %v371
    %v450 = vpop.f32.mrf.mxu0
    %v451 = vadd.f32 %v312, %v450
    %v452 = vpop.f32.mrf.mxu0
    %v453 = vadd.f32 %v312, %v452
    %454 = vmatmul.bf16.gmra.mxu0 %v374
    %v455 = vpop.f32.mrf.mxu0
    %v456 = vadd.f32 %v312, %v455
    %v457 = vpop.f32.mrf.mxu0
    %v458 = vadd.f32 %v312, %v457
    %459 = vmatmul.bf16.gmra.mxu0 %v377
    %v460 = vpop.f32.mrf.mxu0
    %v461 = vadd.f32 %v312, %v460
    %v462 = vpop.f32.mrf.mxu0
    %v463 = vadd.f32 %v312, %v462
    %464 = vmatmul.bf16.gmra.mxu0 %v380
    %v465 = vpop.f32.mrf.mxu0
    %v466 = vadd.f32 %v312, %v465
    %v467 = vpop.f32.mrf.mxu0
    %v468 = vadd.f32 %v312, %v467
    %469 = vmatmul.bf16.gmra.mxu0 %v383
    %v470 = vpop.f32.mrf.mxu0
    %v471 = vadd.f32 %v312, %v470
    %v472 = vpop.f32.mrf.mxu0
    %v473 = vadd.f32 %v312, %v472
    %474 = vmatmul.bf16.gmra.mxu0 %v386
    %v475 = vpop.f32.mrf.mxu0
    %v476 = vadd.f32 %v312, %v475
    %v477 = vpop.f32.mrf.mxu0
    %v478 = vadd.f32 %v312, %v477
    %479 = vmatmul.bf16.gmra.mxu0 %v389
    %v480 = vpop.f32.mrf.mxu0
    %v481 = vadd.f32 %v312, %v480
    %v482 = vpop.f32.mrf.mxu0
    %v483 = vadd.f32 %v312, %v482
    %484 = vmatmul.bf16.gmra.mxu0 %v392
    %v485 = vpop.f32.mrf.mxu0
    %v486 = vadd.f32 %v312, %v485
    %v487 = vpop.f32.mrf.mxu0
    %v488 = vadd.f32 %v312, %v487
    %489 = vmatmul.bf16.gmra.mxu0 %v395
    %v490 = vpop.f32.mrf.mxu0
    %v491 = vadd.f32 %v312, %v490
    %v492 = vpop.f32.mrf.mxu0
    %v493 = vadd.f32 %v312, %v492
    %494 = vmatmul.bf16.gmra.mxu0 %v398
    %v495 = vpop.f32.mrf.mxu0
    %v496 = vadd.f32 %v312, %v495
    %v497 = vpop.f32.mrf.mxu0
    %v498 = vadd.f32 %v312, %v497
    %499 = vmatmul.bf16.gmra.mxu0 %v401
    %v500 = vpop.f32.mrf.mxu0
    %v501 = vadd.f32 %v312, %v500
    %v502 = vpop.f32.mrf.mxu0
    %v503 = vadd.f32 %v312, %v502
    %504 = vmatmul.bf16.gmra.mxu0 %v404
    %v505 = vpop.f32.mrf.mxu0
    %v506 = vadd.f32 %v312, %v505
    %v507 = vpop.f32.mrf.mxu0
    %v508 = vadd.f32 %v312, %v507
    %509 = vdwg.mxu0
    %v510 = vmax.f32 %v416, 0.0
    %v511 = vmax.f32 %v418, 0.0
    %v512 = vmax.f32 %v421, 0.0
    %v513 = vmax.f32 %v423, 0.0
    %v514 = vmax.f32 %v426, 0.0
    %v515 = vmax.f32 %v428, 0.0
    %v516 = vmax.f32 %v431, 0.0
    %v517 = vmax.f32 %v433, 0.0
    %v518 = vmax.f32 %v436, 0.0
    %v519 = vmax.f32 %v438, 0.0
    %v520 = vmax.f32 %v441, 0.0
    %v521 = vmax.f32 %v443, 0.0
    %v522 = vmax.f32 %v446, 0.0
    %v523 = vmax.f32 %v448, 0.0
    %v524 = vmax.f32 %v451, 0.0
    %v525 = vmax.f32 %v453, 0.0
    %v526 = vmax.f32 %v456, 0.0
    %v527 = vmax.f32 %v458, 0.0
    %v528 = vmax.f32 %v461, 0.0
    %v529 = vmax.f32 %v463, 0.0
    %v530 = vmax.f32 %v466, 0.0
    %v531 = vmax.f32 %v468, 0.0
    %v532 = vmax.f32 %v471, 0.0
    %v533 = vmax.f32 %v473, 0.0
    %v534 = vmax.f32 %v476, 0.0
    %v535 = vmax.f32 %v478, 0.0
    %v536 = vmax.f32 %v481, 0.0
    %v537 = vmax.f32 %v483, 0.0
    %v538 = vmax.f32 %v486, 0.0
    %v539 = vmax.f32 %v488, 0.0
    %v540 = vmax.f32 %v491, 0.0
    %v541 = vmax.f32 %v493, 0.0
    %v542 = vmax.f32 %v496, 0.0
    %v543 = vmax.f32 %v498, 0.0
    %v544 = vmax.f32 %v501, 0.0
    %v545 = vmax.f32 %v503, 0.0
    %v546 = vmax.f32 %v506, 0.0
    %v547 = vmax.f32 %v508, 0.0
    %v548 = vld [vmem:[%s8 + $0x2] ss:$0 sm:$0xff]
    %v549 = vpack.c.bf16 %v511, %v510
    %v550 = vpack.c.bf16 %v513, %v512
    %v551 = vpack.c.bf16 %v515, %v514
    %v552 = vpack.c.bf16 %v517, %v516
    %v553 = vpack.c.bf16 %v519, %v518
    %v554 = vpack.c.bf16 %v521, %v520
    %v555 = vpack.c.bf16 %v523, %v522
    %v556 = vpack.c.bf16 %v525, %v524
    %v557 = vpack.c.bf16 %v527, %v526
    %v558 = vpack.c.bf16 %v529, %v528
    %v559 = vpack.c.bf16 %v531, %v530
    %v560 = vpack.c.bf16 %v533, %v532
    %v561 = vpack.c.bf16 %v535, %v534
    %v562 = vpack.c.bf16 %v537, %v536
    %v563 = vpack.c.bf16 %v539, %v538
    %v564 = vpack.c.bf16 %v541, %v540
    %v565 = vpack.c.bf16 %v543, %v542
    %v566 = vpack.c.bf16 %v545, %v544
    %v567 = vpack.c.bf16 %v547, %v546
    %v568 = vld [vmem:[%s3] sm:$0xf]
    %v569 = vld [vmem:[%s3 + $0x4] sm:$0xf]
    %v570 = vld [vmem:[%s3 + $0x8] sm:$0xf]
    %v571 = vld [vmem:[%s3 + $0xc] sm:$0xf]
    %v572 = vld [vmem:[%s3 + $0x10] sm:$0xf]
    %v573 = vld [vmem:[%s3 + $0x14] sm:$0xf]
    %v574 = vld [vmem:[%s3 + $0x18] sm:$0xf]
    %v575 = vld [vmem:[%s3 + $0x1c] sm:$0xf]
    %v584 = vunpack.c.l.b16 %v568
    %v585 = vunpack.c.l.b16 %v569
    %v586 = vunpack.c.l.b16 %v570
    %v587 = vunpack.c.l.b16 %v571
    %v588 = vunpack.c.l.b16 %v572
    %v589 = vunpack.c.l.b16 %v573
    %v590 = vunpack.c.l.b16 %v574
    %v591 = vunpack.c.l.b16 %v575
    %v592 = vpack.c.b16 %v585, %v584
    %v593 = vpack.c.b16 %v587, %v586
    %v594 = vpack.c.b16 %v589, %v588
    %v595 = vpack.c.b16 %v591, %v590
    %vm600 = vcmask 523264
    %v602 = vsel %vm600, %v549, 0
    %v605 = vsel %vm600, %v550, 0
    %v608 = vsel %vm600, %v551, 0
    %v611 = vsel %vm600, %v552, 0
    %v614 = vsel %vm600, %v553, 0
    %v617 = vsel %vm600, %v554, 0
    %v620 = vsel %vm600, %v555, 0
    %v623 = vsel %vm600, %v556, 0
    %v626 = vsel %vm600, %v557, 0
    %v629 = vsel %vm600, %v558, 0
    %v632 = vsel %vm600, %v559, 0
    %v635 = vsel %vm600, %v560, 0
    %v638 = vsel %vm600, %v561, 0
    %v641 = vsel %vm600, %v562, 0
    %v644 = vsel %vm600, %v563, 0
    %v647 = vsel %vm600, %v564, 0
    %v650 = vsel %vm600, %v565, 0
    %v653 = vsel %vm600, %v566, 0
    %v656 = vsel %vm600, %v567, 0
    %658 = vmatpush.bf16.msra.mxu0 0
    %659 = vmatpush.bf16.msra.mxu0 0
    %660 = vmatpush.bf16.msra.mxu0 0
    %661 = vmatpush.bf16.msra.mxu0 0
    %662 = vmatpush.bf16.msra.mxu0 %v595
    %663 = vmatpush.bf16.msra.mxu0 %v594
    %664 = vmatpush.bf16.msra.mxu0 %v593
    %665 = vmatpush.bf16.msra.mxu0 %v592
    %666 = vmatmul.bf16.gmra.mxu0 %v602
    %v667 = vpop.f32.mrf.mxu0
    %v668 = vadd.f32 %v548, %v667
    %v669 = vpop.f32.mrf.mxu0
    %v670 = vadd.f32 %v548, %v669
    %671 = vmatmul.bf16.gmra.mxu0 %v605
    %v672 = vpop.f32.mrf.mxu0
    %v673 = vadd.f32 %v548, %v672
    %v674 = vpop.f32.mrf.mxu0
    %v675 = vadd.f32 %v548, %v674
    %676 = vmatmul.bf16.gmra.mxu0 %v608
    %v677 = vpop.f32.mrf.mxu0
    %v678 = vadd.f32 %v548, %v677
    %v679 = vpop.f32.mrf.mxu0
    %v680 = vadd.f32 %v548, %v679
    %681 = vmatmul.bf16.gmra.mxu0 %v611
    %v682 = vpop.f32.mrf.mxu0
    %v683 = vadd.f32 %v548, %v682
    %v684 = vpop.f32.mrf.mxu0
    %v685 = vadd.f32 %v548, %v684
    %686 = vmatmul.bf16.gmra.mxu0 %v614
    %v687 = vpop.f32.mrf.mxu0
    %v688 = vadd.f32 %v548, %v687
    %v689 = vpop.f32.mrf.mxu0
    %v690 = vadd.f32 %v548, %v689
    %691 = vmatmul.bf16.gmra.mxu0 %v617
    %v692 = vpop.f32.mrf.mxu0
    %v693 = vadd.f32 %v548, %v692
    %v694 = vpop.f32.mrf.mxu0
    %v695 = vadd.f32 %v548, %v694
    %696 = vmatmul.bf16.gmra.mxu0 %v620
    %v697 = vpop.f32.mrf.mxu0
    %v698 = vadd.f32 %v548, %v697
    %v699 = vpop.f32.mrf.mxu0
    %v700 = vadd.f32 %v548, %v699
    %701 = vmatmul.bf16.gmra.mxu0 %v623
    %v702 = vpop.f32.mrf.mxu0
    %v703 = vadd.f32 %v548, %v702
    %v704 = vpop.f32.mrf.mxu0
    %v705 = vadd.f32 %v548, %v704
    %706 = vmatmul.bf16.gmra.mxu0 %v626
    %v707 = vpop.f32.mrf.mxu0
    %v708 = vadd.f32 %v548, %v707
    %v709 = vpop.f32.mrf.mxu0
    %v710 = vadd.f32 %v548, %v709
    %711 = vmatmul.bf16.gmra.mxu0 %v629
    %v712 = vpop.f32.mrf.mxu0
    %v713 = vadd.f32 %v548, %v712
    %v714 = vpop.f32.mrf.mxu0
    %v715 = vadd.f32 %v548, %v714
    %716 = vmatmul.bf16.gmra.mxu0 %v632
    %v717 = vpop.f32.mrf.mxu0
    %v718 = vadd.f32 %v548, %v717
    %v719 = vpop.f32.mrf.mxu0
    %v720 = vadd.f32 %v548, %v719
    %721 = vmatmul.bf16.gmra.mxu0 %v635
    %v722 = vpop.f32.mrf.mxu0
    %v723 = vadd.f32 %v548, %v722
    %v724 = vpop.f32.mrf.mxu0
    %v725 = vadd.f32 %v548, %v724
    %726 = vmatmul.bf16.gmra.mxu0 %v638
    %v727 = vpop.f32.mrf.mxu0
    %v728 = vadd.f32 %v548, %v727
    %v729 = vpop.f32.mrf.mxu0
    %v730 = vadd.f32 %v548, %v729
    %731 = vmatmul.bf16.gmra.mxu0 %v641
    %v732 = vpop.f32.mrf.mxu0
    %v733 = vadd.f32 %v548, %v732
    %v734 = vpop.f32.mrf.mxu0
    %v735 = vadd.f32 %v548, %v734
    %736 = vmatmul.bf16.gmra.mxu0 %v644
    %v737 = vpop.f32.mrf.mxu0
    %v738 = vadd.f32 %v548, %v737
    %v739 = vpop.f32.mrf.mxu0
    %v740 = vadd.f32 %v548, %v739
    %741 = vmatmul.bf16.gmra.mxu0 %v647
    %v742 = vpop.f32.mrf.mxu0
    %v743 = vadd.f32 %v548, %v742
    %v744 = vpop.f32.mrf.mxu0
    %v745 = vadd.f32 %v548, %v744
    %746 = vmatmul.bf16.gmra.mxu0 %v650
    %v747 = vpop.f32.mrf.mxu0
    %v748 = vadd.f32 %v548, %v747
    %v749 = vpop.f32.mrf.mxu0
    %v750 = vadd.f32 %v548, %v749
    %751 = vmatmul.bf16.gmra.mxu0 %v653
    %v752 = vpop.f32.mrf.mxu0
    %v753 = vadd.f32 %v548, %v752
    %v754 = vpop.f32.mrf.mxu0
    %v755 = vadd.f32 %v548, %v754
    %756 = vmatmul.bf16.gmra.mxu0 %v656
    %v757 = vpop.f32.mrf.mxu0
    %v758 = vadd.f32 %v548, %v757
    %v759 = vpop.f32.mrf.mxu0
    %v760 = vadd.f32 %v548, %v759
    %761 = vdwg.mxu0
    %v762 = vmax.f32 %v668, 0.0
    %v763 = vmax.f32 %v670, 0.0
    %v764 = vmax.f32 %v673, 0.0
    %v765 = vmax.f32 %v675, 0.0
    %v766 = vmax.f32 %v678, 0.0
    %v767 = vmax.f32 %v680, 0.0
    %v768 = vmax.f32 %v683, 0.0
    %v769 = vmax.f32 %v685, 0.0
    %v770 = vmax.f32 %v688, 0.0
    %v771 = vmax.f32 %v690, 0.0
    %v772 = vmax.f32 %v693, 0.0
    %v773 = vmax.f32 %v695, 0.0
    %v774 = vmax.f32 %v698, 0.0
    %v775 = vmax.f32 %v700, 0.0
    %v776 = vmax.f32 %v703, 0.0
    %v777 = vmax.f32 %v705, 0.0
    %v778 = vmax.f32 %v708, 0.0
    %v779 = vmax.f32 %v710, 0.0
    %v780 = vmax.f32 %v713, 0.0
    %v781 = vmax.f32 %v715, 0.0
    %v782 = vmax.f32 %v718, 0.0
    %v783 = vmax.f32 %v720, 0.0
    %v784 = vmax.f32 %v723, 0.0
    %v785 = vmax.f32 %v725, 0.0
    %v786 = vmax.f32 %v728, 0.0
    %v787 = vmax.f32 %v730, 0.0
    %v788 = vmax.f32 %v733, 0.0
    %v789 = vmax.f32 %v735, 0.0
    %v790 = vmax.f32 %v738, 0.0
    %v791 = vmax.f32 %v740, 0.0
    %v792 = vmax.f32 %v743, 0.0
    %v793 = vmax.f32 %v745, 0.0
    %v794 = vmax.f32 %v748, 0.0
    %v795 = vmax.f32 %v750, 0.0
    %v796 = vmax.f32 %v753, 0.0
    %v797 = vmax.f32 %v755, 0.0
    %v798 = vmax.f32 %v758, 0.0
    %v799 = vmax.f32 %v760, 0.0
    %s800 = scalar_lea.vmem %s8, 3
    %v801 = vld [vmem:[%s800] ss:$8 sm:$0xf]
    %v802 = vpack.c.bf16 %v763, %v762
    %v803 = vpack.c.bf16 %v765, %v764
    %v804 = vpack.c.bf16 %v767, %v766
    %v805 = vpack.c.bf16 %v769, %v768
    %v806 = vpack.c.bf16 %v771, %v770
    %v807 = vpack.c.bf16 %v773, %v772
    %v808 = vpack.c.bf16 %v775, %v774
    %v809 = vpack.c.bf16 %v777, %v776
    %v810 = vpack.c.bf16 %v779, %v778
    %v811 = vpack.c.bf16 %v781, %v780
    %v812 = vpack.c.bf16 %v783, %v782
    %v813 = vpack.c.bf16 %v785, %v784
    %v814 = vpack.c.bf16 %v787, %v786
    %v815 = vpack.c.bf16 %v789, %v788
    %v816 = vpack.c.bf16 %v791, %v790
    %v817 = vpack.c.bf16 %v793, %v792
    %v818 = vpack.c.bf16 %v795, %v794
    %v819 = vpack.c.bf16 %v797, %v796
    %v820 = vpack.c.bf16 %v799, %v798
    %v821 = vld [vmem:[%s4] sm:$0xff]
    %v822 = vld [vmem:[%s4 + $0x8] sm:$0xff]
    %v823 = vld [vmem:[%s4 + $0x10] sm:$0xff]
    %v824 = vld [vmem:[%s4 + $0x18] sm:$0xff]
    %v825 = vld [vmem:[%s4 + $0x20] sm:$0xff]
    %v826 = vld [vmem:[%s4 + $0x28] sm:$0xff]
    %v827 = vld [vmem:[%s4 + $0x30] sm:$0xff]
    %v828 = vld [vmem:[%s4 + $0x38] sm:$0xff]
    %v829 = vld [vmem:[%s4 + $0x40] sm:$0xff]
    %v830 = vld [vmem:[%s4 + $0x48] sm:$0xff]
    %v831 = vld [vmem:[%s4 + $0x50] sm:$0xff]
    %v832 = vld [vmem:[%s4 + $0x58] sm:$0xff]
    %v833 = vld [vmem:[%s4 + $0x60] sm:$0xff]
    %v834 = vld [vmem:[%s4 + $0x68] sm:$0xff]
    %v835 = vld [vmem:[%s4 + $0x70] sm:$0xff]
    %v836 = vld [vmem:[%s4 + $0x78] sm:$0xff]
    %v837 = vld [vmem:[%s4 + $0x80] sm:$0xff]
    %v838 = vld [vmem:[%s4 + $0x88] sm:$0xff]
    %v839 = vld [vmem:[%s4 + $0x90] sm:$0xff]
    %v840 = vld [vmem:[%s4 + $0x98] sm:$0xff]
    %v841 = vld [vmem:[%s4 + $0xa0] sm:$0xff]
    %v842 = vld [vmem:[%s4 + $0xa8] sm:$0xff]
    %v843 = vld [vmem:[%s4 + $0xb0] sm:$0xff]
    %v844 = vld [vmem:[%s4 + $0xb8] sm:$0xff]
    %v845 = vld [vmem:[%s4 + $0xc0] sm:$0xff]
    %v846 = vld [vmem:[%s4 + $0xc8] sm:$0xff]
    %v847 = vld [vmem:[%s4 + $0xd0] sm:$0xff]
    %v848 = vld [vmem:[%s4 + $0xd8] sm:$0xff]
    %v849 = vld [vmem:[%s4 + $0xe0] sm:$0xff]
    %v850 = vld [vmem:[%s4 + $0xe8] sm:$0xff]
    %v851 = vld [vmem:[%s4 + $0xf0] sm:$0xff]
    %v852 = vld [vmem:[%s4 + $0xf8] sm:$0xff]
    %v854 = vperm.slane %v801, 0
    %v855 = vperm.slane %v801, 1
    %v856 = vperm.slane %v801, 2
    %v857 = vperm.slane %v801, 3
    %v894 = vunpack.c.l.b16 %v821
    %v895 = vunpack.c.h.b16 %v821
    %v896 = vunpack.c.l.b16 %v822
    %v897 = vunpack.c.h.b16 %v822
    %v898 = vunpack.c.l.b16 %v823
    %v899 = vunpack.c.h.b16 %v823
    %v900 = vunpack.c.l.b16 %v824
    %v901 = vunpack.c.h.b16 %v824
    %v902 = vunpack.c.l.b16 %v825
    %v903 = vunpack.c.h.b16 %v825
    %v904 = vunpack.c.l.b16 %v826
    %v905 = vunpack.c.h.b16 %v826
    %v906 = vunpack.c.l.b16 %v827
    %v907 = vunpack.c.h.b16 %v827
    %v908 = vunpack.c.l.b16 %v828
    %v909 = vunpack.c.h.b16 %v828
    %v910 = vunpack.c.l.b16 %v829
    %v911 = vunpack.c.h.b16 %v829
    %v912 = vunpack.c.l.b16 %v830
    %v913 = vunpack.c.h.b16 %v830
    %v914 = vunpack.c.l.b16 %v831
    %v915 = vunpack.c.h.b16 %v831
    %v916 = vunpack.c.l.b16 %v832
    %v917 = vunpack.c.h.b16 %v832
    %v918 = vunpack.c.l.b16 %v833
    %v919 = vunpack.c.h.b16 %v833
    %v920 = vunpack.c.l.b16 %v834
    %v921 = vunpack.c.h.b16 %v834
    %v922 = vunpack.c.l.b16 %v835
    %v923 = vunpack.c.h.b16 %v835
    %v924 = vunpack.c.l.b16 %v836
    %v925 = vunpack.c.h.b16 %v836
    %v926 = vunpack.c.l.b16 %v837
    %v927 = vunpack.c.h.b16 %v837
    %v928 = vunpack.c.l.b16 %v838
    %v929 = vunpack.c.h.b16 %v838
    %v930 = vunpack.c.l.b16 %v839
    %v931 = vunpack.c.h.b16 %v839
    %v932 = vunpack.c.l.b16 %v840
    %v933 = vunpack.c.h.b16 %v840
    %v934 = vunpack.c.l.b16 %v841
    %v935 = vunpack.c.h.b16 %v841
    %v936 = vunpack.c.l.b16 %v842
    %v937 = vunpack.c.h.b16 %v842
    %v938 = vunpack.c.l.b16 %v843
    %v939 = vunpack.c.h.b16 %v843
    %v940 = vunpack.c.l.b16 %v844
    %v941 = vunpack.c.h.b16 %v844
    %v942 = vunpack.c.l.b16 %v845
    %v943 = vunpack.c.h.b16 %v845
    %v944 = vunpack.c.l.b16 %v846
    %v945 = vunpack.c.h.b16 %v846
    %v946 = vunpack.c.l.b16 %v847
    %v947 = vunpack.c.h.b16 %v847
    %v948 = vunpack.c.l.b16 %v848
    %v949 = vunpack.c.h.b16 %v848
    %v950 = vunpack.c.l.b16 %v849
    %v951 = vunpack.c.h.b16 %v849
    %v952 = vunpack.c.l.b16 %v850
    %v953 = vunpack.c.h.b16 %v850
    %v954 = vunpack.c.l.b16 %v851
    %v955 = vunpack.c.h.b16 %v851
    %v956 = vunpack.c.l.b16 %v852
    %v957 = vunpack.c.h.b16 %v852
    %v958 = vpack.c.b16 %v898, %v894
    %v959 = vpack.c.b16 %v899, %v895
    %v960 = vpack.c.b16 %v900, %v896
    %v961 = vpack.c.b16 %v901, %v897
    %v962 = vpack.c.b16 %v906, %v902
    %v963 = vpack.c.b16 %v907, %v903
    %v964 = vpack.c.b16 %v908, %v904
    %v965 = vpack.c.b16 %v909, %v905
    %v966 = vpack.c.b16 %v914, %v910
    %v967 = vpack.c.b16 %v915, %v911
    %v968 = vpack.c.b16 %v916, %v912
    %v969 = vpack.c.b16 %v917, %v913
    %v970 = vpack.c.b16 %v922, %v918
    %v971 = vpack.c.b16 %v923, %v919
    %v972 = vpack.c.b16 %v924, %v920
    %v973 = vpack.c.b16 %v925, %v921
    %v974 = vpack.c.b16 %v930, %v926
    %v975 = vpack.c.b16 %v931, %v927
    %v976 = vpack.c.b16 %v932, %v928
    %v977 = vpack.c.b16 %v933, %v929
    %v978 = vpack.c.b16 %v938, %v934
    %v979 = vpack.c.b16 %v939, %v935
    %v980 = vpack.c.b16 %v940, %v936
    %v981 = vpack.c.b16 %v941, %v937
    %v982 = vpack.c.b16 %v946, %v942
    %v983 = vpack.c.b16 %v947, %v943
    %v984 = vpack.c.b16 %v948, %v944
    %v985 = vpack.c.b16 %v949, %v945
    %v986 = vpack.c.b16 %v954, %v950
    %v987 = vpack.c.b16 %v955, %v951
    %v988 = vpack.c.b16 %v956, %v952
    %v989 = vpack.c.b16 %v957, %v953
    %1022 = vmatpush.bf16.msra.mxu0 %v986
    %1023 = vmatpush.bf16.msra.mxu0 %v982
    %1024 = vmatpush.bf16.msra.mxu0 %v978
    %1025 = vmatpush.bf16.msra.mxu0 %v974
    %1026 = vmatpush.bf16.msra.mxu0 %v970
    %1027 = vmatpush.bf16.msra.mxu0 %v966
    %1028 = vmatpush.bf16.msra.mxu0 %v962
    %1029 = vmatpush.bf16.msra.mxu0 %v958
    %1030 = vmatmul.bf16.gmra.mxu0 %v802
    %v1031 = vpop.f32.mrf.mxu0
    %v1032 = vadd.f32 %v854, %v1031
    %v1033 = vpop.f32.mrf.mxu0
    %v1034 = vadd.f32 %v854, %v1033
    %1035 = vmatmul.bf16.gmra.mxu0 %v803
    %v1036 = vpop.f32.mrf.mxu0
    %v1037 = vadd.f32 %v854, %v1036
    %v1038 = vpop.f32.mrf.mxu0
    %v1039 = vadd.f32 %v854, %v1038
    %1040 = vmatmul.bf16.gmra.mxu0 %v804
    %v1041 = vpop.f32.mrf.mxu0
    %v1042 = vadd.f32 %v854, %v1041
    %v1043 = vpop.f32.mrf.mxu0
    %v1044 = vadd.f32 %v854, %v1043
    %1045 = vmatmul.bf16.gmra.mxu0 %v805
    %v1046 = vpop.f32.mrf.mxu0
    %v1047 = vadd.f32 %v854, %v1046
    %v1048 = vpop.f32.mrf.mxu0
    %v1049 = vadd.f32 %v854, %v1048
    %1050 = vmatmul.bf16.gmra.mxu0 %v806
    %v1051 = vpop.f32.mrf.mxu0
    %v1052 = vadd.f32 %v854, %v1051
    %v1053 = vpop.f32.mrf.mxu0
    %v1054 = vadd.f32 %v854, %v1053
    %1055 = vmatmul.bf16.gmra.mxu0 %v807
    %v1056 = vpop.f32.mrf.mxu0
    %v1057 = vadd.f32 %v854, %v1056
    %v1058 = vpop.f32.mrf.mxu0
    %v1059 = vadd.f32 %v854, %v1058
    %1060 = vmatmul.bf16.gmra.mxu0 %v808
    %v1061 = vpop.f32.mrf.mxu0
    %v1062 = vadd.f32 %v854, %v1061
    %v1063 = vpop.f32.mrf.mxu0
    %v1064 = vadd.f32 %v854, %v1063
    %1065 = vmatmul.bf16.gmra.mxu0 %v809
    %v1066 = vpop.f32.mrf.mxu0
    %v1067 = vadd.f32 %v854, %v1066
    %v1068 = vpop.f32.mrf.mxu0
    %v1069 = vadd.f32 %v854, %v1068
    %1070 = vmatmul.bf16.gmra.mxu0 %v810
    %v1071 = vpop.f32.mrf.mxu0
    %v1072 = vadd.f32 %v854, %v1071
    %v1073 = vpop.f32.mrf.mxu0
    %v1074 = vadd.f32 %v854, %v1073
    %1075 = vmatmul.bf16.gmra.mxu0 %v811
    %v1076 = vpop.f32.mrf.mxu0
    %v1077 = vadd.f32 %v854, %v1076
    %v1078 = vpop.f32.mrf.mxu0
    %v1079 = vadd.f32 %v854, %v1078
    %1080 = vmatmul.bf16.gmra.mxu0 %v812
    %v1081 = vpop.f32.mrf.mxu0
    %v1082 = vadd.f32 %v854, %v1081
    %v1083 = vpop.f32.mrf.mxu0
    %v1084 = vadd.f32 %v854, %v1083
    %1085 = vmatmul.bf16.gmra.mxu0 %v813
    %v1086 = vpop.f32.mrf.mxu0
    %v1087 = vadd.f32 %v854, %v1086
    %v1088 = vpop.f32.mrf.mxu0
    %v1089 = vadd.f32 %v854, %v1088
    %1090 = vmatmul.bf16.gmra.mxu0 %v814
    %v1091 = vpop.f32.mrf.mxu0
    %v1092 = vadd.f32 %v854, %v1091
    %v1093 = vpop.f32.mrf.mxu0
    %v1094 = vadd.f32 %v854, %v1093
    %1095 = vmatmul.bf16.gmra.mxu0 %v815
    %v1096 = vpop.f32.mrf.mxu0
    %v1097 = vadd.f32 %v854, %v1096
    %v1098 = vpop.f32.mrf.mxu0
    %v1099 = vadd.f32 %v854, %v1098
    %1100 = vmatmul.bf16.gmra.mxu0 %v816
    %v1101 = vpop.f32.mrf.mxu0
    %v1102 = vadd.f32 %v854, %v1101
    %v1103 = vpop.f32.mrf.mxu0
    %v1104 = vadd.f32 %v854, %v1103
    %1105 = vmatmul.bf16.gmra.mxu0 %v817
    %v1106 = vpop.f32.mrf.mxu0
    %v1107 = vadd.f32 %v854, %v1106
    %v1108 = vpop.f32.mrf.mxu0
    %v1109 = vadd.f32 %v854, %v1108
    %1110 = vmatmul.bf16.gmra.mxu0 %v818
    %v1111 = vpop.f32.mrf.mxu0
    %v1112 = vadd.f32 %v854, %v1111
    %v1113 = vpop.f32.mrf.mxu0
    %v1114 = vadd.f32 %v854, %v1113
    %1115 = vmatmul.bf16.gmra.mxu0 %v819
    %v1116 = vpop.f32.mrf.mxu0
    %v1117 = vadd.f32 %v854, %v1116
    %v1118 = vpop.f32.mrf.mxu0
    %v1119 = vadd.f32 %v854, %v1118
    %1120 = vmatmul.bf16.gmra.mxu0 %v820
    %v1121 = vpop.f32.mrf.mxu0
    %v1122 = vadd.f32 %v854, %v1121
    %v1123 = vpop.f32.mrf.mxu0
    %v1124 = vadd.f32 %v854, %v1123
    %1125 = vdwg.mxu0
    %1126 = vmatpush.bf16.msra.mxu0 %v987
    %1127 = vmatpush.bf16.msra.mxu0 %v983
    %1128 = vmatpush.bf16.msra.mxu0 %v979
    %1129 = vmatpush.bf16.msra.mxu0 %v975
    %1130 = vmatpush.bf16.msra.mxu0 %v971
    %1131 = vmatpush.bf16.msra.mxu0 %v967
    %1132 = vmatpush.bf16.msra.mxu0 %v963
    %1133 = vmatpush.bf16.msra.mxu0 %v959
    %1134 = vmatmul.bf16.gmra.mxu0 %v802
    %v1135 = vpop.f32.mrf.mxu0
    %v1136 = vadd.f32 %v855, %v1135
    %v1137 = vpop.f32.mrf.mxu0
    %v1138 = vadd.f32 %v855, %v1137
    %1139 = vmatmul.bf16.gmra.mxu0 %v803
    %v1140 = vpop.f32.mrf.mxu0
    %v1141 = vadd.f32 %v855, %v1140
    %v1142 = vpop.f32.mrf.mxu0
    %v1143 = vadd.f32 %v855, %v1142
    %1144 = vmatmul.bf16.gmra.mxu0 %v804
    %v1145 = vpop.f32.mrf.mxu0
    %v1146 = vadd.f32 %v855, %v1145
    %v1147 = vpop.f32.mrf.mxu0
    %v1148 = vadd.f32 %v855, %v1147
    %1149 = vmatmul.bf16.gmra.mxu0 %v805
    %v1150 = vpop.f32.mrf.mxu0
    %v1151 = vadd.f32 %v855, %v1150
    %v1152 = vpop.f32.mrf.mxu0
    %v1153 = vadd.f32 %v855, %v1152
    %1154 = vmatmul.bf16.gmra.mxu0 %v806
    %v1155 = vpop.f32.mrf.mxu0
    %v1156 = vadd.f32 %v855, %v1155
    %v1157 = vpop.f32.mrf.mxu0
    %v1158 = vadd.f32 %v855, %v1157
    %1159 = vmatmul.bf16.gmra.mxu0 %v807
    %v1160 = vpop.f32.mrf.mxu0
    %v1161 = vadd.f32 %v855, %v1160
    %v1162 = vpop.f32.mrf.mxu0
    %v1163 = vadd.f32 %v855, %v1162
    %1164 = vmatmul.bf16.gmra.mxu0 %v808
    %v1165 = vpop.f32.mrf.mxu0
    %v1166 = vadd.f32 %v855, %v1165
    %v1167 = vpop.f32.mrf.mxu0
    %v1168 = vadd.f32 %v855, %v1167
    %1169 = vmatmul.bf16.gmra.mxu0 %v809
    %v1170 = vpop.f32.mrf.mxu0
    %v1171 = vadd.f32 %v855, %v1170
    %v1172 = vpop.f32.mrf.mxu0
    %v1173 = vadd.f32 %v855, %v1172
    %1174 = vmatmul.bf16.gmra.mxu0 %v810
    %v1175 = vpop.f32.mrf.mxu0
    %v1176 = vadd.f32 %v855, %v1175
    %v1177 = vpop.f32.mrf.mxu0
    %v1178 = vadd.f32 %v855, %v1177
    %1179 = vmatmul.bf16.gmra.mxu0 %v811
    %v1180 = vpop.f32.mrf.mxu0
    %v1181 = vadd.f32 %v855, %v1180
    %v1182 = vpop.f32.mrf.mxu0
    %v1183 = vadd.f32 %v855, %v1182
    %1184 = vmatmul.bf16.gmra.mxu0 %v812
    %v1185 = vpop.f32.mrf.mxu0
    %v1186 = vadd.f32 %v855, %v1185
    %v1187 = vpop.f32.mrf.mxu0
    %v1188 = vadd.f32 %v855, %v1187
    %1189 = vmatmul.bf16.gmra.mxu0 %v813
    %v1190 = vpop.f32.mrf.mxu0
    %v1191 = vadd.f32 %v855, %v1190
    %v1192 = vpop.f32.mrf.mxu0
    %v1193 = vadd.f32 %v855, %v1192
    %1194 = vmatmul.bf16.gmra.mxu0 %v814
    %v1195 = vpop.f32.mrf.mxu0
    %v1196 = vadd.f32 %v855, %v1195
    %v1197 = vpop.f32.mrf.mxu0
    %v1198 = vadd.f32 %v855, %v1197
    %1199 = vmatmul.bf16.gmra.mxu0 %v815
    %v1200 = vpop.f32.mrf.mxu0
    %v1201 = vadd.f32 %v855, %v1200
    %v1202 = vpop.f32.mrf.mxu0
    %v1203 = vadd.f32 %v855, %v1202
    %1204 = vmatmul.bf16.gmra.mxu0 %v816
    %v1205 = vpop.f32.mrf.mxu0
    %v1206 = vadd.f32 %v855, %v1205
    %v1207 = vpop.f32.mrf.mxu0
    %v1208 = vadd.f32 %v855, %v1207
    %1209 = vmatmul.bf16.gmra.mxu0 %v817
    %v1210 = vpop.f32.mrf.mxu0
    %v1211 = vadd.f32 %v855, %v1210
    %v1212 = vpop.f32.mrf.mxu0
    %v1213 = vadd.f32 %v855, %v1212
    %1214 = vmatmul.bf16.gmra.mxu0 %v818
    %v1215 = vpop.f32.mrf.mxu0
    %v1216 = vadd.f32 %v855, %v1215
    %v1217 = vpop.f32.mrf.mxu0
    %v1218 = vadd.f32 %v855, %v1217
    %1219 = vmatmul.bf16.gmra.mxu0 %v819
    %v1220 = vpop.f32.mrf.mxu0
    %v1221 = vadd.f32 %v855, %v1220
    %v1222 = vpop.f32.mrf.mxu0
    %v1223 = vadd.f32 %v855, %v1222
    %1224 = vmatmul.bf16.gmra.mxu0 %v820
    %v1225 = vpop.f32.mrf.mxu0
    %v1226 = vadd.f32 %v855, %v1225
    %v1227 = vpop.f32.mrf.mxu0
    %v1228 = vadd.f32 %v855, %v1227
    %1229 = vdwg.mxu0
    %1230 = vmatpush.bf16.msra.mxu0 %v988
    %1231 = vmatpush.bf16.msra.mxu0 %v984
    %1232 = vmatpush.bf16.msra.mxu0 %v980
    %1233 = vmatpush.bf16.msra.mxu0 %v976
    %1234 = vmatpush.bf16.msra.mxu0 %v972
    %1235 = vmatpush.bf16.msra.mxu0 %v968
    %1236 = vmatpush.bf16.msra.mxu0 %v964
    %1237 = vmatpush.bf16.msra.mxu0 %v960
    %1238 = vmatmul.bf16.gmra.mxu0 %v802
    %v1239 = vpop.f32.mrf.mxu0
    %v1240 = vadd.f32 %v856, %v1239
    %v1241 = vpop.f32.mrf.mxu0
    %v1242 = vadd.f32 %v856, %v1241
    %1243 = vmatmul.bf16.gmra.mxu0 %v803
    %v1244 = vpop.f32.mrf.mxu0
    %v1245 = vadd.f32 %v856, %v1244
    %v1246 = vpop.f32.mrf.mxu0
    %v1247 = vadd.f32 %v856, %v1246
    %1248 = vmatmul.bf16.gmra.mxu0 %v804
    %v1249 = vpop.f32.mrf.mxu0
    %v1250 = vadd.f32 %v856, %v1249
    %v1251 = vpop.f32.mrf.mxu0
    %v1252 = vadd.f32 %v856, %v1251
    %1253 = vmatmul.bf16.gmra.mxu0 %v805
    %v1254 = vpop.f32.mrf.mxu0
    %v1255 = vadd.f32 %v856, %v1254
    %v1256 = vpop.f32.mrf.mxu0
    %v1257 = vadd.f32 %v856, %v1256
    %1258 = vmatmul.bf16.gmra.mxu0 %v806
    %v1259 = vpop.f32.mrf.mxu0
    %v1260 = vadd.f32 %v856, %v1259
    %v1261 = vpop.f32.mrf.mxu0
    %v1262 = vadd.f32 %v856, %v1261
    %1263 = vmatmul.bf16.gmra.mxu0 %v807
    %v1264 = vpop.f32.mrf.mxu0
    %v1265 = vadd.f32 %v856, %v1264
    %v1266 = vpop.f32.mrf.mxu0
    %v1267 = vadd.f32 %v856, %v1266
    %1268 = vmatmul.bf16.gmra.mxu0 %v808
    %v1269 = vpop.f32.mrf.mxu0
    %v1270 = vadd.f32 %v856, %v1269
    %v1271 = vpop.f32.mrf.mxu0
    %v1272 = vadd.f32 %v856, %v1271
    %1273 = vmatmul.bf16.gmra.mxu0 %v809
    %v1274 = vpop.f32.mrf.mxu0
    %v1275 = vadd.f32 %v856, %v1274
    %v1276 = vpop.f32.mrf.mxu0
    %v1277 = vadd.f32 %v856, %v1276
    %1278 = vmatmul.bf16.gmra.mxu0 %v810
    %v1279 = vpop.f32.mrf.mxu0
    %v1280 = vadd.f32 %v856, %v1279
    %v1281 = vpop.f32.mrf.mxu0
    %v1282 = vadd.f32 %v856, %v1281
    %1283 = vmatmul.bf16.gmra.mxu0 %v811
    %v1284 = vpop.f32.mrf.mxu0
    %v1285 = vadd.f32 %v856, %v1284
    %v1286 = vpop.f32.mrf.mxu0
    %v1287 = vadd.f32 %v856, %v1286
    %1288 = vmatmul.bf16.gmra.mxu0 %v812
    %v1289 = vpop.f32.mrf.mxu0
    %v1290 = vadd.f32 %v856, %v1289
    %v1291 = vpop.f32.mrf.mxu0
    %v1292 = vadd.f32 %v856, %v1291
    %1293 = vmatmul.bf16.gmra.mxu0 %v813
    %v1294 = vpop.f32.mrf.mxu0
    %v1295 = vadd.f32 %v856, %v1294
    %v1296 = vpop.f32.mrf.mxu0
    %v1297 = vadd.f32 %v856, %v1296
    %1298 = vmatmul.bf16.gmra.mxu0 %v814
    %v1299 = vpop.f32.mrf.mxu0
    %v1300 = vadd.f32 %v856, %v1299
    %v1301 = vpop.f32.mrf.mxu0
    %v1302 = vadd.f32 %v856, %v1301
    %1303 = vmatmul.bf16.gmra.mxu0 %v815
    %v1304 = vpop.f32.mrf.mxu0
    %v1305 = vadd.f32 %v856, %v1304
    %v1306 = vpop.f32.mrf.mxu0
    %v1307 = vadd.f32 %v856, %v1306
    %1308 = vmatmul.bf16.gmra.mxu0 %v816
    %v1309 = vpop.f32.mrf.mxu0
    %v1310 = vadd.f32 %v856, %v1309
    %v1311 = vpop.f32.mrf.mxu0
    %v1312 = vadd.f32 %v856, %v1311
    %1313 = vmatmul.bf16.gmra.mxu0 %v817
    %v1314 = vpop.f32.mrf.mxu0
    %v1315 = vadd.f32 %v856, %v1314
    %v1316 = vpop.f32.mrf.mxu0
    %v1317 = vadd.f32 %v856, %v1316
    %1318 = vmatmul.bf16.gmra.mxu0 %v818
    %v1319 = vpop.f32.mrf.mxu0
    %v1320 = vadd.f32 %v856, %v1319
    %v1321 = vpop.f32.mrf.mxu0
    %v1322 = vadd.f32 %v856, %v1321
    %1323 = vmatmul.bf16.gmra.mxu0 %v819
    %v1324 = vpop.f32.mrf.mxu0
    %v1325 = vadd.f32 %v856, %v1324
    %v1326 = vpop.f32.mrf.mxu0
    %v1327 = vadd.f32 %v856, %v1326
    %1328 = vmatmul.bf16.gmra.mxu0 %v820
    %v1329 = vpop.f32.mrf.mxu0
    %v1330 = vadd.f32 %v856, %v1329
    %v1331 = vpop.f32.mrf.mxu0
    %v1332 = vadd.f32 %v856, %v1331
    %1333 = vdwg.mxu0
    %1334 = vmatpush.bf16.msra.mxu0 %v989
    %1335 = vmatpush.bf16.msra.mxu0 %v985
    %1336 = vmatpush.bf16.msra.mxu0 %v981
    %1337 = vmatpush.bf16.msra.mxu0 %v977
    %1338 = vmatpush.bf16.msra.mxu0 %v973
    %1339 = vmatpush.bf16.msra.mxu0 %v969
    %1340 = vmatpush.bf16.msra.mxu0 %v965
    %1341 = vmatpush.bf16.msra.mxu0 %v961
    %1342 = vmatmul.bf16.gmra.mxu0 %v802
    %v1343 = vpop.f32.mrf.mxu0
    %v1344 = vadd.f32 %v857, %v1343
    %v1345 = vpop.f32.mrf.mxu0
    %v1346 = vadd.f32 %v857, %v1345
    %1347 = vmatmul.bf16.gmra.mxu0 %v803
    %v1348 = vpop.f32.mrf.mxu0
    %v1349 = vadd.f32 %v857, %v1348
    %v1350 = vpop.f32.mrf.mxu0
    %v1351 = vadd.f32 %v857, %v1350
    %1352 = vmatmul.bf16.gmra.mxu0 %v804
    %v1353 = vpop.f32.mrf.mxu0
    %v1354 = vadd.f32 %v857, %v1353
    %v1355 = vpop.f32.mrf.mxu0
    %v1356 = vadd.f32 %v857, %v1355
    %1357 = vmatmul.bf16.gmra.mxu0 %v805
    %v1358 = vpop.f32.mrf.mxu0
    %v1359 = vadd.f32 %v857, %v1358
    %v1360 = vpop.f32.mrf.mxu0
    %v1361 = vadd.f32 %v857, %v1360
    %1362 = vmatmul.bf16.gmra.mxu0 %v806
    %v1363 = vpop.f32.mrf.mxu0
    %v1364 = vadd.f32 %v857, %v1363
    %v1365 = vpop.f32.mrf.mxu0
    %v1366 = vadd.f32 %v857, %v1365
    %1367 = vmatmul.bf16.gmra.mxu0 %v807
    %v1368 = vpop.f32.mrf.mxu0
    %v1369 = vadd.f32 %v857, %v1368
    %v1370 = vpop.f32.mrf.mxu0
    %v1371 = vadd.f32 %v857, %v1370
    %1372 = vmatmul.bf16.gmra.mxu0 %v808
    %v1373 = vpop.f32.mrf.mxu0
    %v1374 = vadd.f32 %v857, %v1373
    %v1375 = vpop.f32.mrf.mxu0
    %v1376 = vadd.f32 %v857, %v1375
    %1377 = vmatmul.bf16.gmra.mxu0 %v809
    %v1378 = vpop.f32.mrf.mxu0
    %v1379 = vadd.f32 %v857, %v1378
    %v1380 = vpop.f32.mrf.mxu0
    %v1381 = vadd.f32 %v857, %v1380
    %1382 = vmatmul.bf16.gmra.mxu0 %v810
    %v1383 = vpop.f32.mrf.mxu0
    %v1384 = vadd.f32 %v857, %v1383
    %v1385 = vpop.f32.mrf.mxu0
    %v1386 = vadd.f32 %v857, %v1385
    %1387 = vmatmul.bf16.gmra.mxu0 %v811
    %v1388 = vpop.f32.mrf.mxu0
    %v1389 = vadd.f32 %v857, %v1388
    %v1390 = vpop.f32.mrf.mxu0
    %v1391 = vadd.f32 %v857, %v1390
    %1392 = vmatmul.bf16.gmra.mxu0 %v812
    %v1393 = vpop.f32.mrf.mxu0
    %v1394 = vadd.f32 %v857, %v1393
    %v1395 = vpop.f32.mrf.mxu0
    %v1396 = vadd.f32 %v857, %v1395
    %1397 = vmatmul.bf16.gmra.mxu0 %v813
    %v1398 = vpop.f32.mrf.mxu0
    %v1399 = vadd.f32 %v857, %v1398
    %v1400 = vpop.f32.mrf.mxu0
    %v1401 = vadd.f32 %v857, %v1400
    %1402 = vmatmul.bf16.gmra.mxu0 %v814
    %v1403 = vpop.f32.mrf.mxu0
    %v1404 = vadd.f32 %v857, %v1403
    %v1405 = vpop.f32.mrf.mxu0
    %v1406 = vadd.f32 %v857, %v1405
    %1407 = vmatmul.bf16.gmra.mxu0 %v815
    %v1408 = vpop.f32.mrf.mxu0
    %v1409 = vadd.f32 %v857, %v1408
    %v1410 = vpop.f32.mrf.mxu0
    %v1411 = vadd.f32 %v857, %v1410
    %1412 = vmatmul.bf16.gmra.mxu0 %v816
    %v1413 = vpop.f32.mrf.mxu0
    %v1414 = vadd.f32 %v857, %v1413
    %v1415 = vpop.f32.mrf.mxu0
    %v1416 = vadd.f32 %v857, %v1415
    %1417 = vmatmul.bf16.gmra.mxu0 %v817
    %v1418 = vpop.f32.mrf.mxu0
    %v1419 = vadd.f32 %v857, %v1418
    %v1420 = vpop.f32.mrf.mxu0
    %v1421 = vadd.f32 %v857, %v1420
    %1422 = vmatmul.bf16.gmra.mxu0 %v818
    %v1423 = vpop.f32.mrf.mxu0
    %v1424 = vadd.f32 %v857, %v1423
    %v1425 = vpop.f32.mrf.mxu0
    %v1426 = vadd.f32 %v857, %v1425
    %1427 = vmatmul.bf16.gmra.mxu0 %v819
    %v1428 = vpop.f32.mrf.mxu0
    %v1429 = vadd.f32 %v857, %v1428
    %v1430 = vpop.f32.mrf.mxu0
    %v1431 = vadd.f32 %v857, %v1430
    %1432 = vmatmul.bf16.gmra.mxu0 %v820
    %v1433 = vpop.f32.mrf.mxu0
    %v1434 = vadd.f32 %v857, %v1433
    %v1435 = vpop.f32.mrf.mxu0
    %v1436 = vadd.f32 %v857, %v1435
    %1437 = vdwg.mxu0
    %v1438 = vmax.f32 %v1032, 0.0
    %v1439 = vmax.f32 %v1136, 0.0
    %v1440 = vmax.f32 %v1240, 0.0
    %v1441 = vmax.f32 %v1344, 0.0
    %v1442 = vmax.f32 %v1034, 0.0
    %v1443 = vmax.f32 %v1138, 0.0
    %v1444 = vmax.f32 %v1242, 0.0
    %v1445 = vmax.f32 %v1346, 0.0
    %v1446 = vmax.f32 %v1037, 0.0
    %v1447 = vmax.f32 %v1141, 0.0
    %v1448 = vmax.f32 %v1245, 0.0
    %v1449 = vmax.f32 %v1349, 0.0
    %v1450 = vmax.f32 %v1039, 0.0
    %v1451 = vmax.f32 %v1143, 0.0
    %v1452 = vmax.f32 %v1247, 0.0
    %v1453 = vmax.f32 %v1351, 0.0
    %v1454 = vmax.f32 %v1042, 0.0
    %v1455 = vmax.f32 %v1146, 0.0
    %v1456 = vmax.f32 %v1250, 0.0
    %v1457 = vmax.f32 %v1354, 0.0
    %v1458 = vmax.f32 %v1044, 0.0
    %v1459 = vmax.f32 %v1148, 0.0
    %v1460 = vmax.f32 %v1252, 0.0
    %v1461 = vmax.f32 %v1356, 0.0
    %v1462 = vmax.f32 %v1047, 0.0
    %v1463 = vmax.f32 %v1151, 0.0
    %v1464 = vmax.f32 %v1255, 0.0
    %v1465 = vmax.f32 %v1359, 0.0
    %v1466 = vmax.f32 %v1049, 0.0
    %v1467 = vmax.f32 %v1153, 0.0
    %v1468 = vmax.f32 %v1257, 0.0
    %v1469 = vmax.f32 %v1361, 0.0
    %v1470 = vmax.f32 %v1052, 0.0
    %v1471 = vmax.f32 %v1156, 0.0
    %v1472 = vmax.f32 %v1260, 0.0
    %v1473 = vmax.f32 %v1364, 0.0
    %v1474 = vmax.f32 %v1054, 0.0
    %v1475 = vmax.f32 %v1158, 0.0
    %v1476 = vmax.f32 %v1262, 0.0
    %v1477 = vmax.f32 %v1366, 0.0
    %v1478 = vmax.f32 %v1057, 0.0
    %v1479 = vmax.f32 %v1161, 0.0
    %v1480 = vmax.f32 %v1265, 0.0
    %v1481 = vmax.f32 %v1369, 0.0
    %v1482 = vmax.f32 %v1059, 0.0
    %v1483 = vmax.f32 %v1163, 0.0
    %v1484 = vmax.f32 %v1267, 0.0
    %v1485 = vmax.f32 %v1371, 0.0
    %v1486 = vmax.f32 %v1062, 0.0
    %v1487 = vmax.f32 %v1166, 0.0
    %v1488 = vmax.f32 %v1270, 0.0
    %v1489 = vmax.f32 %v1374, 0.0
    %v1490 = vmax.f32 %v1064, 0.0
    %v1491 = vmax.f32 %v1168, 0.0
    %v1492 = vmax.f32 %v1272, 0.0
    %v1493 = vmax.f32 %v1376, 0.0
    %v1494 = vmax.f32 %v1067, 0.0
    %v1495 = vmax.f32 %v1171, 0.0
    %v1496 = vmax.f32 %v1275, 0.0
    %v1497 = vmax.f32 %v1379, 0.0
    %v1498 = vmax.f32 %v1069, 0.0
    %v1499 = vmax.f32 %v1173, 0.0
    %v1500 = vmax.f32 %v1277, 0.0
    %v1501 = vmax.f32 %v1381, 0.0
    %v1502 = vmax.f32 %v1072, 0.0
    %v1503 = vmax.f32 %v1176, 0.0
    %v1504 = vmax.f32 %v1280, 0.0
    %v1505 = vmax.f32 %v1384, 0.0
    %v1506 = vmax.f32 %v1074, 0.0
    %v1507 = vmax.f32 %v1178, 0.0
    %v1508 = vmax.f32 %v1282, 0.0
    %v1509 = vmax.f32 %v1386, 0.0
    %v1510 = vmax.f32 %v1077, 0.0
    %v1511 = vmax.f32 %v1181, 0.0
    %v1512 = vmax.f32 %v1285, 0.0
    %v1513 = vmax.f32 %v1389, 0.0
    %v1514 = vmax.f32 %v1079, 0.0
    %v1515 = vmax.f32 %v1183, 0.0
    %v1516 = vmax.f32 %v1287, 0.0
    %v1517 = vmax.f32 %v1391, 0.0
    %v1518 = vmax.f32 %v1082, 0.0
    %v1519 = vmax.f32 %v1186, 0.0
    %v1520 = vmax.f32 %v1290, 0.0
    %v1521 = vmax.f32 %v1394, 0.0
    %v1522 = vmax.f32 %v1084, 0.0
    %v1523 = vmax.f32 %v1188, 0.0
    %v1524 = vmax.f32 %v1292, 0.0
    %v1525 = vmax.f32 %v1396, 0.0
    %v1526 = vmax.f32 %v1087, 0.0
    %v1527 = vmax.f32 %v1191, 0.0
    %v1528 = vmax.f32 %v1295, 0.0
    %v1529 = vmax.f32 %v1399, 0.0
    %v1530 = vmax.f32 %v1089, 0.0
    %v1531 = vmax.f32 %v1193, 0.0
    %v1532 = vmax.f32 %v1297, 0.0
    %v1533 = vmax.f32 %v1401, 0.0
    %v1534 = vmax.f32 %v1092, 0.0
    %v1535 = vmax.f32 %v1196, 0.0
    %v1536 = vmax.f32 %v1300, 0.0
    %v1537 = vmax.f32 %v1404, 0.0
    %v1538 = vmax.f32 %v1094, 0.0
    %v1539 = vmax.f32 %v1198, 0.0
    %v1540 = vmax.f32 %v1302, 0.0
    %v1541 = vmax.f32 %v1406, 0.0
    %v1542 = vmax.f32 %v1097, 0.0
    %v1543 = vmax.f32 %v1201, 0.0
    %v1544 = vmax.f32 %v1305, 0.0
    %v1545 = vmax.f32 %v1409, 0.0
    %v1546 = vmax.f32 %v1099, 0.0
    %v1547 = vmax.f32 %v1203, 0.0
    %v1548 = vmax.f32 %v1307, 0.0
    %v1549 = vmax.f32 %v1411, 0.0
    %v1550 = vmax.f32 %v1102, 0.0
    %v1551 = vmax.f32 %v1206, 0.0
    %v1552 = vmax.f32 %v1310, 0.0
    %v1553 = vmax.f32 %v1414, 0.0
    %v1554 = vmax.f32 %v1104, 0.0
    %v1555 = vmax.f32 %v1208, 0.0
    %v1556 = vmax.f32 %v1312, 0.0
    %v1557 = vmax.f32 %v1416, 0.0
    %v1558 = vmax.f32 %v1107, 0.0
    %v1559 = vmax.f32 %v1211, 0.0
    %v1560 = vmax.f32 %v1315, 0.0
    %v1561 = vmax.f32 %v1419, 0.0
    %v1562 = vmax.f32 %v1109, 0.0
    %v1563 = vmax.f32 %v1213, 0.0
    %v1564 = vmax.f32 %v1317, 0.0
    %v1565 = vmax.f32 %v1421, 0.0
    %v1566 = vmax.f32 %v1112, 0.0
    %v1567 = vmax.f32 %v1216, 0.0
    %v1568 = vmax.f32 %v1320, 0.0
    %v1569 = vmax.f32 %v1424, 0.0
    %v1570 = vmax.f32 %v1114, 0.0
    %v1571 = vmax.f32 %v1218, 0.0
    %v1572 = vmax.f32 %v1322, 0.0
    %v1573 = vmax.f32 %v1426, 0.0
    %v1574 = vmax.f32 %v1117, 0.0
    %v1575 = vmax.f32 %v1221, 0.0
    %v1576 = vmax.f32 %v1325, 0.0
    %v1577 = vmax.f32 %v1429, 0.0
    %v1578 = vmax.f32 %v1119, 0.0
    %v1579 = vmax.f32 %v1223, 0.0
    %v1580 = vmax.f32 %v1327, 0.0
    %v1581 = vmax.f32 %v1431, 0.0
    %v1582 = vmax.f32 %v1122, 0.0
    %v1583 = vmax.f32 %v1226, 0.0
    %v1584 = vmax.f32 %v1330, 0.0
    %v1585 = vmax.f32 %v1434, 0.0
    %v1586 = vmax.f32 %v1124, 0.0
    %v1587 = vmax.f32 %v1228, 0.0
    %v1588 = vmax.f32 %v1332, 0.0
    %v1589 = vmax.f32 %v1436, 0.0
    %v1590 = vld [vmem:[%s8 + $0x4] ss:$0 sm:$0xff]
    %v1591 = vpack.c.bf16 %v1442, %v1438
    %v1592 = vpack.c.bf16 %v1443, %v1439
    %v1593 = vpack.c.bf16 %v1444, %v1440
    %v1594 = vpack.c.bf16 %v1445, %v1441
    %v1595 = vpack.c.bf16 %v1450, %v1446
    %v1596 = vpack.c.bf16 %v1451, %v1447
    %v1597 = vpack.c.bf16 %v1452, %v1448
    %v1598 = vpack.c.bf16 %v1453, %v1449
    %v1599 = vpack.c.bf16 %v1458, %v1454
    %v1600 = vpack.c.bf16 %v1459, %v1455
    %v1601 = vpack.c.bf16 %v1460, %v1456
    %v1602 = vpack.c.bf16 %v1461, %v1457
    %v1603 = vpack.c.bf16 %v1466, %v1462
    %v1604 = vpack.c.bf16 %v1467, %v1463
    %v1605 = vpack.c.bf16 %v1468, %v1464
    %v1606 = vpack.c.bf16 %v1469, %v1465
    %v1607 = vpack.c.bf16 %v1474, %v1470
    %v1608 = vpack.c.bf16 %v1475, %v1471
    %v1609 = vpack.c.bf16 %v1476, %v1472
    %v1610 = vpack.c.bf16 %v1477, %v1473
    %v1611 = vpack.c.bf16 %v1482, %v1478
    %v1612 = vpack.c.bf16 %v1483, %v1479
    %v1613 = vpack.c.bf16 %v1484, %v1480
    %v1614 = vpack.c.bf16 %v1485, %v1481
    %v1615 = vpack.c.bf16 %v1490, %v1486
    %v1616 = vpack.c.bf16 %v1491, %v1487
    %v1617 = vpack.c.bf16 %v1492, %v1488
    %v1618 = vpack.c.bf16 %v1493, %v1489
    %v1619 = vpack.c.bf16 %v1498, %v1494
    %v1620 = vpack.c.bf16 %v1499, %v1495
    %v1621 = vpack.c.bf16 %v1500, %v1496
    %v1622 = vpack.c.bf16 %v1501, %v1497
    %v1623 = vpack.c.bf16 %v1506, %v1502
    %v1624 = vpack.c.bf16 %v1507, %v1503
    %v1625 = vpack.c.bf16 %v1508, %v1504
    %v1626 = vpack.c.bf16 %v1509, %v1505
    %v1627 = vpack.c.bf16 %v1514, %v1510
    %v1628 = vpack.c.bf16 %v1515, %v1511
    %v1629 = vpack.c.bf16 %v1516, %v1512
    %v1630 = vpack.c.bf16 %v1517, %v1513
    %v1631 = vpack.c.bf16 %v1522, %v1518
    %v1632 = vpack.c.bf16 %v1523, %v1519
    %v1633 = vpack.c.bf16 %v1524, %v1520
    %v1634 = vpack.c.bf16 %v1525, %v1521
    %v1635 = vpack.c.bf16 %v1530, %v1526
    %v1636 = vpack.c.bf16 %v1531, %v1527
    %v1637 = vpack.c.bf16 %v1532, %v1528
    %v1638 = vpack.c.bf16 %v1533, %v1529
    %v1639 = vpack.c.bf16 %v1538, %v1534
    %v1640 = vpack.c.bf16 %v1539, %v1535
    %v1641 = vpack.c.bf16 %v1540, %v1536
    %v1642 = vpack.c.bf16 %v1541, %v1537
    %v1643 = vpack.c.bf16 %v1546, %v1542
    %v1644 = vpack.c.bf16 %v1547, %v1543
    %v1645 = vpack.c.bf16 %v1548, %v1544
    %v1646 = vpack.c.bf16 %v1549, %v1545
    %v1647 = vpack.c.bf16 %v1554, %v1550
    %v1648 = vpack.c.bf16 %v1555, %v1551
    %v1649 = vpack.c.bf16 %v1556, %v1552
    %v1650 = vpack.c.bf16 %v1557, %v1553
    %v1651 = vpack.c.bf16 %v1562, %v1558
    %v1652 = vpack.c.bf16 %v1563, %v1559
    %v1653 = vpack.c.bf16 %v1564, %v1560
    %v1654 = vpack.c.bf16 %v1565, %v1561
    %v1655 = vpack.c.bf16 %v1570, %v1566
    %v1656 = vpack.c.bf16 %v1571, %v1567
    %v1657 = vpack.c.bf16 %v1572, %v1568
    %v1658 = vpack.c.bf16 %v1573, %v1569
    %v1659 = vpack.c.bf16 %v1578, %v1574
    %v1660 = vpack.c.bf16 %v1579, %v1575
    %v1661 = vpack.c.bf16 %v1580, %v1576
    %v1662 = vpack.c.bf16 %v1581, %v1577
    %v1663 = vpack.c.bf16 %v1586, %v1582
    %v1664 = vpack.c.bf16 %v1587, %v1583
    %v1665 = vpack.c.bf16 %v1588, %v1584
    %v1666 = vpack.c.bf16 %v1589, %v1585
    %v1667 = vld [vmem:[#allocation2] sm:$0xf]
    %v1668 = vld [vmem:[#allocation2 + $0x4] sm:$0xf]
    %v1669 = vld [vmem:[#allocation2 + $0x8] sm:$0xf]
    %v1670 = vld [vmem:[#allocation2 + $0xc] sm:$0xf]
    %v1671 = vld [vmem:[#allocation2 + $0x10] sm:$0xf]
    %v1672 = vld [vmem:[#allocation2 + $0x14] sm:$0xf]
    %v1673 = vld [vmem:[#allocation2 + $0x18] sm:$0xf]
    %v1674 = vld [vmem:[#allocation2 + $0x1c] sm:$0xf]
    %v1675 = vld [vmem:[#allocation2 + $0x20] sm:$0xf]
    %v1676 = vld [vmem:[#allocation2 + $0x24] sm:$0xf]
    %v1677 = vld [vmem:[#allocation2 + $0x28] sm:$0xf]
    %v1678 = vld [vmem:[#allocation2 + $0x2c] sm:$0xf]
    %v1679 = vld [vmem:[#allocation2 + $0x30] sm:$0xf]
    %v1680 = vld [vmem:[#allocation2 + $0x34] sm:$0xf]
    %v1681 = vld [vmem:[#allocation2 + $0x38] sm:$0xf]
    %v1682 = vld [vmem:[#allocation2 + $0x3c] sm:$0xf]
    %v1683 = vld [vmem:[#allocation2 + $0x40] sm:$0xf]
    %v1684 = vld [vmem:[#allocation2 + $0x44] sm:$0xf]
    %v1685 = vld [vmem:[#allocation2 + $0x48] sm:$0xf]
    %v1686 = vld [vmem:[#allocation2 + $0x4c] sm:$0xf]
    %v1687 = vld [vmem:[#allocation2 + $0x50] sm:$0xf]
    %v1688 = vld [vmem:[#allocation2 + $0x54] sm:$0xf]
    %v1689 = vld [vmem:[#allocation2 + $0x58] sm:$0xf]
    %v1690 = vld [vmem:[#allocation2 + $0x5c] sm:$0xf]
    %v1691 = vld [vmem:[#allocation2 + $0x60] sm:$0xf]
    %v1692 = vld [vmem:[#allocation2 + $0x64] sm:$0xf]
    %v1693 = vld [vmem:[#allocation2 + $0x68] sm:$0xf]
    %v1694 = vld [vmem:[#allocation2 + $0x6c] sm:$0xf]
    %v1695 = vld [vmem:[#allocation2 + $0x70] sm:$0xf]
    %v1696 = vld [vmem:[#allocation2 + $0x74] sm:$0xf]
    %v1697 = vld [vmem:[#allocation2 + $0x78] sm:$0xf]
    %v1698 = vld [vmem:[#allocation2 + $0x7c] sm:$0xf]
    %v1699 = vld [vmem:[#allocation2 + $0x80] sm:$0xf]
    %v1700 = vld [vmem:[#allocation2 + $0x84] sm:$0xf]
    %v1701 = vld [vmem:[#allocation2 + $0x88] sm:$0xf]
    %v1702 = vld [vmem:[#allocation2 + $0x8c] sm:$0xf]
    %v1703 = vld [vmem:[#allocation2 + $0x90] sm:$0xf]
    %v1704 = vld [vmem:[#allocation2 + $0x94] sm:$0xf]
    %v1705 = vld [vmem:[#allocation2 + $0x98] sm:$0xf]
    %v1706 = vld [vmem:[#allocation2 + $0x9c] sm:$0xf]
    %v1707 = vld [vmem:[#allocation2 + $0xa0] sm:$0xf]
    %v1708 = vld [vmem:[#allocation2 + $0xa4] sm:$0xf]
    %v1709 = vld [vmem:[#allocation2 + $0xa8] sm:$0xf]
    %v1710 = vld [vmem:[#allocation2 + $0xac] sm:$0xf]
    %v1711 = vld [vmem:[#allocation2 + $0xb0] sm:$0xf]
    %v1712 = vld [vmem:[#allocation2 + $0xb4] sm:$0xf]
    %v1713 = vld [vmem:[#allocation2 + $0xb8] sm:$0xf]
    %v1714 = vld [vmem:[#allocation2 + $0xbc] sm:$0xf]
    %v1715 = vld [vmem:[#allocation2 + $0xc0] sm:$0xf]
    %v1716 = vld [vmem:[#allocation2 + $0xc4] sm:$0xf]
    %v1717 = vld [vmem:[#allocation2 + $0xc8] sm:$0xf]
    %v1718 = vld [vmem:[#allocation2 + $0xcc] sm:$0xf]
    %v1719 = vld [vmem:[#allocation2 + $0xd0] sm:$0xf]
    %v1720 = vld [vmem:[#allocation2 + $0xd4] sm:$0xf]
    %v1721 = vld [vmem:[#allocation2 + $0xd8] sm:$0xf]
    %v1722 = vld [vmem:[#allocation2 + $0xdc] sm:$0xf]
    %v1723 = vld [vmem:[#allocation2 + $0xe0] sm:$0xf]
    %v1724 = vld [vmem:[#allocation2 + $0xe4] sm:$0xf]
    %v1725 = vld [vmem:[#allocation2 + $0xe8] sm:$0xf]
    %v1726 = vld [vmem:[#allocation2 + $0xec] sm:$0xf]
    %v1727 = vld [vmem:[#allocation2 + $0xf0] sm:$0xf]
    %v1728 = vld [vmem:[#allocation2 + $0xf4] sm:$0xf]
    %v1729 = vld [vmem:[#allocation2 + $0xf8] sm:$0xf]
    %v1730 = vld [vmem:[#allocation2 + $0xfc] sm:$0xf]
    %v1795 = vunpack.c.l.b16 %v1667
    %v1796 = vunpack.c.l.b16 %v1668
    %v1797 = vunpack.c.l.b16 %v1669
    %v1798 = vunpack.c.l.b16 %v1670
    %v1799 = vunpack.c.l.b16 %v1671
    %v1800 = vunpack.c.l.b16 %v1672
    %v1801 = vunpack.c.l.b16 %v1673
    %v1802 = vunpack.c.l.b16 %v1674
    %v1803 = vunpack.c.l.b16 %v1675
    %v1804 = vunpack.c.l.b16 %v1676
    %v1805 = vunpack.c.l.b16 %v1677
    %v1806 = vunpack.c.l.b16 %v1678
    %v1807 = vunpack.c.l.b16 %v1679
    %v1808 = vunpack.c.l.b16 %v1680
    %v1809 = vunpack.c.l.b16 %v1681
    %v1810 = vunpack.c.l.b16 %v1682
    %v1811 = vunpack.c.l.b16 %v1683
    %v1812 = vunpack.c.l.b16 %v1684
    %v1813 = vunpack.c.l.b16 %v1685
    %v1814 = vunpack.c.l.b16 %v1686
    %v1815 = vunpack.c.l.b16 %v1687
    %v1816 = vunpack.c.l.b16 %v1688
    %v1817 = vunpack.c.l.b16 %v1689
    %v1818 = vunpack.c.l.b16 %v1690
    %v1819 = vunpack.c.l.b16 %v1691
    %v1820 = vunpack.c.l.b16 %v1692
    %v1821 = vunpack.c.l.b16 %v1693
    %v1822 = vunpack.c.l.b16 %v1694
    %v1823 = vunpack.c.l.b16 %v1695
    %v1824 = vunpack.c.l.b16 %v1696
    %v1825 = vunpack.c.l.b16 %v1697
    %v1826 = vunpack.c.l.b16 %v1698
    %v1827 = vunpack.c.l.b16 %v1699
    %v1828 = vunpack.c.l.b16 %v1700
    %v1829 = vunpack.c.l.b16 %v1701
    %v1830 = vunpack.c.l.b16 %v1702
    %v1831 = vunpack.c.l.b16 %v1703
    %v1832 = vunpack.c.l.b16 %v1704
    %v1833 = vunpack.c.l.b16 %v1705
    %v1834 = vunpack.c.l.b16 %v1706
    %v1835 = vunpack.c.l.b16 %v1707
    %v1836 = vunpack.c.l.b16 %v1708
    %v1837 = vunpack.c.l.b16 %v1709
    %v1838 = vunpack.c.l.b16 %v1710
    %v1839 = vunpack.c.l.b16 %v1711
    %v1840 = vunpack.c.l.b16 %v1712
    %v1841 = vunpack.c.l.b16 %v1713
    %v1842 = vunpack.c.l.b16 %v1714
    %v1843 = vunpack.c.l.b16 %v1715
    %v1844 = vunpack.c.l.b16 %v1716
    %v1845 = vunpack.c.l.b16 %v1717
    %v1846 = vunpack.c.l.b16 %v1718
    %v1847 = vunpack.c.l.b16 %v1719
    %v1848 = vunpack.c.l.b16 %v1720
    %v1849 = vunpack.c.l.b16 %v1721
    %v1850 = vunpack.c.l.b16 %v1722
    %v1851 = vunpack.c.l.b16 %v1723
    %v1852 = vunpack.c.l.b16 %v1724
    %v1853 = vunpack.c.l.b16 %v1725
    %v1854 = vunpack.c.l.b16 %v1726
    %v1855 = vunpack.c.l.b16 %v1727
    %v1856 = vunpack.c.l.b16 %v1728
    %v1857 = vunpack.c.l.b16 %v1729
    %v1858 = vunpack.c.l.b16 %v1730
    %v1859 = vpack.c.b16 %v1796, %v1795
    %v1860 = vpack.c.b16 %v1798, %v1797
    %v1861 = vpack.c.b16 %v1800, %v1799
    %v1862 = vpack.c.b16 %v1802, %v1801
    %v1863 = vpack.c.b16 %v1804, %v1803
    %v1864 = vpack.c.b16 %v1806, %v1805
    %v1865 = vpack.c.b16 %v1808, %v1807
    %v1866 = vpack.c.b16 %v1810, %v1809
    %v1867 = vpack.c.b16 %v1812, %v1811
    %v1868 = vpack.c.b16 %v1814, %v1813
    %v1869 = vpack.c.b16 %v1816, %v1815
    %v1870 = vpack.c.b16 %v1818, %v1817
    %v1871 = vpack.c.b16 %v1820, %v1819
    %v1872 = vpack.c.b16 %v1822, %v1821
    %v1873 = vpack.c.b16 %v1824, %v1823
    %v1874 = vpack.c.b16 %v1826, %v1825
    %v1875 = vpack.c.b16 %v1828, %v1827
    %v1876 = vpack.c.b16 %v1830, %v1829
    %v1877 = vpack.c.b16 %v1832, %v1831
    %v1878 = vpack.c.b16 %v1834, %v1833
    %v1879 = vpack.c.b16 %v1836, %v1835
    %v1880 = vpack.c.b16 %v1838, %v1837
    %v1881 = vpack.c.b16 %v1840, %v1839
    %v1882 = vpack.c.b16 %v1842, %v1841
    %v1883 = vpack.c.b16 %v1844, %v1843
    %v1884 = vpack.c.b16 %v1846, %v1845
    %v1885 = vpack.c.b16 %v1848, %v1847
    %v1886 = vpack.c.b16 %v1850, %v1849
    %v1887 = vpack.c.b16 %v1852, %v1851
    %v1888 = vpack.c.b16 %v1854, %v1853
    %v1889 = vpack.c.b16 %v1856, %v1855
    %v1890 = vpack.c.b16 %v1858, %v1857
    %1923 = vmatpush.bf16.msra.mxu0 %v1866
    %1924 = vmatpush.bf16.msra.mxu0 %v1865
    %1925 = vmatpush.bf16.msra.mxu0 %v1864
    %1926 = vmatpush.bf16.msra.mxu0 %v1863
    %1927 = vmatpush.bf16.msra.mxu0 %v1862
    %1928 = vmatpush.bf16.msra.mxu0 %v1861
    %1929 = vmatpush.bf16.msra.mxu0 %v1860
    %1930 = vmatpush.bf16.msra.mxu0 %v1859
    %1931 = vmatmul.bf16.gmra.mxu0 %v1591
    %v1932 = vpop.f32.mrf.mxu0
    %v1933 = vadd.f32 %v1590, %v1932
    %v1934 = vpop.f32.mrf.mxu0
    %v1935 = vadd.f32 %v1590, %v1934
    %1936 = vmatmul.bf16.gmra.mxu0 %v1595
    %v1937 = vpop.f32.mrf.mxu0
    %v1938 = vadd.f32 %v1590, %v1937
    %v1939 = vpop.f32.mrf.mxu0
    %v1940 = vadd.f32 %v1590, %v1939
    %1941 = vmatmul.bf16.gmra.mxu0 %v1599
    %v1942 = vpop.f32.mrf.mxu0
    %v1943 = vadd.f32 %v1590, %v1942
    %v1944 = vpop.f32.mrf.mxu0
    %v1945 = vadd.f32 %v1590, %v1944
    %1946 = vmatmul.bf16.gmra.mxu0 %v1603
    %v1947 = vpop.f32.mrf.mxu0
    %v1948 = vadd.f32 %v1590, %v1947
    %v1949 = vpop.f32.mrf.mxu0
    %v1950 = vadd.f32 %v1590, %v1949
    %1951 = vmatmul.bf16.gmra.mxu0 %v1607
    %v1952 = vpop.f32.mrf.mxu0
    %v1953 = vadd.f32 %v1590, %v1952
    %v1954 = vpop.f32.mrf.mxu0
    %v1955 = vadd.f32 %v1590, %v1954
    %1956 = vmatmul.bf16.gmra.mxu0 %v1611
    %v1957 = vpop.f32.mrf.mxu0
    %v1958 = vadd.f32 %v1590, %v1957
    %v1959 = vpop.f32.mrf.mxu0
    %v1960 = vadd.f32 %v1590, %v1959
    %1961 = vmatmul.bf16.gmra.mxu0 %v1615
    %v1962 = vpop.f32.mrf.mxu0
    %v1963 = vadd.f32 %v1590, %v1962
    %v1964 = vpop.f32.mrf.mxu0
    %v1965 = vadd.f32 %v1590, %v1964
    %1966 = vmatmul.bf16.gmra.mxu0 %v1619
    %v1967 = vpop.f32.mrf.mxu0
    %v1968 = vadd.f32 %v1590, %v1967
    %v1969 = vpop.f32.mrf.mxu0
    %v1970 = vadd.f32 %v1590, %v1969
    %1971 = vmatmul.bf16.gmra.mxu0 %v1623
    %v1972 = vpop.f32.mrf.mxu0
    %v1973 = vadd.f32 %v1590, %v1972
    %v1974 = vpop.f32.mrf.mxu0
    %v1975 = vadd.f32 %v1590, %v1974
    %1976 = vmatmul.bf16.gmra.mxu0 %v1627
    %v1977 = vpop.f32.mrf.mxu0
    %v1978 = vadd.f32 %v1590, %v1977
    %v1979 = vpop.f32.mrf.mxu0
    %v1980 = vadd.f32 %v1590, %v1979
    %1981 = vmatmul.bf16.gmra.mxu0 %v1631
    %v1982 = vpop.f32.mrf.mxu0
    %v1983 = vadd.f32 %v1590, %v1982
    %v1984 = vpop.f32.mrf.mxu0
    %v1985 = vadd.f32 %v1590, %v1984
    %1986 = vmatmul.bf16.gmra.mxu0 %v1635
    %v1987 = vpop.f32.mrf.mxu0
    %v1988 = vadd.f32 %v1590, %v1987
    %v1989 = vpop.f32.mrf.mxu0
    %v1990 = vadd.f32 %v1590, %v1989
    %1991 = vmatmul.bf16.gmra.mxu0 %v1639
    %v1992 = vpop.f32.mrf.mxu0
    %v1993 = vadd.f32 %v1590, %v1992
    %v1994 = vpop.f32.mrf.mxu0
    %v1995 = vadd.f32 %v1590, %v1994
    %1996 = vmatmul.bf16.gmra.mxu0 %v1643
    %v1997 = vpop.f32.mrf.mxu0
    %v1998 = vadd.f32 %v1590, %v1997
    %v1999 = vpop.f32.mrf.mxu0
    %v2000 = vadd.f32 %v1590, %v1999
    %2001 = vmatmul.bf16.gmra.mxu0 %v1647
    %v2002 = vpop.f32.mrf.mxu0
    %v2003 = vadd.f32 %v1590, %v2002
    %v2004 = vpop.f32.mrf.mxu0
    %v2005 = vadd.f32 %v1590, %v2004
    %2006 = vmatmul.bf16.gmra.mxu0 %v1651
    %v2007 = vpop.f32.mrf.mxu0
    %v2008 = vadd.f32 %v1590, %v2007
    %v2009 = vpop.f32.mrf.mxu0
    %v2010 = vadd.f32 %v1590, %v2009
    %2011 = vmatmul.bf16.gmra.mxu0 %v1655
    %v2012 = vpop.f32.mrf.mxu0
    %v2013 = vadd.f32 %v1590, %v2012
    %v2014 = vpop.f32.mrf.mxu0
    %v2015 = vadd.f32 %v1590, %v2014
    %2016 = vmatmul.bf16.gmra.mxu0 %v1659
    %v2017 = vpop.f32.mrf.mxu0
    %v2018 = vadd.f32 %v1590, %v2017
    %v2019 = vpop.f32.mrf.mxu0
    %v2020 = vadd.f32 %v1590, %v2019
    %2021 = vmatmul.bf16.gmra.mxu0 %v1663
    %v2022 = vpop.f32.mrf.mxu0
    %v2023 = vadd.f32 %v1590, %v2022
    %v2024 = vpop.f32.mrf.mxu0
    %v2025 = vadd.f32 %v1590, %v2024
    %2026 = vdwg.mxu0
    %2027 = vmatpush.bf16.msra.mxu0 %v1874
    %2028 = vmatpush.bf16.msra.mxu0 %v1873
    %2029 = vmatpush.bf16.msra.mxu0 %v1872
    %2030 = vmatpush.bf16.msra.mxu0 %v1871
    %2031 = vmatpush.bf16.msra.mxu0 %v1870
    %2032 = vmatpush.bf16.msra.mxu0 %v1869
    %2033 = vmatpush.bf16.msra.mxu0 %v1868
    %2034 = vmatpush.bf16.msra.mxu0 %v1867
    %2035 = vmatmul.bf16.gmra.mxu0 %v1592
    %v2036 = vpop.f32.mrf.mxu0
    %v2037 = vadd.f32 %v1933, %v2036
    %v2038 = vpop.f32.mrf.mxu0
    %v2039 = vadd.f32 %v1935, %v2038
    %2040 = vmatmul.bf16.gmra.mxu0 %v1596
    %v2041 = vpop.f32.mrf.mxu0
    %v2042 = vadd.f32 %v1938, %v2041
    %v2043 = vpop.f32.mrf.mxu0
    %v2044 = vadd.f32 %v1940, %v2043
    %2045 = vmatmul.bf16.gmra.mxu0 %v1600
    %v2046 = vpop.f32.mrf.mxu0
    %v2047 = vadd.f32 %v1943, %v2046
    %v2048 = vpop.f32.mrf.mxu0
    %v2049 = vadd.f32 %v1945, %v2048
    %2050 = vmatmul.bf16.gmra.mxu0 %v1604
    %v2051 = vpop.f32.mrf.mxu0
    %v2052 = vadd.f32 %v1948, %v2051
    %v2053 = vpop.f32.mrf.mxu0
    %v2054 = vadd.f32 %v1950, %v2053
    %2055 = vmatmul.bf16.gmra.mxu0 %v1608
    %v2056 = vpop.f32.mrf.mxu0
    %v2057 = vadd.f32 %v1953, %v2056
    %v2058 = vpop.f32.mrf.mxu0
    %v2059 = vadd.f32 %v1955, %v2058
    %2060 = vmatmul.bf16.gmra.mxu0 %v1612
    %v2061 = vpop.f32.mrf.mxu0
    %v2062 = vadd.f32 %v1958, %v2061
    %v2063 = vpop.f32.mrf.mxu0
    %v2064 = vadd.f32 %v1960, %v2063
    %2065 = vmatmul.bf16.gmra.mxu0 %v1616
    %v2066 = vpop.f32.mrf.mxu0
    %v2067 = vadd.f32 %v1963, %v2066
    %v2068 = vpop.f32.mrf.mxu0
    %v2069 = vadd.f32 %v1965, %v2068
    %2070 = vmatmul.bf16.gmra.mxu0 %v1620
    %v2071 = vpop.f32.mrf.mxu0
    %v2072 = vadd.f32 %v1968, %v2071
    %v2073 = vpop.f32.mrf.mxu0
    %v2074 = vadd.f32 %v1970, %v2073
    %2075 = vmatmul.bf16.gmra.mxu0 %v1624
    %v2076 = vpop.f32.mrf.mxu0
    %v2077 = vadd.f32 %v1973, %v2076
    %v2078 = vpop.f32.mrf.mxu0
    %v2079 = vadd.f32 %v1975, %v2078
    %2080 = vmatmul.bf16.gmra.mxu0 %v1628
    %v2081 = vpop.f32.mrf.mxu0
    %v2082 = vadd.f32 %v1978, %v2081
    %v2083 = vpop.f32.mrf.mxu0
    %v2084 = vadd.f32 %v1980, %v2083
    %2085 = vmatmul.bf16.gmra.mxu0 %v1632
    %v2086 = vpop.f32.mrf.mxu0
    %v2087 = vadd.f32 %v1983, %v2086
    %v2088 = vpop.f32.mrf.mxu0
    %v2089 = vadd.f32 %v1985, %v2088
    %2090 = vmatmul.bf16.gmra.mxu0 %v1636
    %v2091 = vpop.f32.mrf.mxu0
    %v2092 = vadd.f32 %v1988, %v2091
    %v2093 = vpop.f32.mrf.mxu0
    %v2094 = vadd.f32 %v1990, %v2093
    %2095 = vmatmul.bf16.gmra.mxu0 %v1640
    %v2096 = vpop.f32.mrf.mxu0
    %v2097 = vadd.f32 %v1993, %v2096
    %v2098 = vpop.f32.mrf.mxu0
    %v2099 = vadd.f32 %v1995, %v2098
    %2100 = vmatmul.bf16.gmra.mxu0 %v1644
    %v2101 = vpop.f32.mrf.mxu0
    %v2102 = vadd.f32 %v1998, %v2101
    %v2103 = vpop.f32.mrf.mxu0
    %v2104 = vadd.f32 %v2000, %v2103
    %2105 = vmatmul.bf16.gmra.mxu0 %v1648
    %v2106 = vpop.f32.mrf.mxu0
    %v2107 = vadd.f32 %v2003, %v2106
    %v2108 = vpop.f32.mrf.mxu0
    %v2109 = vadd.f32 %v2005, %v2108
    %2110 = vmatmul.bf16.gmra.mxu0 %v1652
    %v2111 = vpop.f32.mrf.mxu0
    %v2112 = vadd.f32 %v2008, %v2111
    %v2113 = vpop.f32.mrf.mxu0
    %v2114 = vadd.f32 %v2010, %v2113
    %2115 = vmatmul.bf16.gmra.mxu0 %v1656
    %v2116 = vpop.f32.mrf.mxu0
    %v2117 = vadd.f32 %v2013, %v2116
    %v2118 = vpop.f32.mrf.mxu0
    %v2119 = vadd.f32 %v2015, %v2118
    %2120 = vmatmul.bf16.gmra.mxu0 %v1660
    %v2121 = vpop.f32.mrf.mxu0
    %v2122 = vadd.f32 %v2018, %v2121
    %v2123 = vpop.f32.mrf.mxu0
    %v2124 = vadd.f32 %v2020, %v2123
    %2125 = vmatmul.bf16.gmra.mxu0 %v1664
    %v2126 = vpop.f32.mrf.mxu0
    %v2127 = vadd.f32 %v2023, %v2126
    %v2128 = vpop.f32.mrf.mxu0
    %v2129 = vadd.f32 %v2025, %v2128
    %2130 = vdwg.mxu0
    %2131 = vmatpush.bf16.msra.mxu0 %v1882
    %2132 = vmatpush.bf16.msra.mxu0 %v1881
    %2133 = vmatpush.bf16.msra.mxu0 %v1880
    %2134 = vmatpush.bf16.msra.mxu0 %v1879
    %2135 = vmatpush.bf16.msra.mxu0 %v1878
    %2136 = vmatpush.bf16.msra.mxu0 %v1877
    %2137 = vmatpush.bf16.msra.mxu0 %v1876
    %2138 = vmatpush.bf16.msra.mxu0 %v1875
    %2139 = vmatmul.bf16.gmra.mxu0 %v1593
    %v2140 = vpop.f32.mrf.mxu0
    %v2141 = vadd.f32 %v2037, %v2140
    %v2142 = vpop.f32.mrf.mxu0
    %v2143 = vadd.f32 %v2039, %v2142
    %2144 = vmatmul.bf16.gmra.mxu0 %v1597
    %v2145 = vpop.f32.mrf.mxu0
    %v2146 = vadd.f32 %v2042, %v2145
    %v2147 = vpop.f32.mrf.mxu0
    %v2148 = vadd.f32 %v2044, %v2147
    %2149 = vmatmul.bf16.gmra.mxu0 %v1601
    %v2150 = vpop.f32.mrf.mxu0
    %v2151 = vadd.f32 %v2047, %v2150
    %v2152 = vpop.f32.mrf.mxu0
    %v2153 = vadd.f32 %v2049, %v2152
    %2154 = vmatmul.bf16.gmra.mxu0 %v1605
    %v2155 = vpop.f32.mrf.mxu0
    %v2156 = vadd.f32 %v2052, %v2155
    %v2157 = vpop.f32.mrf.mxu0
    %v2158 = vadd.f32 %v2054, %v2157
    %2159 = vmatmul.bf16.gmra.mxu0 %v1609
    %v2160 = vpop.f32.mrf.mxu0
    %v2161 = vadd.f32 %v2057, %v2160
    %v2162 = vpop.f32.mrf.mxu0
    %v2163 = vadd.f32 %v2059, %v2162
    %2164 = vmatmul.bf16.gmra.mxu0 %v1613
    %v2165 = vpop.f32.mrf.mxu0
    %v2166 = vadd.f32 %v2062, %v2165
    %v2167 = vpop.f32.mrf.mxu0
    %v2168 = vadd.f32 %v2064, %v2167
    %2169 = vmatmul.bf16.gmra.mxu0 %v1617
    %v2170 = vpop.f32.mrf.mxu0
    %v2171 = vadd.f32 %v2067, %v2170
    %v2172 = vpop.f32.mrf.mxu0
    %v2173 = vadd.f32 %v2069, %v2172
    %2174 = vmatmul.bf16.gmra.mxu0 %v1621
    %v2175 = vpop.f32.mrf.mxu0
    %v2176 = vadd.f32 %v2072, %v2175
    %v2177 = vpop.f32.mrf.mxu0
    %v2178 = vadd.f32 %v2074, %v2177
    %2179 = vmatmul.bf16.gmra.mxu0 %v1625
    %v2180 = vpop.f32.mrf.mxu0
    %v2181 = vadd.f32 %v2077, %v2180
    %v2182 = vpop.f32.mrf.mxu0
    %v2183 = vadd.f32 %v2079, %v2182
    %2184 = vmatmul.bf16.gmra.mxu0 %v1629
    %v2185 = vpop.f32.mrf.mxu0
    %v2186 = vadd.f32 %v2082, %v2185
    %v2187 = vpop.f32.mrf.mxu0
    %v2188 = vadd.f32 %v2084, %v2187
    %2189 = vmatmul.bf16.gmra.mxu0 %v1633
    %v2190 = vpop.f32.mrf.mxu0
    %v2191 = vadd.f32 %v2087, %v2190
    %v2192 = vpop.f32.mrf.mxu0
    %v2193 = vadd.f32 %v2089, %v2192
    %2194 = vmatmul.bf16.gmra.mxu0 %v1637
    %v2195 = vpop.f32.mrf.mxu0
    %v2196 = vadd.f32 %v2092, %v2195
    %v2197 = vpop.f32.mrf.mxu0
    %v2198 = vadd.f32 %v2094, %v2197
    %2199 = vmatmul.bf16.gmra.mxu0 %v1641
    %v2200 = vpop.f32.mrf.mxu0
    %v2201 = vadd.f32 %v2097, %v2200
    %v2202 = vpop.f32.mrf.mxu0
    %v2203 = vadd.f32 %v2099, %v2202
    %2204 = vmatmul.bf16.gmra.mxu0 %v1645
    %v2205 = vpop.f32.mrf.mxu0
    %v2206 = vadd.f32 %v2102, %v2205
    %v2207 = vpop.f32.mrf.mxu0
    %v2208 = vadd.f32 %v2104, %v2207
    %2209 = vmatmul.bf16.gmra.mxu0 %v1649
    %v2210 = vpop.f32.mrf.mxu0
    %v2211 = vadd.f32 %v2107, %v2210
    %v2212 = vpop.f32.mrf.mxu0
    %v2213 = vadd.f32 %v2109, %v2212
    %2214 = vmatmul.bf16.gmra.mxu0 %v1653
    %v2215 = vpop.f32.mrf.mxu0
    %v2216 = vadd.f32 %v2112, %v2215
    %v2217 = vpop.f32.mrf.mxu0
    %v2218 = vadd.f32 %v2114, %v2217
    %2219 = vmatmul.bf16.gmra.mxu0 %v1657
    %v2220 = vpop.f32.mrf.mxu0
    %v2221 = vadd.f32 %v2117, %v2220
    %v2222 = vpop.f32.mrf.mxu0
    %v2223 = vadd.f32 %v2119, %v2222
    %2224 = vmatmul.bf16.gmra.mxu0 %v1661
    %v2225 = vpop.f32.mrf.mxu0
    %v2226 = vadd.f32 %v2122, %v2225
    %v2227 = vpop.f32.mrf.mxu0
    %v2228 = vadd.f32 %v2124, %v2227
    %2229 = vmatmul.bf16.gmra.mxu0 %v1665
    %v2230 = vpop.f32.mrf.mxu0
    %v2231 = vadd.f32 %v2127, %v2230
    %v2232 = vpop.f32.mrf.mxu0
    %v2233 = vadd.f32 %v2129, %v2232
    %2234 = vdwg.mxu0
    %2235 = vmatpush.bf16.msra.mxu0 %v1890
    %2236 = vmatpush.bf16.msra.mxu0 %v1889
    %2237 = vmatpush.bf16.msra.mxu0 %v1888
    %2238 = vmatpush.bf16.msra.mxu0 %v1887
    %2239 = vmatpush.bf16.msra.mxu0 %v1886
    %2240 = vmatpush.bf16.msra.mxu0 %v1885
    %2241 = vmatpush.bf16.msra.mxu0 %v1884
    %2242 = vmatpush.bf16.msra.mxu0 %v1883
    %2243 = vmatmul.bf16.gmra.mxu0 %v1594
    %v2244 = vpop.f32.mrf.mxu0
    %v2245 = vadd.f32 %v2141, %v2244
    %v2246 = vpop.f32.mrf.mxu0
    %v2247 = vadd.f32 %v2143, %v2246
    %2248 = vmatmul.bf16.gmra.mxu0 %v1598
    %v2249 = vpop.f32.mrf.mxu0
    %v2250 = vadd.f32 %v2146, %v2249
    %v2251 = vpop.f32.mrf.mxu0
    %v2252 = vadd.f32 %v2148, %v2251
    %2253 = vmatmul.bf16.gmra.mxu0 %v1602
    %v2254 = vpop.f32.mrf.mxu0
    %v2255 = vadd.f32 %v2151, %v2254
    %v2256 = vpop.f32.mrf.mxu0
    %v2257 = vadd.f32 %v2153, %v2256
    %2258 = vmatmul.bf16.gmra.mxu0 %v1606
    %v2259 = vpop.f32.mrf.mxu0
    %v2260 = vadd.f32 %v2156, %v2259
    %v2261 = vpop.f32.mrf.mxu0
    %v2262 = vadd.f32 %v2158, %v2261
    %2263 = vmatmul.bf16.gmra.mxu0 %v1610
    %v2264 = vpop.f32.mrf.mxu0
    %v2265 = vadd.f32 %v2161, %v2264
    %v2266 = vpop.f32.mrf.mxu0
    %v2267 = vadd.f32 %v2163, %v2266
    %2268 = vmatmul.bf16.gmra.mxu0 %v1614
    %v2269 = vpop.f32.mrf.mxu0
    %v2270 = vadd.f32 %v2166, %v2269
    %v2271 = vpop.f32.mrf.mxu0
    %v2272 = vadd.f32 %v2168, %v2271
    %2273 = vmatmul.bf16.gmra.mxu0 %v1618
    %v2274 = vpop.f32.mrf.mxu0
    %v2275 = vadd.f32 %v2171, %v2274
    %v2276 = vpop.f32.mrf.mxu0
    %v2277 = vadd.f32 %v2173, %v2276
    %2278 = vmatmul.bf16.gmra.mxu0 %v1622
    %v2279 = vpop.f32.mrf.mxu0
    %v2280 = vadd.f32 %v2176, %v2279
    %v2281 = vpop.f32.mrf.mxu0
    %v2282 = vadd.f32 %v2178, %v2281
    %2283 = vmatmul.bf16.gmra.mxu0 %v1626
    %v2284 = vpop.f32.mrf.mxu0
    %v2285 = vadd.f32 %v2181, %v2284
    %v2286 = vpop.f32.mrf.mxu0
    %v2287 = vadd.f32 %v2183, %v2286
    %2288 = vmatmul.bf16.gmra.mxu0 %v1630
    %v2289 = vpop.f32.mrf.mxu0
    %v2290 = vadd.f32 %v2186, %v2289
    %v2291 = vpop.f32.mrf.mxu0
    %v2292 = vadd.f32 %v2188, %v2291
    %2293 = vmatmul.bf16.gmra.mxu0 %v1634
    %v2294 = vpop.f32.mrf.mxu0
    %v2295 = vadd.f32 %v2191, %v2294
    %v2296 = vpop.f32.mrf.mxu0
    %v2297 = vadd.f32 %v2193, %v2296
    %2298 = vmatmul.bf16.gmra.mxu0 %v1638
    %v2299 = vpop.f32.mrf.mxu0
    %v2300 = vadd.f32 %v2196, %v2299
    %v2301 = vpop.f32.mrf.mxu0
    %v2302 = vadd.f32 %v2198, %v2301
    %2303 = vmatmul.bf16.gmra.mxu0 %v1642
    %v2304 = vpop.f32.mrf.mxu0
    %v2305 = vadd.f32 %v2201, %v2304
    %v2306 = vpop.f32.mrf.mxu0
    %v2307 = vadd.f32 %v2203, %v2306
    %2308 = vmatmul.bf16.gmra.mxu0 %v1646
    %v2309 = vpop.f32.mrf.mxu0
    %v2310 = vadd.f32 %v2206, %v2309
    %v2311 = vpop.f32.mrf.mxu0
    %v2312 = vadd.f32 %v2208, %v2311
    %2313 = vmatmul.bf16.gmra.mxu0 %v1650
    %v2314 = vpop.f32.mrf.mxu0
    %v2315 = vadd.f32 %v2211, %v2314
    %v2316 = vpop.f32.mrf.mxu0
    %v2317 = vadd.f32 %v2213, %v2316
    %2318 = vmatmul.bf16.gmra.mxu0 %v1654
    %v2319 = vpop.f32.mrf.mxu0
    %v2320 = vadd.f32 %v2216, %v2319
    %v2321 = vpop.f32.mrf.mxu0
    %v2322 = vadd.f32 %v2218, %v2321
    %2323 = vmatmul.bf16.gmra.mxu0 %v1658
    %v2324 = vpop.f32.mrf.mxu0
    %v2325 = vadd.f32 %v2221, %v2324
    %v2326 = vpop.f32.mrf.mxu0
    %v2327 = vadd.f32 %v2223, %v2326
    %2328 = vmatmul.bf16.gmra.mxu0 %v1662
    %v2329 = vpop.f32.mrf.mxu0
    %v2330 = vadd.f32 %v2226, %v2329
    %v2331 = vpop.f32.mrf.mxu0
    %v2332 = vadd.f32 %v2228, %v2331
    %2333 = vmatmul.bf16.gmra.mxu0 %v1666
    %v2334 = vpop.f32.mrf.mxu0
    %v2335 = vadd.f32 %v2231, %v2334
    %v2336 = vpop.f32.mrf.mxu0
    %v2337 = vadd.f32 %v2233, %v2336
    %2338 = vdwg.mxu0
    %v2339 = vmax.f32 %v2245, 0.0
    %v2340 = vmax.f32 %v2247, 0.0
    %v2341 = vmax.f32 %v2250, 0.0
    %v2342 = vmax.f32 %v2252, 0.0
    %v2343 = vmax.f32 %v2255, 0.0
    %v2344 = vmax.f32 %v2257, 0.0
    %v2345 = vmax.f32 %v2260, 0.0
    %v2346 = vmax.f32 %v2262, 0.0
    %v2347 = vmax.f32 %v2265, 0.0
    %v2348 = vmax.f32 %v2267, 0.0
    %v2349 = vmax.f32 %v2270, 0.0
    %v2350 = vmax.f32 %v2272, 0.0
    %v2351 = vmax.f32 %v2275, 0.0
    %v2352 = vmax.f32 %v2277, 0.0
    %v2353 = vmax.f32 %v2280, 0.0
    %v2354 = vmax.f32 %v2282, 0.0
    %v2355 = vmax.f32 %v2285, 0.0
    %v2356 = vmax.f32 %v2287, 0.0
    %v2357 = vmax.f32 %v2290, 0.0
    %v2358 = vmax.f32 %v2292, 0.0
    %v2359 = vmax.f32 %v2295, 0.0
    %v2360 = vmax.f32 %v2297, 0.0
    %v2361 = vmax.f32 %v2300, 0.0
    %v2362 = vmax.f32 %v2302, 0.0
    %v2363 = vmax.f32 %v2305, 0.0
    %v2364 = vmax.f32 %v2307, 0.0
    %v2365 = vmax.f32 %v2310, 0.0
    %v2366 = vmax.f32 %v2312, 0.0
    %v2367 = vmax.f32 %v2315, 0.0
    %v2368 = vmax.f32 %v2317, 0.0
    %v2369 = vmax.f32 %v2320, 0.0
    %v2370 = vmax.f32 %v2322, 0.0
    %v2371 = vmax.f32 %v2325, 0.0
    %v2372 = vmax.f32 %v2327, 0.0
    %v2373 = vmax.f32 %v2330, 0.0
    %v2374 = vmax.f32 %v2332, 0.0
    %v2375 = vmax.f32 %v2335, 0.0
    %v2376 = vmax.f32 %v2337, 0.0
    %v2377 = vld [vmem:[%s8 + $0x5] ss:$0 sm:$0xff]
    %v2378 = vpack.c.bf16 %v2340, %v2339
    %v2379 = vpack.c.bf16 %v2342, %v2341
    %v2380 = vpack.c.bf16 %v2344, %v2343
    %v2381 = vpack.c.bf16 %v2346, %v2345
    %v2382 = vpack.c.bf16 %v2348, %v2347
    %v2383 = vpack.c.bf16 %v2350, %v2349
    %v2384 = vpack.c.bf16 %v2352, %v2351
    %v2385 = vpack.c.bf16 %v2354, %v2353
    %v2386 = vpack.c.bf16 %v2356, %v2355
    %v2387 = vpack.c.bf16 %v2358, %v2357
    %v2388 = vpack.c.bf16 %v2360, %v2359
    %v2389 = vpack.c.bf16 %v2362, %v2361
    %v2390 = vpack.c.bf16 %v2364, %v2363
    %v2391 = vpack.c.bf16 %v2366, %v2365
    %v2392 = vpack.c.bf16 %v2368, %v2367
    %v2393 = vpack.c.bf16 %v2370, %v2369
    %v2394 = vpack.c.bf16 %v2372, %v2371
    %v2395 = vpack.c.bf16 %v2374, %v2373
    %v2396 = vpack.c.bf16 %v2376, %v2375
    %v2397 = vld [vmem:[%s6] sm:$0xf]
    %v2398 = vld [vmem:[%s6 + $0x4] sm:$0xf]
    %v2399 = vld [vmem:[%s6 + $0x8] sm:$0xf]
    %v2400 = vld [vmem:[%s6 + $0xc] sm:$0xf]
    %v2401 = vld [vmem:[%s6 + $0x10] sm:$0xf]
    %v2402 = vld [vmem:[%s6 + $0x14] sm:$0xf]
    %v2403 = vld [vmem:[%s6 + $0x18] sm:$0xf]
    %v2404 = vld [vmem:[%s6 + $0x1c] sm:$0xf]
    %v2405 = vld [vmem:[%s6 + $0x20] sm:$0xf]
    %v2406 = vld [vmem:[%s6 + $0x24] sm:$0xf]
    %v2407 = vld [vmem:[%s6 + $0x28] sm:$0xf]
    %v2408 = vld [vmem:[%s6 + $0x2c] sm:$0xf]
    %v2409 = vld [vmem:[%s6 + $0x30] sm:$0xf]
    %v2410 = vld [vmem:[%s6 + $0x34] sm:$0xf]
    %v2411 = vld [vmem:[%s6 + $0x38] sm:$0xf]
    %v2412 = vld [vmem:[%s6 + $0x3c] sm:$0xf]
    %v2429 = vunpack.c.l.b16 %v2397
    %v2430 = vunpack.c.l.b16 %v2398
    %v2431 = vunpack.c.l.b16 %v2399
    %v2432 = vunpack.c.l.b16 %v2400
    %v2433 = vunpack.c.l.b16 %v2401
    %v2434 = vunpack.c.l.b16 %v2402
    %v2435 = vunpack.c.l.b16 %v2403
    %v2436 = vunpack.c.l.b16 %v2404
    %v2437 = vunpack.c.l.b16 %v2405
    %v2438 = vunpack.c.l.b16 %v2406
    %v2439 = vunpack.c.l.b16 %v2407
    %v2440 = vunpack.c.l.b16 %v2408
    %v2441 = vunpack.c.l.b16 %v2409
    %v2442 = vunpack.c.l.b16 %v2410
    %v2443 = vunpack.c.l.b16 %v2411
    %v2444 = vunpack.c.l.b16 %v2412
    %v2445 = vpack.c.b16 %v2430, %v2429
    %v2446 = vpack.c.b16 %v2432, %v2431
    %v2447 = vpack.c.b16 %v2434, %v2433
    %v2448 = vpack.c.b16 %v2436, %v2435
    %v2449 = vpack.c.b16 %v2438, %v2437
    %v2450 = vpack.c.b16 %v2440, %v2439
    %v2451 = vpack.c.b16 %v2442, %v2441
    %v2452 = vpack.c.b16 %v2444, %v2443
    %2461 = vmatpush.bf16.msra.mxu0 %v2452
    %2462 = vmatpush.bf16.msra.mxu0 %v2451
    %2463 = vmatpush.bf16.msra.mxu0 %v2450
    %2464 = vmatpush.bf16.msra.mxu0 %v2449
    %2465 = vmatpush.bf16.msra.mxu0 %v2448
    %2466 = vmatpush.bf16.msra.mxu0 %v2447
    %2467 = vmatpush.bf16.msra.mxu0 %v2446
    %2468 = vmatpush.bf16.msra.mxu0 %v2445
    %2469 = vmatmul.bf16.gmra.mxu0 %v2378
    %v2470 = vpop.f32.mrf.mxu0
    %v2471 = vadd.f32 %v2377, %v2470
    %v2472 = vpop.f32.mrf.mxu0
    %v2473 = vadd.f32 %v2377, %v2472
    %2474 = vmatmul.bf16.gmra.mxu0 %v2379
    %v2475 = vpop.f32.mrf.mxu0
    %v2476 = vadd.f32 %v2377, %v2475
    %v2477 = vpop.f32.mrf.mxu0
    %v2478 = vadd.f32 %v2377, %v2477
    %2479 = vmatmul.bf16.gmra.mxu0 %v2380
    %v2480 = vpop.f32.mrf.mxu0
    %v2481 = vadd.f32 %v2377, %v2480
    %v2482 = vpop.f32.mrf.mxu0
    %v2483 = vadd.f32 %v2377, %v2482
    %2484 = vmatmul.bf16.gmra.mxu0 %v2381
    %v2485 = vpop.f32.mrf.mxu0
    %v2486 = vadd.f32 %v2377, %v2485
    %v2487 = vpop.f32.mrf.mxu0
    %v2488 = vadd.f32 %v2377, %v2487
    %2489 = vmatmul.bf16.gmra.mxu0 %v2382
    %v2490 = vpop.f32.mrf.mxu0
    %v2491 = vadd.f32 %v2377, %v2490
    %v2492 = vpop.f32.mrf.mxu0
    %v2493 = vadd.f32 %v2377, %v2492
    %2494 = vmatmul.bf16.gmra.mxu0 %v2383
    %v2495 = vpop.f32.mrf.mxu0
    %v2496 = vadd.f32 %v2377, %v2495
    %v2497 = vpop.f32.mrf.mxu0
    %v2498 = vadd.f32 %v2377, %v2497
    %2499 = vmatmul.bf16.gmra.mxu0 %v2384
    %v2500 = vpop.f32.mrf.mxu0
    %v2501 = vadd.f32 %v2377, %v2500
    %v2502 = vpop.f32.mrf.mxu0
    %v2503 = vadd.f32 %v2377, %v2502
    %2504 = vmatmul.bf16.gmra.mxu0 %v2385
    %v2505 = vpop.f32.mrf.mxu0
    %v2506 = vadd.f32 %v2377, %v2505
    %v2507 = vpop.f32.mrf.mxu0
    %v2508 = vadd.f32 %v2377, %v2507
    %2509 = vmatmul.bf16.gmra.mxu0 %v2386
    %v2510 = vpop.f32.mrf.mxu0
    %v2511 = vadd.f32 %v2377, %v2510
    %v2512 = vpop.f32.mrf.mxu0
    %v2513 = vadd.f32 %v2377, %v2512
    %2514 = vmatmul.bf16.gmra.mxu0 %v2387
    %v2515 = vpop.f32.mrf.mxu0
    %v2516 = vadd.f32 %v2377, %v2515
    %v2517 = vpop.f32.mrf.mxu0
    %v2518 = vadd.f32 %v2377, %v2517
    %2519 = vmatmul.bf16.gmra.mxu0 %v2388
    %v2520 = vpop.f32.mrf.mxu0
    %v2521 = vadd.f32 %v2377, %v2520
    %v2522 = vpop.f32.mrf.mxu0
    %v2523 = vadd.f32 %v2377, %v2522
    %2524 = vmatmul.bf16.gmra.mxu0 %v2389
    %v2525 = vpop.f32.mrf.mxu0
    %v2526 = vadd.f32 %v2377, %v2525
    %v2527 = vpop.f32.mrf.mxu0
    %v2528 = vadd.f32 %v2377, %v2527
    %2529 = vmatmul.bf16.gmra.mxu0 %v2390
    %v2530 = vpop.f32.mrf.mxu0
    %v2531 = vadd.f32 %v2377, %v2530
    %v2532 = vpop.f32.mrf.mxu0
    %v2533 = vadd.f32 %v2377, %v2532
    %2534 = vmatmul.bf16.gmra.mxu0 %v2391
    %v2535 = vpop.f32.mrf.mxu0
    %v2536 = vadd.f32 %v2377, %v2535
    %v2537 = vpop.f32.mrf.mxu0
    %v2538 = vadd.f32 %v2377, %v2537
    %2539 = vmatmul.bf16.gmra.mxu0 %v2392
    %v2540 = vpop.f32.mrf.mxu0
    %v2541 = vadd.f32 %v2377, %v2540
    %v2542 = vpop.f32.mrf.mxu0
    %v2543 = vadd.f32 %v2377, %v2542
    %2544 = vmatmul.bf16.gmra.mxu0 %v2393
    %v2545 = vpop.f32.mrf.mxu0
    %v2546 = vadd.f32 %v2377, %v2545
    %v2547 = vpop.f32.mrf.mxu0
    %v2548 = vadd.f32 %v2377, %v2547
    %2549 = vmatmul.bf16.gmra.mxu0 %v2394
    %v2550 = vpop.f32.mrf.mxu0
    %v2551 = vadd.f32 %v2377, %v2550
    %v2552 = vpop.f32.mrf.mxu0
    %v2553 = vadd.f32 %v2377, %v2552
    %2554 = vmatmul.bf16.gmra.mxu0 %v2395
    %v2555 = vpop.f32.mrf.mxu0
    %v2556 = vadd.f32 %v2377, %v2555
    %v2557 = vpop.f32.mrf.mxu0
    %v2558 = vadd.f32 %v2377, %v2557
    %2559 = vmatmul.bf16.gmra.mxu0 %v2396
    %v2560 = vpop.f32.mrf.mxu0
    %v2561 = vadd.f32 %v2377, %v2560
    %v2562 = vpop.f32.mrf.mxu0
    %v2563 = vadd.f32 %v2377, %v2562
    %2564 = vdwg.mxu0
    %v2565 = vmax.f32 %v2471, 0.0
    %v2566 = vmax.f32 %v2473, 0.0
    %v2567 = vmax.f32 %v2476, 0.0
    %v2568 = vmax.f32 %v2478, 0.0
    %v2569 = vmax.f32 %v2481, 0.0
    %v2570 = vmax.f32 %v2483, 0.0
    %v2571 = vmax.f32 %v2486, 0.0
    %v2572 = vmax.f32 %v2488, 0.0
    %v2573 = vmax.f32 %v2491, 0.0
    %v2574 = vmax.f32 %v2493, 0.0
    %v2575 = vmax.f32 %v2496, 0.0
    %v2576 = vmax.f32 %v2498, 0.0
    %v2577 = vmax.f32 %v2501, 0.0
    %v2578 = vmax.f32 %v2503, 0.0
    %v2579 = vmax.f32 %v2506, 0.0
    %v2580 = vmax.f32 %v2508, 0.0
    %v2581 = vmax.f32 %v2511, 0.0
    %v2582 = vmax.f32 %v2513, 0.0
    %v2583 = vmax.f32 %v2516, 0.0
    %v2584 = vmax.f32 %v2518, 0.0
    %v2585 = vmax.f32 %v2521, 0.0
    %v2586 = vmax.f32 %v2523, 0.0
    %v2587 = vmax.f32 %v2526, 0.0
    %v2588 = vmax.f32 %v2528, 0.0
    %v2589 = vmax.f32 %v2531, 0.0
    %v2590 = vmax.f32 %v2533, 0.0
    %v2591 = vmax.f32 %v2536, 0.0
    %v2592 = vmax.f32 %v2538, 0.0
    %v2593 = vmax.f32 %v2541, 0.0
    %v2594 = vmax.f32 %v2543, 0.0
    %v2595 = vmax.f32 %v2546, 0.0
    %v2596 = vmax.f32 %v2548, 0.0
    %v2597 = vmax.f32 %v2551, 0.0
    %v2598 = vmax.f32 %v2553, 0.0
    %v2599 = vmax.f32 %v2556, 0.0
    %v2600 = vmax.f32 %v2558, 0.0
    %v2601 = vmax.f32 %v2561, 0.0
    %v2602 = vmax.f32 %v2563, 0.0
    %v2603 = vld [vmem:[%s8 + $0x6] ss:$0 sm:$0xff]
    %v2604 = vpack.c.bf16 %v2566, %v2565
    %v2605 = vpack.c.bf16 %v2568, %v2567
    %v2606 = vpack.c.bf16 %v2570, %v2569
    %v2607 = vpack.c.bf16 %v2572, %v2571
    %v2608 = vpack.c.bf16 %v2574, %v2573
    %v2609 = vpack.c.bf16 %v2576, %v2575
    %v2610 = vpack.c.bf16 %v2578, %v2577
    %v2611 = vpack.c.bf16 %v2580, %v2579
    %v2612 = vpack.c.bf16 %v2582, %v2581
    %v2613 = vpack.c.bf16 %v2584, %v2583
    %v2614 = vpack.c.bf16 %v2586, %v2585
    %v2615 = vpack.c.bf16 %v2588, %v2587
    %v2616 = vpack.c.bf16 %v2590, %v2589
    %v2617 = vpack.c.bf16 %v2592, %v2591
    %v2618 = vpack.c.bf16 %v2594, %v2593
    %v2619 = vpack.c.bf16 %v2596, %v2595
    %v2620 = vpack.c.bf16 %v2598, %v2597
    %v2621 = vpack.c.bf16 %v2600, %v2599
    %v2622 = vpack.c.bf16 %v2602, %v2601
    %v2623 = vld [vmem:[%s7] sm:$0xf]
    %v2624 = vld [vmem:[%s7 + $0x4] sm:$0xf]
    %v2625 = vld [vmem:[%s7 + $0x8] sm:$0xf]
    %v2626 = vld [vmem:[%s7 + $0xc] sm:$0xf]
    %v2627 = vld [vmem:[%s7 + $0x10] sm:$0xf]
    %v2628 = vld [vmem:[%s7 + $0x14] sm:$0xf]
    %v2629 = vld [vmem:[%s7 + $0x18] sm:$0xf]
    %v2630 = vld [vmem:[%s7 + $0x1c] sm:$0xf]
    %v2639 = vunpack.c.l.b16 %v2623
    %v2640 = vunpack.c.l.b16 %v2624
    %v2641 = vunpack.c.l.b16 %v2625
    %v2642 = vunpack.c.l.b16 %v2626
    %v2643 = vunpack.c.l.b16 %v2627
    %v2644 = vunpack.c.l.b16 %v2628
    %v2645 = vunpack.c.l.b16 %v2629
    %v2646 = vunpack.c.l.b16 %v2630
    %v2647 = vpack.c.b16 %v2640, %v2639
    %v2648 = vpack.c.b16 %v2642, %v2641
    %v2649 = vpack.c.b16 %v2644, %v2643
    %v2650 = vpack.c.b16 %v2646, %v2645
    %v2656 = vsel %vm600, %v2604, 0
    %v2659 = vsel %vm600, %v2605, 0
    %v2662 = vsel %vm600, %v2606, 0
    %v2665 = vsel %vm600, %v2607, 0
    %v2668 = vsel %vm600, %v2608, 0
    %v2671 = vsel %vm600, %v2609, 0
    %v2674 = vsel %vm600, %v2610, 0
    %v2677 = vsel %vm600, %v2611, 0
    %v2680 = vsel %vm600, %v2612, 0
    %v2683 = vsel %vm600, %v2613, 0
    %v2686 = vsel %vm600, %v2614, 0
    %v2689 = vsel %vm600, %v2615, 0
    %v2692 = vsel %vm600, %v2616, 0
    %v2695 = vsel %vm600, %v2617, 0
    %v2698 = vsel %vm600, %v2618, 0
    %v2701 = vsel %vm600, %v2619, 0
    %v2704 = vsel %vm600, %v2620, 0
    %v2707 = vsel %vm600, %v2621, 0
    %v2710 = vsel %vm600, %v2622, 0
    %2712 = vmatpush.bf16.msra.mxu0 0
    %2713 = vmatpush.bf16.msra.mxu0 0
    %2714 = vmatpush.bf16.msra.mxu0 0
    %2715 = vmatpush.bf16.msra.mxu0 0
    %2716 = vmatpush.bf16.msra.mxu0 %v2650
    %2717 = vmatpush.bf16.msra.mxu0 %v2649
    %2718 = vmatpush.bf16.msra.mxu0 %v2648
    %2719 = vmatpush.bf16.msra.mxu0 %v2647
    %2720 = vmatmul.bf16.gmra.mxu0 %v2656
    %v2721 = vpop.f32.mrf.mxu0
    %v2722 = vadd.f32 %v2603, %v2721
    %v2723 = vpop.f32.mrf.mxu0
    %v2724 = vadd.f32 %v2603, %v2723
    %2725 = vmatmul.bf16.gmra.mxu0 %v2659
    %v2726 = vpop.f32.mrf.mxu0
    %v2727 = vadd.f32 %v2603, %v2726
    %v2728 = vpop.f32.mrf.mxu0
    %v2729 = vadd.f32 %v2603, %v2728
    %2730 = vmatmul.bf16.gmra.mxu0 %v2662
    %v2731 = vpop.f32.mrf.mxu0
    %v2732 = vadd.f32 %v2603, %v2731
    %v2733 = vpop.f32.mrf.mxu0
    %v2734 = vadd.f32 %v2603, %v2733
    %2735 = vmatmul.bf16.gmra.mxu0 %v2665
    %v2736 = vpop.f32.mrf.mxu0
    %v2737 = vadd.f32 %v2603, %v2736
    %v2738 = vpop.f32.mrf.mxu0
    %v2739 = vadd.f32 %v2603, %v2738
    %2740 = vmatmul.bf16.gmra.mxu0 %v2668
    %v2741 = vpop.f32.mrf.mxu0
    %v2742 = vadd.f32 %v2603, %v2741
    %v2743 = vpop.f32.mrf.mxu0
    %v2744 = vadd.f32 %v2603, %v2743
    %2745 = vmatmul.bf16.gmra.mxu0 %v2671
    %v2746 = vpop.f32.mrf.mxu0
    %v2747 = vadd.f32 %v2603, %v2746
    %v2748 = vpop.f32.mrf.mxu0
    %v2749 = vadd.f32 %v2603, %v2748
    %2750 = vmatmul.bf16.gmra.mxu0 %v2674
    %v2751 = vpop.f32.mrf.mxu0
    %v2752 = vadd.f32 %v2603, %v2751
    %v2753 = vpop.f32.mrf.mxu0
    %v2754 = vadd.f32 %v2603, %v2753
    %2755 = vmatmul.bf16.gmra.mxu0 %v2677
    %v2756 = vpop.f32.mrf.mxu0
    %v2757 = vadd.f32 %v2603, %v2756
    %v2758 = vpop.f32.mrf.mxu0
    %v2759 = vadd.f32 %v2603, %v2758
    %2760 = vmatmul.bf16.gmra.mxu0 %v2680
    %v2761 = vpop.f32.mrf.mxu0
    %v2762 = vadd.f32 %v2603, %v2761
    %v2763 = vpop.f32.mrf.mxu0
    %v2764 = vadd.f32 %v2603, %v2763
    %2765 = vmatmul.bf16.gmra.mxu0 %v2683
    %v2766 = vpop.f32.mrf.mxu0
    %v2767 = vadd.f32 %v2603, %v2766
    %v2768 = vpop.f32.mrf.mxu0
    %v2769 = vadd.f32 %v2603, %v2768
    %2770 = vmatmul.bf16.gmra.mxu0 %v2686
    %v2771 = vpop.f32.mrf.mxu0
    %v2772 = vadd.f32 %v2603, %v2771
    %v2773 = vpop.f32.mrf.mxu0
    %v2774 = vadd.f32 %v2603, %v2773
    %2775 = vmatmul.bf16.gmra.mxu0 %v2689
    %v2776 = vpop.f32.mrf.mxu0
    %v2777 = vadd.f32 %v2603, %v2776
    %v2778 = vpop.f32.mrf.mxu0
    %v2779 = vadd.f32 %v2603, %v2778
    %2780 = vmatmul.bf16.gmra.mxu0 %v2692
    %v2781 = vpop.f32.mrf.mxu0
    %v2782 = vadd.f32 %v2603, %v2781
    %v2783 = vpop.f32.mrf.mxu0
    %v2784 = vadd.f32 %v2603, %v2783
    %2785 = vmatmul.bf16.gmra.mxu0 %v2695
    %v2786 = vpop.f32.mrf.mxu0
    %v2787 = vadd.f32 %v2603, %v2786
    %v2788 = vpop.f32.mrf.mxu0
    %v2789 = vadd.f32 %v2603, %v2788
    %2790 = vmatmul.bf16.gmra.mxu0 %v2698
    %v2791 = vpop.f32.mrf.mxu0
    %v2792 = vadd.f32 %v2603, %v2791
    %v2793 = vpop.f32.mrf.mxu0
    %v2794 = vadd.f32 %v2603, %v2793
    %2795 = vmatmul.bf16.gmra.mxu0 %v2701
    %v2796 = vpop.f32.mrf.mxu0
    %v2797 = vadd.f32 %v2603, %v2796
    %v2798 = vpop.f32.mrf.mxu0
    %v2799 = vadd.f32 %v2603, %v2798
    %2800 = vmatmul.bf16.gmra.mxu0 %v2704
    %v2801 = vpop.f32.mrf.mxu0
    %v2802 = vadd.f32 %v2603, %v2801
    %v2803 = vpop.f32.mrf.mxu0
    %v2804 = vadd.f32 %v2603, %v2803
    %2805 = vmatmul.bf16.gmra.mxu0 %v2707
    %v2806 = vpop.f32.mrf.mxu0
    %v2807 = vadd.f32 %v2603, %v2806
    %v2808 = vpop.f32.mrf.mxu0
    %v2809 = vadd.f32 %v2603, %v2808
    %2810 = vmatmul.bf16.gmra.mxu0 %v2710
    %v2811 = vpop.f32.mrf.mxu0
    %v2812 = vadd.f32 %v2603, %v2811
    %v2813 = vpop.f32.mrf.mxu0
    %v2814 = vadd.f32 %v2603, %v2813
    %2815 = vdwg.mxu0
    %2816 = vmax.xlane.f32.xlu0 %v2722
    %v2817 = vpop.xlane.xlu0 %2816
    %2818 = vmax.xlane.f32.xlu0 %v2724
    %v2819 = vpop.xlane.xlu0 %2818
    %2820 = vmax.xlane.f32.xlu0 %v2727
    %v2821 = vpop.xlane.xlu0 %2820
    %2822 = vmax.xlane.f32.xlu0 %v2729
    %v2823 = vpop.xlane.xlu0 %2822
    %2824 = vmax.xlane.f32.xlu0 %v2732
    %v2825 = vpop.xlane.xlu0 %2824
    %2826 = vmax.xlane.f32.xlu0 %v2734
    %v2827 = vpop.xlane.xlu0 %2826
    %2828 = vmax.xlane.f32.xlu0 %v2737
    %v2829 = vpop.xlane.xlu0 %2828
    %2830 = vmax.xlane.f32.xlu0 %v2739
    %v2831 = vpop.xlane.xlu0 %2830
    %2832 = vmax.xlane.f32.xlu0 %v2742
    %v2833 = vpop.xlane.xlu0 %2832
    %2834 = vmax.xlane.f32.xlu0 %v2744
    %v2835 = vpop.xlane.xlu0 %2834
    %2836 = vmax.xlane.f32.xlu0 %v2747
    %v2837 = vpop.xlane.xlu0 %2836
    %2838 = vmax.xlane.f32.xlu0 %v2749
    %v2839 = vpop.xlane.xlu0 %2838
    %2840 = vmax.xlane.f32.xlu0 %v2752
    %v2841 = vpop.xlane.xlu0 %2840
    %2842 = vmax.xlane.f32.xlu0 %v2754
    %v2843 = vpop.xlane.xlu0 %2842
    %2844 = vmax.xlane.f32.xlu0 %v2757
    %v2845 = vpop.xlane.xlu0 %2844
    %2846 = vmax.xlane.f32.xlu0 %v2759
    %v2847 = vpop.xlane.xlu0 %2846
    %2848 = vmax.xlane.f32.xlu0 %v2762
    %v2849 = vpop.xlane.xlu0 %2848
    %2850 = vmax.xlane.f32.xlu0 %v2764
    %v2851 = vpop.xlane.xlu0 %2850
    %2852 = vmax.xlane.f32.xlu0 %v2767
    %v2853 = vpop.xlane.xlu0 %2852
    %2854 = vmax.xlane.f32.xlu0 %v2769
    %v2855 = vpop.xlane.xlu0 %2854
    %2856 = vmax.xlane.f32.xlu0 %v2772
    %v2857 = vpop.xlane.xlu0 %2856
    %2858 = vmax.xlane.f32.xlu0 %v2774
    %v2859 = vpop.xlane.xlu0 %2858
    %2860 = vmax.xlane.f32.xlu0 %v2777
    %v2861 = vpop.xlane.xlu0 %2860
    %2862 = vmax.xlane.f32.xlu0 %v2779
    %v2863 = vpop.xlane.xlu0 %2862
    %2864 = vmax.xlane.f32.xlu0 %v2782
    %v2865 = vpop.xlane.xlu0 %2864
    %2866 = vmax.xlane.f32.xlu0 %v2784
    %v2867 = vpop.xlane.xlu0 %2866
    %2868 = vmax.xlane.f32.xlu0 %v2787
    %v2869 = vpop.xlane.xlu0 %2868
    %2870 = vmax.xlane.f32.xlu0 %v2789
    %v2871 = vpop.xlane.xlu0 %2870
    %2872 = vmax.xlane.f32.xlu0 %v2792
    %v2873 = vpop.xlane.xlu0 %2872
    %2874 = vmax.xlane.f32.xlu0 %v2794
    %v2875 = vpop.xlane.xlu0 %2874
    %2876 = vmax.xlane.f32.xlu0 %v2797
    %v2877 = vpop.xlane.xlu0 %2876
    %2878 = vmax.xlane.f32.xlu0 %v2799
    %v2879 = vpop.xlane.xlu0 %2878
    %2880 = vmax.xlane.f32.xlu0 %v2802
    %v2881 = vpop.xlane.xlu0 %2880
    %2882 = vmax.xlane.f32.xlu0 %v2804
    %v2883 = vpop.xlane.xlu0 %2882
    %2884 = vmax.xlane.f32.xlu0 %v2807
    %v2885 = vpop.xlane.xlu0 %2884
    %2886 = vmax.xlane.f32.xlu0 %v2809
    %v2887 = vpop.xlane.xlu0 %2886
    %2888 = vmax.xlane.f32.xlu0 %v2812
    %v2889 = vpop.xlane.xlu0 %2888
    %2890 = vmax.xlane.f32.xlu0 %v2814
    %v2891 = vpop.xlane.xlu0 %2890
    %v2892 = vsub.f32 %v2722, %v2817
    %v2893 = vsub.f32 %v2724, %v2819
    %v2894 = vsub.f32 %v2727, %v2821
    %v2895 = vsub.f32 %v2729, %v2823
    %v2896 = vsub.f32 %v2732, %v2825
    %v2897 = vsub.f32 %v2734, %v2827
    %v2898 = vsub.f32 %v2737, %v2829
    %v2899 = vsub.f32 %v2739, %v2831
    %v2900 = vsub.f32 %v2742, %v2833
    %v2901 = vsub.f32 %v2744, %v2835
    %v2902 = vsub.f32 %v2747, %v2837
    %v2903 = vsub.f32 %v2749, %v2839
    %v2904 = vsub.f32 %v2752, %v2841
    %v2905 = vsub.f32 %v2754, %v2843
    %v2906 = vsub.f32 %v2757, %v2845
    %v2907 = vsub.f32 %v2759, %v2847
    %v2908 = vsub.f32 %v2762, %v2849
    %v2909 = vsub.f32 %v2764, %v2851
    %v2910 = vsub.f32 %v2767, %v2853
    %v2911 = vsub.f32 %v2769, %v2855
    %v2912 = vsub.f32 %v2772, %v2857
    %v2913 = vsub.f32 %v2774, %v2859
    %v2914 = vsub.f32 %v2777, %v2861
    %v2915 = vsub.f32 %v2779, %v2863
    %v2916 = vsub.f32 %v2782, %v2865
    %v2917 = vsub.f32 %v2784, %v2867
    %v2918 = vsub.f32 %v2787, %v2869
    %v2919 = vsub.f32 %v2789, %v2871
    %v2920 = vsub.f32 %v2792, %v2873
    %v2921 = vsub.f32 %v2794, %v2875
    %v2922 = vsub.f32 %v2797, %v2877
    %v2923 = vsub.f32 %v2799, %v2879
    %v2924 = vsub.f32 %v2802, %v2881
    %v2925 = vsub.f32 %v2804, %v2883
    %v2926 = vsub.f32 %v2807, %v2885
    %v2927 = vsub.f32 %v2809, %v2887
    %v2928 = vsub.f32 %v2812, %v2889
    %v2929 = vsub.f32 %v2814, %v2891
    %v2930 = vmul.f32 %v2892, 1.442695
    %v2931 = vpow.pop %v2930
    %v2932 = vmul.f32 %v2893, 1.442695
    %v2933 = vpow.pop %v2932
    %v2934 = vmul.f32 %v2894, 1.442695
    %v2935 = vpow.pop %v2934
    %v2936 = vmul.f32 %v2895, 1.442695
    %v2937 = vpow.pop %v2936
    %v2938 = vmul.f32 %v2896, 1.442695
    %v2939 = vpow.pop %v2938
    %v2940 = vmul.f32 %v2897, 1.442695
    %v2941 = vpow.pop %v2940
    %v2942 = vmul.f32 %v2898, 1.442695
    %v2943 = vpow.pop %v2942
    %v2944 = vmul.f32 %v2899, 1.442695
    %v2945 = vpow.pop %v2944
    %v2946 = vmul.f32 %v2900, 1.442695
    %v2947 = vpow.pop %v2946
    %v2948 = vmul.f32 %v2901, 1.442695
    %v2949 = vpow.pop %v2948
    %v2950 = vmul.f32 %v2902, 1.442695
    %v2951 = vpow.pop %v2950
    %v2952 = vmul.f32 %v2903, 1.442695
    %v2953 = vpow.pop %v2952
    %v2954 = vmul.f32 %v2904, 1.442695
    %v2955 = vpow.pop %v2954
    %v2956 = vmul.f32 %v2905, 1.442695
    %v2957 = vpow.pop %v2956
    %v2958 = vmul.f32 %v2906, 1.442695
    %v2959 = vpow.pop %v2958
    %v2960 = vmul.f32 %v2907, 1.442695
    %v2961 = vpow.pop %v2960
    %v2962 = vmul.f32 %v2908, 1.442695
    %v2963 = vpow.pop %v2962
    %v2964 = vmul.f32 %v2909, 1.442695
    %v2965 = vpow.pop %v2964
    %v2966 = vmul.f32 %v2910, 1.442695
    %v2967 = vpow.pop %v2966
    %v2968 = vmul.f32 %v2911, 1.442695
    %v2969 = vpow.pop %v2968
    %v2970 = vmul.f32 %v2912, 1.442695
    %v2971 = vpow.pop %v2970
    %v2972 = vmul.f32 %v2913, 1.442695
    %v2973 = vpow.pop %v2972
    %v2974 = vmul.f32 %v2914, 1.442695
    %v2975 = vpow.pop %v2974
    %v2976 = vmul.f32 %v2915, 1.442695
    %v2977 = vpow.pop %v2976
    %v2978 = vmul.f32 %v2916, 1.442695
    %v2979 = vpow.pop %v2978
    %v2980 = vmul.f32 %v2917, 1.442695
    %v2981 = vpow.pop %v2980
    %v2982 = vmul.f32 %v2918, 1.442695
    %v2983 = vpow.pop %v2982
    %v2984 = vmul.f32 %v2919, 1.442695
    %v2985 = vpow.pop %v2984
    %v2986 = vmul.f32 %v2920, 1.442695
    %v2987 = vpow.pop %v2986
    %v2988 = vmul.f32 %v2921, 1.442695
    %v2989 = vpow.pop %v2988
    %v2990 = vmul.f32 %v2922, 1.442695
    %v2991 = vpow.pop %v2990
    %v2992 = vmul.f32 %v2923, 1.442695
    %v2993 = vpow.pop %v2992
    %v2994 = vmul.f32 %v2924, 1.442695
    %v2995 = vpow.pop %v2994
    %v2996 = vmul.f32 %v2925, 1.442695
    %v2997 = vpow.pop %v2996
    %v2998 = vmul.f32 %v2926, 1.442695
    %v2999 = vpow.pop %v2998
    %v3000 = vmul.f32 %v2927, 1.442695
    %v3001 = vpow.pop %v3000
    %v3002 = vmul.f32 %v2928, 1.442695
    %v3003 = vpow.pop %v3002
    %v3004 = vmul.f32 %v2929, 1.442695
    %v3005 = vpow.pop %v3004
    %3006 = vadd.xlane.f32.xlu0 %v2931
    %v3007 = vpop.xlane.xlu0 %3006
    %3008 = vadd.xlane.f32.xlu0 %v2933
    %v3009 = vpop.xlane.xlu0 %3008
    %3010 = vadd.xlane.f32.xlu0 %v2935
    %v3011 = vpop.xlane.xlu0 %3010
    %3012 = vadd.xlane.f32.xlu0 %v2937
    %v3013 = vpop.xlane.xlu0 %3012
    %3014 = vadd.xlane.f32.xlu0 %v2939
    %v3015 = vpop.xlane.xlu0 %3014
    %3016 = vadd.xlane.f32.xlu0 %v2941
    %v3017 = vpop.xlane.xlu0 %3016
    %3018 = vadd.xlane.f32.xlu0 %v2943
    %v3019 = vpop.xlane.xlu0 %3018
    %3020 = vadd.xlane.f32.xlu0 %v2945
    %v3021 = vpop.xlane.xlu0 %3020
    %3022 = vadd.xlane.f32.xlu0 %v2947
    %v3023 = vpop.xlane.xlu0 %3022
    %3024 = vadd.xlane.f32.xlu0 %v2949
    %v3025 = vpop.xlane.xlu0 %3024
    %3026 = vadd.xlane.f32.xlu0 %v2951
    %v3027 = vpop.xlane.xlu0 %3026
    %3028 = vadd.xlane.f32.xlu0 %v2953
    %v3029 = vpop.xlane.xlu0 %3028
    %3030 = vadd.xlane.f32.xlu0 %v2955
    %v3031 = vpop.xlane.xlu0 %3030
    %3032 = vadd.xlane.f32.xlu0 %v2957
    %v3033 = vpop.xlane.xlu0 %3032
    %3034 = vadd.xlane.f32.xlu0 %v2959
    %v3035 = vpop.xlane.xlu0 %3034
    %3036 = vadd.xlane.f32.xlu0 %v2961
    %v3037 = vpop.xlane.xlu0 %3036
    %3038 = vadd.xlane.f32.xlu0 %v2963
    %v3039 = vpop.xlane.xlu0 %3038
    %3040 = vadd.xlane.f32.xlu0 %v2965
    %v3041 = vpop.xlane.xlu0 %3040
    %3042 = vadd.xlane.f32.xlu0 %v2967
    %v3043 = vpop.xlane.xlu0 %3042
    %3044 = vadd.xlane.f32.xlu0 %v2969
    %v3045 = vpop.xlane.xlu0 %3044
    %3046 = vadd.xlane.f32.xlu0 %v2971
    %v3047 = vpop.xlane.xlu0 %3046
    %3048 = vadd.xlane.f32.xlu0 %v2973
    %v3049 = vpop.xlane.xlu0 %3048
    %3050 = vadd.xlane.f32.xlu0 %v2975
    %v3051 = vpop.xlane.xlu0 %3050
    %3052 = vadd.xlane.f32.xlu0 %v2977
    %v3053 = vpop.xlane.xlu0 %3052
    %3054 = vadd.xlane.f32.xlu0 %v2979
    %v3055 = vpop.xlane.xlu0 %3054
    %3056 = vadd.xlane.f32.xlu0 %v2981
    %v3057 = vpop.xlane.xlu0 %3056
    %3058 = vadd.xlane.f32.xlu0 %v2983
    %v3059 = vpop.xlane.xlu0 %3058
    %3060 = vadd.xlane.f32.xlu0 %v2985
    %v3061 = vpop.xlane.xlu0 %3060
    %3062 = vadd.xlane.f32.xlu0 %v2987
    %v3063 = vpop.xlane.xlu0 %3062
    %3064 = vadd.xlane.f32.xlu0 %v2989
    %v3065 = vpop.xlane.xlu0 %3064
    %3066 = vadd.xlane.f32.xlu0 %v2991
    %v3067 = vpop.xlane.xlu0 %3066
    %3068 = vadd.xlane.f32.xlu0 %v2993
    %v3069 = vpop.xlane.xlu0 %3068
    %3070 = vadd.xlane.f32.xlu0 %v2995
    %v3071 = vpop.xlane.xlu0 %3070
    %3072 = vadd.xlane.f32.xlu0 %v2997
    %v3073 = vpop.xlane.xlu0 %3072
    %3074 = vadd.xlane.f32.xlu0 %v2999
    %v3075 = vpop.xlane.xlu0 %3074
    %3076 = vadd.xlane.f32.xlu0 %v3001
    %v3077 = vpop.xlane.xlu0 %3076
    %3078 = vadd.xlane.f32.xlu0 %v3003
    %v3079 = vpop.xlane.xlu0 %3078
    %3080 = vadd.xlane.f32.xlu0 %v3005
    %v3081 = vpop.xlane.xlu0 %3080
    %v3082 = vrcp.pop %v3007
    %v3083 = vmul.f32 %v3007, %v3082
    %v3084 = vsub.f32 1.0, %v3083
    %v3085 = vmul.f32 %v3082, %v3084
    %v3086 = vadd.f32 %v3082, %v3085
    %vm3087 = vweird.f32 %v3007
    %vm3088 = vweird.f32 %v3082
    %vm3089 = vmor %vm3087, %vm3088
    %v3090 = vsel %vm3089, %v3082, %v3086
    %v3091 = vand.u32 2147483647, %v3007
    %vm3092 = vcmp.eq.f32.partialorder %v3091, 8.507059e+37
    %v3093 = vand.u32 %v3007, 2147483648
    %v3094 = vor.u32 1.1754944e-38, %v3093
    %v3095 = vsel %vm3092, %v3094, %v3090
    %v3096 = vrcp.pop %v3009
    %v3097 = vmul.f32 %v3009, %v3096
    %v3098 = vsub.f32 1.0, %v3097
    %v3099 = vmul.f32 %v3096, %v3098
    %v3100 = vadd.f32 %v3096, %v3099
    %vm3101 = vweird.f32 %v3009
    %vm3102 = vweird.f32 %v3096
    %vm3103 = vmor %vm3101, %vm3102
    %v3104 = vsel %vm3103, %v3096, %v3100
    %v3105 = vand.u32 2147483647, %v3009
    %vm3106 = vcmp.eq.f32.partialorder %v3105, 8.507059e+37
    %v3107 = vand.u32 %v3009, 2147483648
    %v3108 = vor.u32 1.1754944e-38, %v3107
    %v3109 = vsel %vm3106, %v3108, %v3104
    %v3110 = vrcp.pop %v3011
    %v3111 = vmul.f32 %v3011, %v3110
    %v3112 = vsub.f32 1.0, %v3111
    %v3113 = vmul.f32 %v3110, %v3112
    %v3114 = vadd.f32 %v3110, %v3113
    %vm3115 = vweird.f32 %v3011
    %vm3116 = vweird.f32 %v3110
    %vm3117 = vmor %vm3115, %vm3116
    %v3118 = vsel %vm3117, %v3110, %v3114
    %v3119 = vand.u32 2147483647, %v3011
    %vm3120 = vcmp.eq.f32.partialorder %v3119, 8.507059e+37
    %v3121 = vand.u32 %v3011, 2147483648
    %v3122 = vor.u32 1.1754944e-38, %v3121
    %v3123 = vsel %vm3120, %v3122, %v3118
    %v3124 = vrcp.pop %v3013
    %v3125 = vmul.f32 %v3013, %v3124
    %v3126 = vsub.f32 1.0, %v3125
    %v3127 = vmul.f32 %v3124, %v3126
    %v3128 = vadd.f32 %v3124, %v3127
    %vm3129 = vweird.f32 %v3013
    %vm3130 = vweird.f32 %v3124
    %vm3131 = vmor %vm3129, %vm3130
    %v3132 = vsel %vm3131, %v3124, %v3128
    %v3133 = vand.u32 2147483647, %v3013
    %vm3134 = vcmp.eq.f32.partialorder %v3133, 8.507059e+37
    %v3135 = vand.u32 %v3013, 2147483648
    %v3136 = vor.u32 1.1754944e-38, %v3135
    %v3137 = vsel %vm3134, %v3136, %v3132
    %v3138 = vrcp.pop %v3015
    %v3139 = vmul.f32 %v3015, %v3138
    %v3140 = vsub.f32 1.0, %v3139
    %v3141 = vmul.f32 %v3138, %v3140
    %v3142 = vadd.f32 %v3138, %v3141
    %vm3143 = vweird.f32 %v3015
    %vm3144 = vweird.f32 %v3138
    %vm3145 = vmor %vm3143, %vm3144
    %v3146 = vsel %vm3145, %v3138, %v3142
    %v3147 = vand.u32 2147483647, %v3015
    %vm3148 = vcmp.eq.f32.partialorder %v3147, 8.507059e+37
    %v3149 = vand.u32 %v3015, 2147483648
    %v3150 = vor.u32 1.1754944e-38, %v3149
    %v3151 = vsel %vm3148, %v3150, %v3146
    %v3152 = vrcp.pop %v3017
    %v3153 = vmul.f32 %v3017, %v3152
    %v3154 = vsub.f32 1.0, %v3153
    %v3155 = vmul.f32 %v3152, %v3154
    %v3156 = vadd.f32 %v3152, %v3155
    %vm3157 = vweird.f32 %v3017
    %vm3158 = vweird.f32 %v3152
    %vm3159 = vmor %vm3157, %vm3158
    %v3160 = vsel %vm3159, %v3152, %v3156
    %v3161 = vand.u32 2147483647, %v3017
    %vm3162 = vcmp.eq.f32.partialorder %v3161, 8.507059e+37
    %v3163 = vand.u32 %v3017, 2147483648
    %v3164 = vor.u32 1.1754944e-38, %v3163
    %v3165 = vsel %vm3162, %v3164, %v3160
    %v3166 = vrcp.pop %v3019
    %v3167 = vmul.f32 %v3019, %v3166
    %v3168 = vsub.f32 1.0, %v3167
    %v3169 = vmul.f32 %v3166, %v3168
    %v3170 = vadd.f32 %v3166, %v3169
    %vm3171 = vweird.f32 %v3019
    %vm3172 = vweird.f32 %v3166
    %vm3173 = vmor %vm3171, %vm3172
    %v3174 = vsel %vm3173, %v3166, %v3170
    %v3175 = vand.u32 2147483647, %v3019
    %vm3176 = vcmp.eq.f32.partialorder %v3175, 8.507059e+37
    %v3177 = vand.u32 %v3019, 2147483648
    %v3178 = vor.u32 1.1754944e-38, %v3177
    %v3179 = vsel %vm3176, %v3178, %v3174
    %v3180 = vrcp.pop %v3021
    %v3181 = vmul.f32 %v3021, %v3180
    %v3182 = vsub.f32 1.0, %v3181
    %v3183 = vmul.f32 %v3180, %v3182
    %v3184 = vadd.f32 %v3180, %v3183
    %vm3185 = vweird.f32 %v3021
    %vm3186 = vweird.f32 %v3180
    %vm3187 = vmor %vm3185, %vm3186
    %v3188 = vsel %vm3187, %v3180, %v3184
    %v3189 = vand.u32 2147483647, %v3021
    %vm3190 = vcmp.eq.f32.partialorder %v3189, 8.507059e+37
    %v3191 = vand.u32 %v3021, 2147483648
    %v3192 = vor.u32 1.1754944e-38, %v3191
    %v3193 = vsel %vm3190, %v3192, %v3188
    %v3194 = vrcp.pop %v3023
    %v3195 = vmul.f32 %v3023, %v3194
    %v3196 = vsub.f32 1.0, %v3195
    %v3197 = vmul.f32 %v3194, %v3196
    %v3198 = vadd.f32 %v3194, %v3197
    %vm3199 = vweird.f32 %v3023
    %vm3200 = vweird.f32 %v3194
    %vm3201 = vmor %vm3199, %vm3200
    %v3202 = vsel %vm3201, %v3194, %v3198
    %v3203 = vand.u32 2147483647, %v3023
    %vm3204 = vcmp.eq.f32.partialorder %v3203, 8.507059e+37
    %v3205 = vand.u32 %v3023, 2147483648
    %v3206 = vor.u32 1.1754944e-38, %v3205
    %v3207 = vsel %vm3204, %v3206, %v3202
    %v3208 = vrcp.pop %v3025
    %v3209 = vmul.f32 %v3025, %v3208
    %v3210 = vsub.f32 1.0, %v3209
    %v3211 = vmul.f32 %v3208, %v3210
    %v3212 = vadd.f32 %v3208, %v3211
    %vm3213 = vweird.f32 %v3025
    %vm3214 = vweird.f32 %v3208
    %vm3215 = vmor %vm3213, %vm3214
    %v3216 = vsel %vm3215, %v3208, %v3212
    %v3217 = vand.u32 2147483647, %v3025
    %vm3218 = vcmp.eq.f32.partialorder %v3217, 8.507059e+37
    %v3219 = vand.u32 %v3025, 2147483648
    %v3220 = vor.u32 1.1754944e-38, %v3219
    %v3221 = vsel %vm3218, %v3220, %v3216
    %v3222 = vrcp.pop %v3027
    %v3223 = vmul.f32 %v3027, %v3222
    %v3224 = vsub.f32 1.0, %v3223
    %v3225 = vmul.f32 %v3222, %v3224
    %v3226 = vadd.f32 %v3222, %v3225
    %vm3227 = vweird.f32 %v3027
    %vm3228 = vweird.f32 %v3222
    %vm3229 = vmor %vm3227, %vm3228
    %v3230 = vsel %vm3229, %v3222, %v3226
    %v3231 = vand.u32 2147483647, %v3027
    %vm3232 = vcmp.eq.f32.partialorder %v3231, 8.507059e+37
    %v3233 = vand.u32 %v3027, 2147483648
    %v3234 = vor.u32 1.1754944e-38, %v3233
    %v3235 = vsel %vm3232, %v3234, %v3230
    %v3236 = vrcp.pop %v3029
    %v3237 = vmul.f32 %v3029, %v3236
    %v3238 = vsub.f32 1.0, %v3237
    %v3239 = vmul.f32 %v3236, %v3238
    %v3240 = vadd.f32 %v3236, %v3239
    %vm3241 = vweird.f32 %v3029
    %vm3242 = vweird.f32 %v3236
    %vm3243 = vmor %vm3241, %vm3242
    %v3244 = vsel %vm3243, %v3236, %v3240
    %v3245 = vand.u32 2147483647, %v3029
    %vm3246 = vcmp.eq.f32.partialorder %v3245, 8.507059e+37
    %v3247 = vand.u32 %v3029, 2147483648
    %v3248 = vor.u32 1.1754944e-38, %v3247
    %v3249 = vsel %vm3246, %v3248, %v3244
    %v3250 = vrcp.pop %v3031
    %v3251 = vmul.f32 %v3031, %v3250
    %v3252 = vsub.f32 1.0, %v3251
    %v3253 = vmul.f32 %v3250, %v3252
    %v3254 = vadd.f32 %v3250, %v3253
    %vm3255 = vweird.f32 %v3031
    %vm3256 = vweird.f32 %v3250
    %vm3257 = vmor %vm3255, %vm3256
    %v3258 = vsel %vm3257, %v3250, %v3254
    %v3259 = vand.u32 2147483647, %v3031
    %vm3260 = vcmp.eq.f32.partialorder %v3259, 8.507059e+37
    %v3261 = vand.u32 %v3031, 2147483648
    %v3262 = vor.u32 1.1754944e-38, %v3261
    %v3263 = vsel %vm3260, %v3262, %v3258
    %v3264 = vrcp.pop %v3033
    %v3265 = vmul.f32 %v3033, %v3264
    %v3266 = vsub.f32 1.0, %v3265
    %v3267 = vmul.f32 %v3264, %v3266
    %v3268 = vadd.f32 %v3264, %v3267
    %vm3269 = vweird.f32 %v3033
    %vm3270 = vweird.f32 %v3264
    %vm3271 = vmor %vm3269, %vm3270
    %v3272 = vsel %vm3271, %v3264, %v3268
    %v3273 = vand.u32 2147483647, %v3033
    %vm3274 = vcmp.eq.f32.partialorder %v3273, 8.507059e+37
    %v3275 = vand.u32 %v3033, 2147483648
    %v3276 = vor.u32 1.1754944e-38, %v3275
    %v3277 = vsel %vm3274, %v3276, %v3272
    %v3278 = vrcp.pop %v3035
    %v3279 = vmul.f32 %v3035, %v3278
    %v3280 = vsub.f32 1.0, %v3279
    %v3281 = vmul.f32 %v3278, %v3280
    %v3282 = vadd.f32 %v3278, %v3281
    %vm3283 = vweird.f32 %v3035
    %vm3284 = vweird.f32 %v3278
    %vm3285 = vmor %vm3283, %vm3284
    %v3286 = vsel %vm3285, %v3278, %v3282
    %v3287 = vand.u32 2147483647, %v3035
    %vm3288 = vcmp.eq.f32.partialorder %v3287, 8.507059e+37
    %v3289 = vand.u32 %v3035, 2147483648
    %v3290 = vor.u32 1.1754944e-38, %v3289
    %v3291 = vsel %vm3288, %v3290, %v3286
    %v3292 = vrcp.pop %v3037
    %v3293 = vmul.f32 %v3037, %v3292
    %v3294 = vsub.f32 1.0, %v3293
    %v3295 = vmul.f32 %v3292, %v3294
    %v3296 = vadd.f32 %v3292, %v3295
    %vm3297 = vweird.f32 %v3037
    %vm3298 = vweird.f32 %v3292
    %vm3299 = vmor %vm3297, %vm3298
    %v3300 = vsel %vm3299, %v3292, %v3296
    %v3301 = vand.u32 2147483647, %v3037
    %vm3302 = vcmp.eq.f32.partialorder %v3301, 8.507059e+37
    %v3303 = vand.u32 %v3037, 2147483648
    %v3304 = vor.u32 1.1754944e-38, %v3303
    %v3305 = vsel %vm3302, %v3304, %v3300
    %v3306 = vrcp.pop %v3039
    %v3307 = vmul.f32 %v3039, %v3306
    %v3308 = vsub.f32 1.0, %v3307
    %v3309 = vmul.f32 %v3306, %v3308
    %v3310 = vadd.f32 %v3306, %v3309
    %vm3311 = vweird.f32 %v3039
    %vm3312 = vweird.f32 %v3306
    %vm3313 = vmor %vm3311, %vm3312
    %v3314 = vsel %vm3313, %v3306, %v3310
    %v3315 = vand.u32 2147483647, %v3039
    %vm3316 = vcmp.eq.f32.partialorder %v3315, 8.507059e+37
    %v3317 = vand.u32 %v3039, 2147483648
    %v3318 = vor.u32 1.1754944e-38, %v3317
    %v3319 = vsel %vm3316, %v3318, %v3314
    %v3320 = vrcp.pop %v3041
    %v3321 = vmul.f32 %v3041, %v3320
    %v3322 = vsub.f32 1.0, %v3321
    %v3323 = vmul.f32 %v3320, %v3322
    %v3324 = vadd.f32 %v3320, %v3323
    %vm3325 = vweird.f32 %v3041
    %vm3326 = vweird.f32 %v3320
    %vm3327 = vmor %vm3325, %vm3326
    %v3328 = vsel %vm3327, %v3320, %v3324
    %v3329 = vand.u32 2147483647, %v3041
    %vm3330 = vcmp.eq.f32.partialorder %v3329, 8.507059e+37
    %v3331 = vand.u32 %v3041, 2147483648
    %v3332 = vor.u32 1.1754944e-38, %v3331
    %v3333 = vsel %vm3330, %v3332, %v3328
    %v3334 = vrcp.pop %v3043
    %v3335 = vmul.f32 %v3043, %v3334
    %v3336 = vsub.f32 1.0, %v3335
    %v3337 = vmul.f32 %v3334, %v3336
    %v3338 = vadd.f32 %v3334, %v3337
    %vm3339 = vweird.f32 %v3043
    %vm3340 = vweird.f32 %v3334
    %vm3341 = vmor %vm3339, %vm3340
    %v3342 = vsel %vm3341, %v3334, %v3338
    %v3343 = vand.u32 2147483647, %v3043
    %vm3344 = vcmp.eq.f32.partialorder %v3343, 8.507059e+37
    %v3345 = vand.u32 %v3043, 2147483648
    %v3346 = vor.u32 1.1754944e-38, %v3345
    %v3347 = vsel %vm3344, %v3346, %v3342
    %v3348 = vrcp.pop %v3045
    %v3349 = vmul.f32 %v3045, %v3348
    %v3350 = vsub.f32 1.0, %v3349
    %v3351 = vmul.f32 %v3348, %v3350
    %v3352 = vadd.f32 %v3348, %v3351
    %vm3353 = vweird.f32 %v3045
    %vm3354 = vweird.f32 %v3348
    %vm3355 = vmor %vm3353, %vm3354
    %v3356 = vsel %vm3355, %v3348, %v3352
    %v3357 = vand.u32 2147483647, %v3045
    %vm3358 = vcmp.eq.f32.partialorder %v3357, 8.507059e+37
    %v3359 = vand.u32 %v3045, 2147483648
    %v3360 = vor.u32 1.1754944e-38, %v3359
    %v3361 = vsel %vm3358, %v3360, %v3356
    %v3362 = vrcp.pop %v3047
    %v3363 = vmul.f32 %v3047, %v3362
    %v3364 = vsub.f32 1.0, %v3363
    %v3365 = vmul.f32 %v3362, %v3364
    %v3366 = vadd.f32 %v3362, %v3365
    %vm3367 = vweird.f32 %v3047
    %vm3368 = vweird.f32 %v3362
    %vm3369 = vmor %vm3367, %vm3368
    %v3370 = vsel %vm3369, %v3362, %v3366
    %v3371 = vand.u32 2147483647, %v3047
    %vm3372 = vcmp.eq.f32.partialorder %v3371, 8.507059e+37
    %v3373 = vand.u32 %v3047, 2147483648
    %v3374 = vor.u32 1.1754944e-38, %v3373
    %v3375 = vsel %vm3372, %v3374, %v3370
    %v3376 = vrcp.pop %v3049
    %v3377 = vmul.f32 %v3049, %v3376
    %v3378 = vsub.f32 1.0, %v3377
    %v3379 = vmul.f32 %v3376, %v3378
    %v3380 = vadd.f32 %v3376, %v3379
    %vm3381 = vweird.f32 %v3049
    %vm3382 = vweird.f32 %v3376
    %vm3383 = vmor %vm3381, %vm3382
    %v3384 = vsel %vm3383, %v3376, %v3380
    %v3385 = vand.u32 2147483647, %v3049
    %vm3386 = vcmp.eq.f32.partialorder %v3385, 8.507059e+37
    %v3387 = vand.u32 %v3049, 2147483648
    %v3388 = vor.u32 1.1754944e-38, %v3387
    %v3389 = vsel %vm3386, %v3388, %v3384
    %v3390 = vrcp.pop %v3051
    %v3391 = vmul.f32 %v3051, %v3390
    %v3392 = vsub.f32 1.0, %v3391
    %v3393 = vmul.f32 %v3390, %v3392
    %v3394 = vadd.f32 %v3390, %v3393
    %vm3395 = vweird.f32 %v3051
    %vm3396 = vweird.f32 %v3390
    %vm3397 = vmor %vm3395, %vm3396
    %v3398 = vsel %vm3397, %v3390, %v3394
    %v3399 = vand.u32 2147483647, %v3051
    %vm3400 = vcmp.eq.f32.partialorder %v3399, 8.507059e+37
    %v3401 = vand.u32 %v3051, 2147483648
    %v3402 = vor.u32 1.1754944e-38, %v3401
    %v3403 = vsel %vm3400, %v3402, %v3398
    %v3404 = vrcp.pop %v3053
    %v3405 = vmul.f32 %v3053, %v3404
    %v3406 = vsub.f32 1.0, %v3405
    %v3407 = vmul.f32 %v3404, %v3406
    %v3408 = vadd.f32 %v3404, %v3407
    %vm3409 = vweird.f32 %v3053
    %vm3410 = vweird.f32 %v3404
    %vm3411 = vmor %vm3409, %vm3410
    %v3412 = vsel %vm3411, %v3404, %v3408
    %v3413 = vand.u32 2147483647, %v3053
    %vm3414 = vcmp.eq.f32.partialorder %v3413, 8.507059e+37
    %v3415 = vand.u32 %v3053, 2147483648
    %v3416 = vor.u32 1.1754944e-38, %v3415
    %v3417 = vsel %vm3414, %v3416, %v3412
    %v3418 = vrcp.pop %v3055
    %v3419 = vmul.f32 %v3055, %v3418
    %v3420 = vsub.f32 1.0, %v3419
    %v3421 = vmul.f32 %v3418, %v3420
    %v3422 = vadd.f32 %v3418, %v3421
    %vm3423 = vweird.f32 %v3055
    %vm3424 = vweird.f32 %v3418
    %vm3425 = vmor %vm3423, %vm3424
    %v3426 = vsel %vm3425, %v3418, %v3422
    %v3427 = vand.u32 2147483647, %v3055
    %vm3428 = vcmp.eq.f32.partialorder %v3427, 8.507059e+37
    %v3429 = vand.u32 %v3055, 2147483648
    %v3430 = vor.u32 1.1754944e-38, %v3429
    %v3431 = vsel %vm3428, %v3430, %v3426
    %v3432 = vrcp.pop %v3057
    %v3433 = vmul.f32 %v3057, %v3432
    %v3434 = vsub.f32 1.0, %v3433
    %v3435 = vmul.f32 %v3432, %v3434
    %v3436 = vadd.f32 %v3432, %v3435
    %vm3437 = vweird.f32 %v3057
    %vm3438 = vweird.f32 %v3432
    %vm3439 = vmor %vm3437, %vm3438
    %v3440 = vsel %vm3439, %v3432, %v3436
    %v3441 = vand.u32 2147483647, %v3057
    %vm3442 = vcmp.eq.f32.partialorder %v3441, 8.507059e+37
    %v3443 = vand.u32 %v3057, 2147483648
    %v3444 = vor.u32 1.1754944e-38, %v3443
    %v3445 = vsel %vm3442, %v3444, %v3440
    %v3446 = vrcp.pop %v3059
    %v3447 = vmul.f32 %v3059, %v3446
    %v3448 = vsub.f32 1.0, %v3447
    %v3449 = vmul.f32 %v3446, %v3448
    %v3450 = vadd.f32 %v3446, %v3449
    %vm3451 = vweird.f32 %v3059
    %vm3452 = vweird.f32 %v3446
    %vm3453 = vmor %vm3451, %vm3452
    %v3454 = vsel %vm3453, %v3446, %v3450
    %v3455 = vand.u32 2147483647, %v3059
    %vm3456 = vcmp.eq.f32.partialorder %v3455, 8.507059e+37
    %v3457 = vand.u32 %v3059, 2147483648
    %v3458 = vor.u32 1.1754944e-38, %v3457
    %v3459 = vsel %vm3456, %v3458, %v3454
    %v3460 = vrcp.pop %v3061
    %v3461 = vmul.f32 %v3061, %v3460
    %v3462 = vsub.f32 1.0, %v3461
    %v3463 = vmul.f32 %v3460, %v3462
    %v3464 = vadd.f32 %v3460, %v3463
    %vm3465 = vweird.f32 %v3061
    %vm3466 = vweird.f32 %v3460
    %vm3467 = vmor %vm3465, %vm3466
    %v3468 = vsel %vm3467, %v3460, %v3464
    %v3469 = vand.u32 2147483647, %v3061
    %vm3470 = vcmp.eq.f32.partialorder %v3469, 8.507059e+37
    %v3471 = vand.u32 %v3061, 2147483648
    %v3472 = vor.u32 1.1754944e-38, %v3471
    %v3473 = vsel %vm3470, %v3472, %v3468
    %v3474 = vrcp.pop %v3063
    %v3475 = vmul.f32 %v3063, %v3474
    %v3476 = vsub.f32 1.0, %v3475
    %v3477 = vmul.f32 %v3474, %v3476
    %v3478 = vadd.f32 %v3474, %v3477
    %vm3479 = vweird.f32 %v3063
    %vm3480 = vweird.f32 %v3474
    %vm3481 = vmor %vm3479, %vm3480
    %v3482 = vsel %vm3481, %v3474, %v3478
    %v3483 = vand.u32 2147483647, %v3063
    %vm3484 = vcmp.eq.f32.partialorder %v3483, 8.507059e+37
    %v3485 = vand.u32 %v3063, 2147483648
    %v3486 = vor.u32 1.1754944e-38, %v3485
    %v3487 = vsel %vm3484, %v3486, %v3482
    %v3488 = vrcp.pop %v3065
    %v3489 = vmul.f32 %v3065, %v3488
    %v3490 = vsub.f32 1.0, %v3489
    %v3491 = vmul.f32 %v3488, %v3490
    %v3492 = vadd.f32 %v3488, %v3491
    %vm3493 = vweird.f32 %v3065
    %vm3494 = vweird.f32 %v3488
    %vm3495 = vmor %vm3493, %vm3494
    %v3496 = vsel %vm3495, %v3488, %v3492
    %v3497 = vand.u32 2147483647, %v3065
    %vm3498 = vcmp.eq.f32.partialorder %v3497, 8.507059e+37
    %v3499 = vand.u32 %v3065, 2147483648
    %v3500 = vor.u32 1.1754944e-38, %v3499
    %v3501 = vsel %vm3498, %v3500, %v3496
    %v3502 = vrcp.pop %v3067
    %v3503 = vmul.f32 %v3067, %v3502
    %v3504 = vsub.f32 1.0, %v3503
    %v3505 = vmul.f32 %v3502, %v3504
    %v3506 = vadd.f32 %v3502, %v3505
    %vm3507 = vweird.f32 %v3067
    %vm3508 = vweird.f32 %v3502
    %vm3509 = vmor %vm3507, %vm3508
    %v3510 = vsel %vm3509, %v3502, %v3506
    %v3511 = vand.u32 2147483647, %v3067
    %vm3512 = vcmp.eq.f32.partialorder %v3511, 8.507059e+37
    %v3513 = vand.u32 %v3067, 2147483648
    %v3514 = vor.u32 1.1754944e-38, %v3513
    %v3515 = vsel %vm3512, %v3514, %v3510
    %v3516 = vrcp.pop %v3069
    %v3517 = vmul.f32 %v3069, %v3516
    %v3518 = vsub.f32 1.0, %v3517
    %v3519 = vmul.f32 %v3516, %v3518
    %v3520 = vadd.f32 %v3516, %v3519
    %vm3521 = vweird.f32 %v3069
    %vm3522 = vweird.f32 %v3516
    %vm3523 = vmor %vm3521, %vm3522
    %v3524 = vsel %vm3523, %v3516, %v3520
    %v3525 = vand.u32 2147483647, %v3069
    %vm3526 = vcmp.eq.f32.partialorder %v3525, 8.507059e+37
    %v3527 = vand.u32 %v3069, 2147483648
    %v3528 = vor.u32 1.1754944e-38, %v3527
    %v3529 = vsel %vm3526, %v3528, %v3524
    %v3530 = vrcp.pop %v3071
    %v3531 = vmul.f32 %v3071, %v3530
    %v3532 = vsub.f32 1.0, %v3531
    %v3533 = vmul.f32 %v3530, %v3532
    %v3534 = vadd.f32 %v3530, %v3533
    %vm3535 = vweird.f32 %v3071
    %vm3536 = vweird.f32 %v3530
    %vm3537 = vmor %vm3535, %vm3536
    %v3538 = vsel %vm3537, %v3530, %v3534
    %v3539 = vand.u32 2147483647, %v3071
    %vm3540 = vcmp.eq.f32.partialorder %v3539, 8.507059e+37
    %v3541 = vand.u32 %v3071, 2147483648
    %v3542 = vor.u32 1.1754944e-38, %v3541
    %v3543 = vsel %vm3540, %v3542, %v3538
    %v3544 = vrcp.pop %v3073
    %v3545 = vmul.f32 %v3073, %v3544
    %v3546 = vsub.f32 1.0, %v3545
    %v3547 = vmul.f32 %v3544, %v3546
    %v3548 = vadd.f32 %v3544, %v3547
    %vm3549 = vweird.f32 %v3073
    %vm3550 = vweird.f32 %v3544
    %vm3551 = vmor %vm3549, %vm3550
    %v3552 = vsel %vm3551, %v3544, %v3548
    %v3553 = vand.u32 2147483647, %v3073
    %vm3554 = vcmp.eq.f32.partialorder %v3553, 8.507059e+37
    %v3555 = vand.u32 %v3073, 2147483648
    %v3556 = vor.u32 1.1754944e-38, %v3555
    %v3557 = vsel %vm3554, %v3556, %v3552
    %v3558 = vrcp.pop %v3075
    %v3559 = vmul.f32 %v3075, %v3558
    %v3560 = vsub.f32 1.0, %v3559
    %v3561 = vmul.f32 %v3558, %v3560
    %v3562 = vadd.f32 %v3558, %v3561
    %vm3563 = vweird.f32 %v3075
    %vm3564 = vweird.f32 %v3558
    %vm3565 = vmor %vm3563, %vm3564
    %v3566 = vsel %vm3565, %v3558, %v3562
    %v3567 = vand.u32 2147483647, %v3075
    %vm3568 = vcmp.eq.f32.partialorder %v3567, 8.507059e+37
    %v3569 = vand.u32 %v3075, 2147483648
    %v3570 = vor.u32 1.1754944e-38, %v3569
    %v3571 = vsel %vm3568, %v3570, %v3566
    %v3572 = vrcp.pop %v3077
    %v3573 = vmul.f32 %v3077, %v3572
    %v3574 = vsub.f32 1.0, %v3573
    %v3575 = vmul.f32 %v3572, %v3574
    %v3576 = vadd.f32 %v3572, %v3575
    %vm3577 = vweird.f32 %v3077
    %vm3578 = vweird.f32 %v3572
    %vm3579 = vmor %vm3577, %vm3578
    %v3580 = vsel %vm3579, %v3572, %v3576
    %v3581 = vand.u32 2147483647, %v3077
    %vm3582 = vcmp.eq.f32.partialorder %v3581, 8.507059e+37
    %v3583 = vand.u32 %v3077, 2147483648
    %v3584 = vor.u32 1.1754944e-38, %v3583
    %v3585 = vsel %vm3582, %v3584, %v3580
    %v3586 = vrcp.pop %v3079
    %v3587 = vmul.f32 %v3079, %v3586
    %v3588 = vsub.f32 1.0, %v3587
    %v3589 = vmul.f32 %v3586, %v3588
    %v3590 = vadd.f32 %v3586, %v3589
    %vm3591 = vweird.f32 %v3079
    %vm3592 = vweird.f32 %v3586
    %vm3593 = vmor %vm3591, %vm3592
    %v3594 = vsel %vm3593, %v3586, %v3590
    %v3595 = vand.u32 2147483647, %v3079
    %vm3596 = vcmp.eq.f32.partialorder %v3595, 8.507059e+37
    %v3597 = vand.u32 %v3079, 2147483648
    %v3598 = vor.u32 1.1754944e-38, %v3597
    %v3599 = vsel %vm3596, %v3598, %v3594
    %v3600 = vrcp.pop %v3081
    %v3601 = vmul.f32 %v3081, %v3600
    %v3602 = vsub.f32 1.0, %v3601
    %v3603 = vmul.f32 %v3600, %v3602
    %v3604 = vadd.f32 %v3600, %v3603
    %vm3605 = vweird.f32 %v3081
    %vm3606 = vweird.f32 %v3600
    %vm3607 = vmor %vm3605, %vm3606
    %v3608 = vsel %vm3607, %v3600, %v3604
    %v3609 = vand.u32 2147483647, %v3081
    %vm3610 = vcmp.eq.f32.partialorder %v3609, 8.507059e+37
    %v3611 = vand.u32 %v3081, 2147483648
    %v3612 = vor.u32 1.1754944e-38, %v3611
    %v3613 = vsel %vm3610, %v3612, %v3608
    %v3614 = vmul.f32 %v2931, %v3095
    %v3615 = vmul.f32 %v2933, %v3109
    %v3616 = vmul.f32 %v2935, %v3123
    %v3617 = vmul.f32 %v2937, %v3137
    %v3618 = vmul.f32 %v2939, %v3151
    %v3619 = vmul.f32 %v2941, %v3165
    %v3620 = vmul.f32 %v2943, %v3179
    %v3621 = vmul.f32 %v2945, %v3193
    %v3622 = vmul.f32 %v2947, %v3207
    %v3623 = vmul.f32 %v2949, %v3221
    %v3624 = vmul.f32 %v2951, %v3235
    %v3625 = vmul.f32 %v2953, %v3249
    %v3626 = vmul.f32 %v2955, %v3263
    %v3627 = vmul.f32 %v2957, %v3277
    %v3628 = vmul.f32 %v2959, %v3291
    %v3629 = vmul.f32 %v2961, %v3305
    %v3630 = vmul.f32 %v2963, %v3319
    %v3631 = vmul.f32 %v2965, %v3333
    %v3632 = vmul.f32 %v2967, %v3347
    %v3633 = vmul.f32 %v2969, %v3361
    %v3634 = vmul.f32 %v2971, %v3375
    %v3635 = vmul.f32 %v2973, %v3389
    %v3636 = vmul.f32 %v2975, %v3403
    %v3637 = vmul.f32 %v2977, %v3417
    %v3638 = vmul.f32 %v2979, %v3431
    %v3639 = vmul.f32 %v2981, %v3445
    %v3640 = vmul.f32 %v2983, %v3459
    %v3641 = vmul.f32 %v2985, %v3473
    %v3642 = vmul.f32 %v2987, %v3487
    %v3643 = vmul.f32 %v2989, %v3501
    %v3644 = vmul.f32 %v2991, %v3515
    %v3645 = vmul.f32 %v2993, %v3529
    %v3646 = vmul.f32 %v2995, %v3543
    %v3647 = vmul.f32 %v2997, %v3557
    %v3648 = vmul.f32 %v2999, %v3571
    %v3649 = vmul.f32 %v3001, %v3585
    %v3650 = vmul.f32 %v3003, %v3599
    %v3651 = vmul.f32 %v3005, %v3613
    %3652 = vst [vmem:[%s9] sm:$0xff] %v3614
    %3653 = vst [vmem:[%s9 + $0x8] sm:$0xff] %v3615
    %3654 = vst [vmem:[%s9 + $0x10] sm:$0xff] %v3616
    %3655 = vst [vmem:[%s9 + $0x18] sm:$0xff] %v3617
    %3656 = vst [vmem:[%s9 + $0x20] sm:$0xff] %v3618
    %3657 = vst [vmem:[%s9 + $0x28] sm:$0xff] %v3619
    %3658 = vst [vmem:[%s9 + $0x30] sm:$0xff] %v3620
    %3659 = vst [vmem:[%s9 + $0x38] sm:$0xff] %v3621
    %3660 = vst [vmem:[%s9 + $0x40] sm:$0xff] %v3622
    %3661 = vst [vmem:[%s9 + $0x48] sm:$0xff] %v3623
    %3662 = vst [vmem:[%s9 + $0x50] sm:$0xff] %v3624
    %3663 = vst [vmem:[%s9 + $0x58] sm:$0xff] %v3625
    %3664 = vst [vmem:[%s9 + $0x60] sm:$0xff] %v3626
    %3665 = vst [vmem:[%s9 + $0x68] sm:$0xff] %v3627
    %3666 = vst [vmem:[%s9 + $0x70] sm:$0xff] %v3628
    %3667 = vst [vmem:[%s9 + $0x78] sm:$0xff] %v3629
    %3668 = vst [vmem:[%s9 + $0x80] sm:$0xff] %v3630
    %3669 = vst [vmem:[%s9 + $0x88] sm:$0xff] %v3631
    %3670 = vst [vmem:[%s9 + $0x90] sm:$0xff] %v3632
    %3671 = vst [vmem:[%s9 + $0x98] sm:$0xff] %v3633
    %3672 = vst [vmem:[%s9 + $0xa0] sm:$0xff] %v3634
    %3673 = vst [vmem:[%s9 + $0xa8] sm:$0xff] %v3635
    %3674 = vst [vmem:[%s9 + $0xb0] sm:$0xff] %v3636
    %3675 = vst [vmem:[%s9 + $0xb8] sm:$0xff] %v3637
    %3676 = vst [vmem:[%s9 + $0xc0] sm:$0xff] %v3638
    %3677 = vst [vmem:[%s9 + $0xc8] sm:$0xff] %v3639
    %3678 = vst [vmem:[%s9 + $0xd0] sm:$0xff] %v3640
    %3679 = vst [vmem:[%s9 + $0xd8] sm:$0xff] %v3641
    %3680 = vst [vmem:[%s9 + $0xe0] sm:$0xff] %v3642
    %3681 = vst [vmem:[%s9 + $0xe8] sm:$0xff] %v3643
    %3682 = vst [vmem:[%s9 + $0xf0] sm:$0xff] %v3644
    %3683 = vst [vmem:[%s9 + $0xf8] sm:$0xff] %v3645
    %3684 = vst [vmem:[%s9 + $0x100] sm:$0xff] %v3646
    %3685 = vst [vmem:[%s9 + $0x108] sm:$0xff] %v3647
    %3686 = vst [vmem:[%s9 + $0x110] sm:$0xff] %v3648
    %3687 = vst [vmem:[%s9 + $0x118] sm:$0xff] %v3649
    %3688 = vst [vmem:[%s9 + $0x120] sm:$0xff] %v3650
    %3689 = vst [vmem:[%s9 + $0x128] sm:$0xff] %v3651
    // Predicated region
    $region42: #{_actor1_forward_2d.1} parent=1 // pred_check
      _
    $region43: #{_actor1_forward_2d.1} parent=1 // pred_check_branch
      %3691 = sbr.rel (0) target = $region45
    $region44: #{_actor1_forward_2d.1} parent=1 // pred_region
      _
    $region45: #{_actor1_forward_2d.1} parent=1 // pred_fallthru
      _
    // Predicated region
    $region46: #{_actor1_forward_2d.1} parent=1 // pred_check
      _
    $region47: #{_actor1_forward_2d.1} parent=1 // pred_check_branch
      %3693 = sbr.rel (0) target = $region49
    $region48: #{_actor1_forward_2d.1} parent=1 // pred_region
      _
    $region49: #{_actor1_forward_2d.1} parent=1 // pred_fallthru
      _
    %3694 = vsyncpa [#allocation3], 1

</llo_original>
